<compile_context>
chip_gen: v6e
topology: v6e:2x2x1
jax: 0.10.0
libtpu: 0.0.40
codegen_flags: <defaults>
</compile_context>

<pallas_src>
import functools

import jax
import jax.numpy as jnp
from jax.experimental import pallas as pl
from jax.experimental.pallas import tpu as pltpu

# Fits under v7x's 64 MiB physical VMEM with headroom; raises the smaller
# scoped defaults on v5e (16 MiB) / v6e (32 MiB).
_VMEM_LIMIT = 48 * 1024 * 1024


def _round_up(x, m):
    return (x + m - 1) // m * m


def _pick_chunk(seq_len, max_chunk=16):
    # Largest divisor of T that is <= max_chunk (amortises per-grid-step
    # pipeline overhead).  Degenerates gracefully for prime T.
    c = min(max_chunk, seq_len)
    while seq_len % c:
        c -= 1
    return c


def _row_tile(m, target=512):
    # Largest multiple-of-8 divisor of m that is <= target (m is always a
    # multiple of 8 because the batch is padded to a multiple of 8).
    best, d, lim = 8, 8, min(target, m)
    while d <= lim:
        if m % d == 0:
            best = d
        d += 8
    return best


def _sigmoid(x):
    # sigmoid(x) == 0.5*tanh(0.5*x)+0.5 : one EUP op + 2 VALU ops.
    return 0.5 * jnp.tanh(0.5 * x) + 0.5


# ----------------------------------------------------------------------------
# Input projection: gx = bf16(x) @ W_ih + (b_ih + b_hh), emitted
# direction-major as (2, T*B, 4H) bf16.
# ----------------------------------------------------------------------------
def _proj_kernel(x_ref, w_ref, b_ref, o_ref, *, gate_width):
    x = x_ref[...].astype(w_ref.dtype)            # in-kernel f32->bf16 cast
    acc = jnp.dot(x, w_ref[...], preferred_element_type=jnp.float32)
    acc = acc + b_ref[...]
    o_ref[0, :, :] = acc[:, :gate_width].astype(o_ref.dtype)   # forward gates
    o_ref[1, :, :] = acc[:, gate_width:].astype(o_ref.dtype)   # backward gates


def input_projection(x2d, w_ih, b_gates, *, hidden, row_tile):
    M, K = x2d.shape
    G = 4 * hidden
    assert G % 128 == 0, "hidden must be a multiple of 32 (lane-aligned gates)"
    assert w_ih.shape == (K, 2 * G) and M % row_tile == 0
    return pl.pallas_call(
        functools.partial(_proj_kernel, gate_width=G),
        out_shape=jax.ShapeDtypeStruct((2, M, G), jnp.bfloat16),
        grid_spec=pltpu.PrefetchScalarGridSpec(
            num_scalar_prefetch=0,
            grid=(M // row_tile,),
            in_specs=[
                pl.BlockSpec((row_tile, K), lambda m: (m, 0)),
                # grid-invariant weight/bias: single-buffer to save VMEM
                pl.BlockSpec((K, 2 * G), lambda m: (0, 0),
                             pipeline_mode=pl.Buffered(1)),
                pl.BlockSpec((1, 2 * G), lambda m: (0, 0),
                             pipeline_mode=pl.Buffered(1)),
            ],
            out_specs=pl.BlockSpec((2, row_tile, G), lambda m: (0, m, 0)),
        ),
        compiler_params=pltpu.CompilerParams(
            dimension_semantics=("parallel",),
            vmem_limit_bytes=_VMEM_LIMIT),
    )(x2d, w_ih, b_gates)


# ----------------------------------------------------------------------------
# Fused bidirectional LSTM recurrence.  grid = (T // CHUNK,).
# Forward and backward directions are processed in the SAME body (independent
# dependency chains interleaved); the backward direction walks the sequence in
# reverse purely through its index_maps.  Gate order follows PyTorch [i,f,g,o].
# ----------------------------------------------------------------------------
def _bilstm_kernel(gxf_ref, gxb_ref, whf_ref, whb_ref, of_ref, ob_ref,
                   hf, cf, hb, cb, *, chunk, batch, hidden):
    @pl.when(pl.program_id(0) == 0)
    def _init():
        for r in (hf, cf, hb, cb):
            r[...] = jnp.zeros_like(r)

    whf = whf_ref[...]                     # (H, 4H) bf16
    whb = whb_ref[...]
    H = hidden
    B = batch

    def lstm_step(gx_rows, h_ref, c_ref, whh):
        gates = gx_rows.astype(jnp.float32) + jnp.dot(
            h_ref[...].astype(whh.dtype), whh,
            preferred_element_type=jnp.float32)
        i_g = _sigmoid(gates[:, 0:H])
        f_g = _sigmoid(gates[:, H:2 * H])
        g_g = jnp.tanh(gates[:, 2 * H:3 * H])
        o_g = _sigmoid(gates[:, 3 * H:4 * H])
        c_new = f_g * c_ref[...] + i_g * g_g
        h_new = o_g * jnp.tanh(c_new)
        c_ref[...] = c_new
        h_ref[...] = h_new
        return h_new

    # Static unroll; all row offsets are static multiples of B (B % 8 == 0),
    # so every per-timestep load/store is full-sublane.
    for tt in range(chunk):
        h_new = lstm_step(gxf_ref[tt * B:(tt + 1) * B, :], hf, cf, whf)
        of_ref[tt * B:(tt + 1) * B, :] = h_new.astype(of_ref.dtype)
        rt = chunk - 1 - tt                 # backward walks the chunk reversed
        h_new = lstm_step(gxb_ref[rt * B:(rt + 1) * B, :], hb, cb, whb)
        ob_ref[rt * B:(rt + 1) * B, :] = h_new.astype(ob_ref.dtype)


def bilstm_recurrent(gx, whh_f, whh_b, *, seq_len, batch, hidden, chunk):
    assert seq_len % chunk == 0
    nc = seq_len // chunk
    H = hidden
    rows = chunk * batch
    M = seq_len * batch
    kernel = functools.partial(_bilstm_kernel, chunk=chunk, batch=batch,
                               hidden=hidden)

    def wspec():
        return pl.BlockSpec((H, 4 * H), lambda c: (0, 0),
                            pipeline_mode=pl.Buffered(1))

    # TODO(synk): on v7x the two directions could additionally be split across
    # the two TensorCores (CORE_PARALLEL leading axis); here they are
    # interleaved in one body, which is the optimal form for 1-TC v5e/v6e.
    return pl.pallas_call(
        kernel,
        out_shape=(jax.ShapeDtypeStruct((M, H), jnp.bfloat16),
                   jax.ShapeDtypeStruct((M, H), jnp.bfloat16)),
        grid_spec=pltpu.PrefetchScalarGridSpec(
            num_scalar_prefetch=0,
            grid=(nc,),
            in_specs=[
                # forward gates: chunk c of direction plane 0
                pl.BlockSpec((pl.Squeezed(), rows, 4 * H),
                             lambda c: (0, c, 0)),
                # backward gates: chunk nc-1-c of direction plane 1
                pl.BlockSpec((pl.Squeezed(), rows, 4 * H),
                             lambda c: (1, nc - 1 - c, 0)),
                wspec(), wspec(),
            ],
            out_specs=(pl.BlockSpec((rows, H), lambda c: (c, 0)),
                       pl.BlockSpec((rows, H), lambda c: (nc - 1 - c, 0))),
            scratch_shapes=[pltpu.VMEM((batch, H), jnp.float32)
                            for _ in range(4)],      # h_f, c_f, h_b, c_b
        ),
        compiler_params=pltpu.CompilerParams(
            dimension_semantics=("arbitrary",),
            vmem_limit_bytes=_VMEM_LIMIT),
    )(gx, gx, whh_f, whh_b)


# ----------------------------------------------------------------------------
# Output Linear:  out = h_fwd @ W1 + h_bwd @ W2 + b   (lane-padded N).
# ----------------------------------------------------------------------------
def _bilinear_out_kernel(hf_ref, hb_ref, w1_ref, w2_ref, b_ref, o_ref):
    acc = jnp.dot(hf_ref[...], w1_ref[...], preferred_element_type=jnp.float32)
    acc = acc + jnp.dot(hb_ref[...], w2_ref[...],
                        preferred_element_type=jnp.float32)
    o_ref[...] = (acc + b_ref[...]).astype(o_ref.dtype)


def bilinear_out(rec_f, rec_b, w1, w2, b, *, row_tile, out_dtype):
    M, H = rec_f.shape
    N = w1.shape[1]
    assert N % 128 == 0 and M % row_tile == 0
    return pl.pallas_call(
        _bilinear_out_kernel,
        out_shape=jax.ShapeDtypeStruct((M, N), out_dtype),
        grid_spec=pltpu.PrefetchScalarGridSpec(
            num_scalar_prefetch=0,
            grid=(M // row_tile,),
            in_specs=[
                pl.BlockSpec((row_tile, H), lambda m: (m, 0)),
                pl.BlockSpec((row_tile, H), lambda m: (m, 0)),
                pl.BlockSpec((H, N), lambda m: (0, 0),
                             pipeline_mode=pl.Buffered(1)),
                pl.BlockSpec((H, N), lambda m: (0, 0),
                             pipeline_mode=pl.Buffered(1)),
                pl.BlockSpec((1, N), lambda m: (0, 0),
                             pipeline_mode=pl.Buffered(1)),
            ],
            out_specs=pl.BlockSpec((row_tile, N), lambda m: (m, 0)),
        ),
        compiler_params=pltpu.CompilerParams(
            dimension_semantics=("parallel",),
            vmem_limit_bytes=_VMEM_LIMIT),
    )(rec_f, rec_b, w1, w2, b)


# ----------------------------------------------------------------------------
# BidirectionalLSTM: nn.LSTM(bidirectional=True) + nn.Linear.
# ----------------------------------------------------------------------------
def bidirectional_lstm(x2d, p, *, seq_len, batch, chunk, row_tile, out_dtype):
    hidden = p["whh_f"].shape[0]
    gx = input_projection(x2d, p["w_ih"], p["b_gates"], hidden=hidden,
                          row_tile=row_tile)
    rec_f, rec_b = bilstm_recurrent(gx, p["whh_f"], p["whh_b"],
                                    seq_len=seq_len, batch=batch,
                                    hidden=hidden, chunk=chunk)
    return bilinear_out(rec_f, rec_b, p["w_out_f"], p["w_out_b"], p["b_out"],
                        row_tile=row_tile, out_dtype=out_dtype)


# ----------------------------------------------------------------------------
# Decoder: X.view(B, C*H, W).permute(2, 0, 1) -> rnn1 -> rnn2
# ----------------------------------------------------------------------------
def decoder_forward(X, params, n_classes):
    B, C, Hh, W = X.shape
    T = W
    D = C * Hh
    x = jnp.transpose(X.reshape(B, D, W), (2, 0, 1))       # (T, B, D)
    Bp = _round_up(B, 8)                                   # sublane-align batch
    if Bp != B:
        x = jnp.pad(x, ((0, 0), (0, Bp - B), (0, 0)))
    x2d = x.reshape(T * Bp, D)

    chunk = _pick_chunk(T, max_chunk=16)
    row_tile = _row_tile(T * Bp, target=512)

    y1 = bidirectional_lstm(x2d, params["rnn1"], seq_len=T, batch=Bp,
                            chunk=chunk, row_tile=row_tile,
                            out_dtype=jnp.bfloat16)          # bf16 handoff
    y2 = bidirectional_lstm(y1, params["rnn2"], seq_len=T, batch=Bp,
                            chunk=chunk, row_tile=row_tile,
                            out_dtype=jnp.float32)
    return y2.reshape(T, Bp, -1)[:, :B, :n_classes]


# ----------------------------------------------------------------------------
# Deterministic parameter init (uniform(-1/sqrt(H), 1/sqrt(H)), like PyTorch).
# Weights stored bf16; biases f32.  Output widths zero-padded to 128 lanes;
# the next layer's w_ih rows are zero-padded to match.
# NOTE: when importing real checkpoints, the Linear weight must be split as
#       W[:, :H].T -> w_out_f and W[:, H:].T -> w_out_b.
# ----------------------------------------------------------------------------
def init_bilstm_params(key, *, in_dim, in_dim_pad, hidden, out_dim,
                       out_dim_pad):
    ks = jax.random.split(key, 11)
    s = 1.0 / float(hidden) ** 0.5

    def u(k, shape):
        return jax.random.uniform(k, shape, jnp.float32, -s, s)

    # w_ih columns: [fwd i,f,g,o | bwd i,f,g,o], each H wide.
    w_ih = jnp.concatenate([u(ks[0], (in_dim, 4 * hidden)),
                            u(ks[1], (in_dim, 4 * hidden))], axis=-1)
    w_ih = jnp.pad(w_ih, ((0, in_dim_pad - in_dim), (0, 0)))
    b_gates = jnp.concatenate(
        [u(ks[2], (1, 4 * hidden)) + u(ks[3], (1, 4 * hidden)),   # fwd b_ih+b_hh
         u(ks[4], (1, 4 * hidden)) + u(ks[5], (1, 4 * hidden))],  # bwd b_ih+b_hh
        axis=-1)
    w_out_f = jnp.pad(u(ks[8], (hidden, out_dim)),
                      ((0, 0), (0, out_dim_pad - out_dim)))
    w_out_b = jnp.pad(u(ks[9], (hidden, out_dim)),
                      ((0, 0), (0, out_dim_pad - out_dim)))
    b_out = jnp.pad(u(ks[10], (1, out_dim)),
                    ((0, 0), (0, out_dim_pad - out_dim)))
    return dict(
        w_ih=w_ih.astype(jnp.bfloat16),                  # (Din_pad, 8H)
        b_gates=b_gates,                                 # (1, 8H) f32
        whh_f=u(ks[6], (hidden, 4 * hidden)).astype(jnp.bfloat16),
        whh_b=u(ks[7], (hidden, 4 * hidden)).astype(jnp.bfloat16),
        w_out_f=w_out_f.astype(jnp.bfloat16),            # (H, Npad)
        w_out_b=w_out_b.astype(jnp.bfloat16),
        b_out=b_out,                                     # (1, Npad) f32
    )


# ----------------------------------------------------------------------------
# Pure-JAX f32 reference (same weights) for a sanity check.
# ----------------------------------------------------------------------------
def reference_decoder(X, params, n_classes):
    B, C, Hh, W = X.shape
    x = jnp.transpose(X.reshape(B, C * Hh, W), (2, 0, 1)).astype(jnp.float32)

    def bilstm(x, p, out_dim):
        T, Bb, D = x.shape
        H = p["whh_f"].shape[0]
        w_ih = p["w_ih"].astype(jnp.float32)[:D]
        gx = jnp.einsum("tbd,dk->tbk", x, w_ih) + p["b_gates"][0]

        def run(g, whh, reverse):
            def step(carry, gt):
                h, c = carry
                gates = gt + h @ whh
                i = jax.nn.sigmoid(gates[:, :H])
                f = jax.nn.sigmoid(gates[:, H:2 * H])
                gg = jnp.tanh(gates[:, 2 * H:3 * H])
                o = jax.nn.sigmoid(gates[:, 3 * H:])
                c = f * c + i * gg
                h = o * jnp.tanh(c)
                return (h, c), h
            init = (jnp.zeros((Bb, H), jnp.float32),
                    jnp.zeros((Bb, H), jnp.float32))
            _, hs = jax.lax.scan(step, init, g, reverse=reverse)
            return hs

        hf = run(gx[..., :4 * H], p["whh_f"].astype(jnp.float32), False)
        hb = run(gx[..., 4 * H:], p["whh_b"].astype(jnp.float32), True)
        w1 = p["w_out_f"].astype(jnp.float32)[:, :out_dim]
        w2 = p["w_out_b"].astype(jnp.float32)[:, :out_dim]
        return hf @ w1 + hb @ w2 + p["b_out"][0, :out_dim]

    hidden = params["rnn1"]["whh_f"].shape[0]
    y1 = bilstm(x, params["rnn1"], hidden)
    return bilstm(y1, params["rnn2"], n_classes)


if __name__ == "__main__":
    # Small shapes consistent with Decoder(input_dim=C*H): B=2, C=4, H=8, W=8
    # => input_dim = 32, T = 8; hidden_dim = 32 (scaled from 512),
    # n_classes = 16.
    B, C, Hh, W = 2, 4, 8, 8
    input_dim = C * Hh
    hidden_dim = 32
    n_classes = 16

    key = jax.random.PRNGKey(0)
    k_x, k_r1, k_r2 = jax.random.split(key, 3)

    X = jax.random.normal(k_x, (B, C, Hh, W), dtype=jnp.float32)

    n1_pad = _round_up(hidden_dim, 128)
    n2_pad = _round_up(n_classes, 128)
    params = dict(
        rnn1=init_bilstm_params(k_r1, in_dim=input_dim, in_dim_pad=input_dim,
                                hidden=hidden_dim, out_dim=hidden_dim,
                                out_dim_pad=n1_pad),
        rnn2=init_bilstm_params(k_r2, in_dim=hidden_dim, in_dim_pad=n1_pad,
                                hidden=hidden_dim, out_dim=n_classes,
                                out_dim_pad=n2_pad),
    )

    fwd = jax.jit(decoder_forward, static_argnames=("n_classes",))
    out = jax.block_until_ready(fwd(X, params, n_classes=n_classes))

    assert out.shape == (W, B, n_classes), out.shape
    assert bool(jnp.all(jnp.isfinite(out)))

    ref = reference_decoder(X, params, n_classes)
    max_err = float(jnp.max(jnp.abs(out - ref)))
    assert max_err < 1e-1, max_err   # bf16 slabs/weights vs f32 reference
    print("KERNEL_OK")
</pallas_src>

<mosaic_0001>
module attributes {stable_mosaic.version = 11 : i64} {
  func.func @_proj_kernel(%arg0: i32, %arg1: memref<64x32xf32, #tpu.memory_space<vmem>>, %arg2: memref<32x256xbf16, #tpu.memory_space<vmem>>, %arg3: memref<1x256xf32, #tpu.memory_space<vmem>>, %arg4: memref<2x64x128xbf16, #tpu.memory_space<vmem>>) attributes {dimension_semantics = [#tpu.dimension_semantics<parallel>], iteration_bounds = array<i64: 1>, scalar_prefetch = 0 : i64, scratch_operands = 0 : i64, tpu.core_type = #tpu.core_type<tc>, window_params = [{transform_indices = @transform_0, window_bounds = array<i64: 64, 32>}, {pipeline_mode = #tpu.pipeline_mode<synchronous>, transform_indices = @transform_1, window_bounds = array<i64: 32, 256>}, {pipeline_mode = #tpu.pipeline_mode<synchronous>, transform_indices = @transform_2, window_bounds = array<i64: 1, 256>}, {transform_indices = @transform_3, window_bounds = array<i64: 2, 64, 128>}]} {
    %c0 = arith.constant 0 : index
    %c0_0 = arith.constant 0 : index
    %0 = vector.load %arg1[%c0, %c0_0] : memref<64x32xf32, #tpu.memory_space<vmem>>, vector<64x32xf32>
    %1 = arith.truncf %0 : vector<64x32xf32> to vector<64x32xbf16>
    %c0_1 = arith.constant 0 : index
    %c0_2 = arith.constant 0 : index
    %2 = vector.load %arg2[%c0_1, %c0_2] : memref<32x256xbf16, #tpu.memory_space<vmem>>, vector<32x256xbf16>
    %cst = arith.constant dense<0.000000e+00> : vector<64x256xf32>
    %3 = tpu.matmul %1, %2, %cst {dimension_numbers = #tpu.dot_dimension_numbers<[1], [0], [0], [1], [0, 0, 1, 1], [], []>} : vector<64x32xbf16>, vector<32x256xbf16>, vector<64x256xf32> -> vector<64x256xf32>
    %c0_3 = arith.constant 0 : index
    %c0_4 = arith.constant 0 : index
    %4 = vector.load %arg3[%c0_3, %c0_4] : memref<1x256xf32, #tpu.memory_space<vmem>>, vector<1x256xf32>
    %5 = vector.broadcast %4 : vector<1x256xf32> to vector<64x256xf32>
    %6 = arith.addf %3, %5 : vector<64x256xf32>
    %7 = vector.extract_strided_slice %6 {offsets = [0, 0], sizes = [64, 128], strides = [1, 1]} : vector<64x256xf32> to vector<64x128xf32>
    %8 = arith.truncf %7 : vector<64x128xf32> to vector<64x128xbf16>
    %c0_5 = arith.constant 0 : index
    %c0_6 = arith.constant 0 : index
    %c0_7 = arith.constant 0 : index
    %9 = vector.load %arg4[%c0_5, %c0_6, %c0_7] : memref<2x64x128xbf16, #tpu.memory_space<vmem>>, vector<1x64x128xbf16>
    %10 = vector.shape_cast %9 : vector<1x64x128xbf16> to vector<64x128xbf16>
    %11 = vector.shape_cast %8 : vector<64x128xbf16> to vector<1x64x128xbf16>
    tpu.vector_store %arg4[%c0_5, %c0_6, %c0_7], %11 {strides = array<i32>} : memref<2x64x128xbf16, #tpu.memory_space<vmem>>, vector<1x64x128xbf16>,
    %12 = vector.extract_strided_slice %6 {offsets = [0, 128], sizes = [64, 128], strides = [1, 1]} : vector<64x256xf32> to vector<64x128xf32>
    %13 = arith.truncf %12 : vector<64x128xf32> to vector<64x128xbf16>
    %c1 = arith.constant 1 : index
    %c0_8 = arith.constant 0 : index
    %c0_9 = arith.constant 0 : index
    %14 = vector.load %arg4[%c1, %c0_8, %c0_9] : memref<2x64x128xbf16, #tpu.memory_space<vmem>>, vector<1x64x128xbf16>
    %15 = vector.shape_cast %14 : vector<1x64x128xbf16> to vector<64x128xbf16>
    %16 = vector.shape_cast %13 : vector<64x128xbf16> to vector<1x64x128xbf16>
    tpu.vector_store %arg4[%c1, %c0_8, %c0_9], %16 {strides = array<i32>} : memref<2x64x128xbf16, #tpu.memory_space<vmem>>, vector<1x64x128xbf16>,
    return
  }
  func.func @transform_0(%arg0: i32) -> (i32, i32) {
    %c0_i32 = arith.constant 0 : i32
    %c0_i32_0 = arith.constant 0 : i32
    return %arg0, %c0_i32 : i32, i32
  }
  func.func @transform_1(%arg0: i32) -> (i32, i32) {
    %c0_i32 = arith.constant 0 : i32
    %c0_i32_0 = arith.constant 0 : i32
    %c0_i32_1 = arith.constant 0 : i32
    return %c0_i32, %c0_i32_0 : i32, i32
  }
  func.func @transform_2(%arg0: i32) -> (i32, i32) {
    %c0_i32 = arith.constant 0 : i32
    %c0_i32_0 = arith.constant 0 : i32
    %c0_i32_1 = arith.constant 0 : i32
    return %c0_i32, %c0_i32_0 : i32, i32
  }
  func.func @transform_3(%arg0: i32) -> (i32, i32, i32) {
    %c0_i32 = arith.constant 0 : i32
    %c0_i32_0 = arith.constant 0 : i32
    %c0_i32_1 = arith.constant 0 : i32
    return %c0_i32, %arg0, %c0_i32_0 : i32, i32, i32
  }
}

module attributes {stable_mosaic.version = 11 : i64} {
  func.func @_bilstm_kernel(%arg0: i32, %arg1: memref<1x64x128xbf16, #tpu.memory_space<vmem>>, %arg2: memref<1x64x128xbf16, #tpu.memory_space<vmem>>, %arg3: memref<32x128xbf16, #tpu.memory_space<vmem>>, %arg4: memref<32x128xbf16, #tpu.memory_space<vmem>>, %arg5: memref<64x32xbf16, #tpu.memory_space<vmem>>, %arg6: memref<64x32xbf16, #tpu.memory_space<vmem>>, %arg7: memref<8x32xf32, #tpu.memory_space<vmem>>, %arg8: memref<8x32xf32, #tpu.memory_space<vmem>>, %arg9: memref<8x32xf32, #tpu.memory_space<vmem>>, %arg10: memref<8x32xf32, #tpu.memory_space<vmem>>) attributes {dimension_semantics = [#tpu.dimension_semantics<arbitrary>], iteration_bounds = array<i64: 1>, scalar_prefetch = 0 : i64, scratch_operands = 4 : i64, tpu.core_type = #tpu.core_type<tc>, window_params = [{transform_indices = @transform_0, window_bounds = array<i64: 1, 64, 128>}, {transform_indices = @transform_1, window_bounds = array<i64: 1, 64, 128>}, {pipeline_mode = #tpu.pipeline_mode<synchronous>, transform_indices = @transform_2, window_bounds = array<i64: 32, 128>}, {pipeline_mode = #tpu.pipeline_mode<synchronous>, transform_indices = @transform_3, window_bounds = array<i64: 32, 128>}, {transform_indices = @transform_4, window_bounds = array<i64: 64, 32>}, {transform_indices = @transform_5, window_bounds = array<i64: 64, 32>}]} {
    %c0_i32 = arith.constant 0 : i32
    %0 = arith.cmpi eq, %arg0, %c0_i32 : i32
    %1 = arith.extui %0 : i1 to i32
    %c0_i32_0 = arith.constant 0 : i32
    %2 = arith.cmpi ne, %1, %c0_i32_0 : i32
    scf.if %2 {
      %cst_364 = arith.constant 0.000000e+00 : f32
      %693 = vector.broadcast %cst_364 : f32 to vector<8x32xf32>
      %c0_365 = arith.constant 0 : index
      %c0_366 = arith.constant 0 : index
      %694 = vector.load %arg7[%c0_365, %c0_366] : memref<8x32xf32, #tpu.memory_space<vmem>>, vector<8x32xf32>
      tpu.vector_store %arg7[%c0_365, %c0_366], %693 {strides = array<i32>} : memref<8x32xf32, #tpu.memory_space<vmem>>, vector<8x32xf32>,
      %cst_367 = arith.constant 0.000000e+00 : f32
      %695 = vector.broadcast %cst_367 : f32 to vector<8x32xf32>
      %c0_368 = arith.constant 0 : index
      %c0_369 = arith.constant 0 : index
      %696 = vector.load %arg8[%c0_368, %c0_369] : memref<8x32xf32, #tpu.memory_space<vmem>>, vector<8x32xf32>
      tpu.vector_store %arg8[%c0_368, %c0_369], %695 {strides = array<i32>} : memref<8x32xf32, #tpu.memory_space<vmem>>, vector<8x32xf32>,
      %cst_370 = arith.constant 0.000000e+00 : f32
      %697 = vector.broadcast %cst_370 : f32 to vector<8x32xf32>
      %c0_371 = arith.constant 0 : index
      %c0_372 = arith.constant 0 : index
      %698 = vector.load %arg9[%c0_371, %c0_372] : memref<8x32xf32, #tpu.memory_space<vmem>>, vector<8x32xf32>
      tpu.vector_store %arg9[%c0_371, %c0_372], %697 {strides = array<i32>} : memref<8x32xf32, #tpu.memory_space<vmem>>, vector<8x32xf32>,
      %cst_373 = arith.constant 0.000000e+00 : f32
      %699 = vector.broadcast %cst_373 : f32 to vector<8x32xf32>
      %c0_374 = arith.constant 0 : index
      %c0_375 = arith.constant 0 : index
      %700 = vector.load %arg10[%c0_374, %c0_375] : memref<8x32xf32, #tpu.memory_space<vmem>>, vector<8x32xf32>
      tpu.vector_store %arg10[%c0_374, %c0_375], %699 {strides = array<i32>} : memref<8x32xf32, #tpu.memory_space<vmem>>, vector<8x32xf32>,
    } else {
    }
    %c0 = arith.constant 0 : index
    %c0_1 = arith.constant 0 : index
    %3 = vector.load %arg3[%c0, %c0_1] : memref<32x128xbf16, #tpu.memory_space<vmem>>, vector<32x128xbf16>
    %c0_2 = arith.constant 0 : index
    %c0_3 = arith.constant 0 : index
    %4 = vector.load %arg4[%c0_2, %c0_3] : memref<32x128xbf16, #tpu.memory_space<vmem>>, vector<32x128xbf16>
    %c0_4 = arith.constant 0 : index
    %c0_5 = arith.constant 0 : index
    %c0_6 = arith.constant 0 : index
    %5 = vector.load %arg1[%c0_4, %c0_5, %c0_6] : memref<1x64x128xbf16, #tpu.memory_space<vmem>>, vector<1x8x128xbf16>
    %6 = vector.shape_cast %5 : vector<1x8x128xbf16> to vector<8x128xbf16>
    %7 = arith.extf %6 : vector<8x128xbf16> to vector<8x128xf32>
    %c0_7 = arith.constant 0 : index
    %c0_8 = arith.constant 0 : index
    %8 = vector.load %arg7[%c0_7, %c0_8] : memref<8x32xf32, #tpu.memory_space<vmem>>, vector<8x32xf32>
    %9 = arith.truncf %8 : vector<8x32xf32> to vector<8x32xbf16>
    %cst = arith.constant dense<0.000000e+00> : vector<8x128xf32>
    %10 = tpu.matmul %9, %3, %cst {dimension_numbers = #tpu.dot_dimension_numbers<[1], [0], [0], [1], [0, 0, 1, 1], [], []>} : vector<8x32xbf16>, vector<32x128xbf16>, vector<8x128xf32> -> vector<8x128xf32>
    %11 = arith.addf %7, %10 : vector<8x128xf32>
    %12 = vector.extract_strided_slice %11 {offsets = [0, 0], sizes = [8, 32], strides = [1, 1]} : vector<8x128xf32> to vector<8x32xf32>
    %cst_9 = arith.constant 5.000000e-01 : f32
    %13 = vector.broadcast %cst_9 : f32 to vector<8x32xf32>
    %14 = arith.mulf %13, %12 : vector<8x32xf32>
    %15 = math.tanh %14 : vector<8x32xf32>
    %cst_10 = arith.constant 5.000000e-01 : f32
    %16 = vector.broadcast %cst_10 : f32 to vector<8x32xf32>
    %17 = arith.mulf %16, %15 : vector<8x32xf32>
    %cst_11 = arith.constant 5.000000e-01 : f32
    %18 = vector.broadcast %cst_11 : f32 to vector<8x32xf32>
    %19 = arith.addf %17, %18 : vector<8x32xf32>
    %20 = vector.extract_strided_slice %11 {offsets = [0, 32], sizes = [8, 32], strides = [1, 1]} : vector<8x128xf32> to vector<8x32xf32>
    %cst_12 = arith.constant 5.000000e-01 : f32
    %21 = vector.broadcast %cst_12 : f32 to vector<8x32xf32>
    %22 = arith.mulf %21, %20 : vector<8x32xf32>
    %23 = math.tanh %22 : vector<8x32xf32>
    %cst_13 = arith.constant 5.000000e-01 : f32
    %24 = vector.broadcast %cst_13 : f32 to vector<8x32xf32>
    %25 = arith.mulf %24, %23 : vector<8x32xf32>
    %cst_14 = arith.constant 5.000000e-01 : f32
    %26 = vector.broadcast %cst_14 : f32 to vector<8x32xf32>
    %27 = arith.addf %25, %26 : vector<8x32xf32>
    %28 = vector.extract_strided_slice %11 {offsets = [0, 64], sizes = [8, 32], strides = [1, 1]} : vector<8x128xf32> to vector<8x32xf32>
    %29 = math.tanh %28 : vector<8x32xf32>
    %30 = vector.extract_strided_slice %11 {offsets = [0, 96], sizes = [8, 32], strides = [1, 1]} : vector<8x128xf32> to vector<8x32xf32>
    %cst_15 = arith.constant 5.000000e-01 : f32
    %31 = vector.broadcast %cst_15 : f32 to vector<8x32xf32>
    %32 = arith.mulf %31, %30 : vector<8x32xf32>
    %33 = math.tanh %32 : vector<8x32xf32>
    %cst_16 = arith.constant 5.000000e-01 : f32
    %34 = vector.broadcast %cst_16 : f32 to vector<8x32xf32>
    %35 = arith.mulf %34, %33 : vector<8x32xf32>
    %cst_17 = arith.constant 5.000000e-01 : f32
    %36 = vector.broadcast %cst_17 : f32 to vector<8x32xf32>
    %37 = arith.addf %35, %36 : vector<8x32xf32>
    %c0_18 = arith.constant 0 : index
    %c0_19 = arith.constant 0 : index
    %38 = vector.load %arg8[%c0_18, %c0_19] : memref<8x32xf32, #tpu.memory_space<vmem>>, vector<8x32xf32>
    %39 = arith.mulf %27, %38 : vector<8x32xf32>
    %40 = arith.mulf %19, %29 : vector<8x32xf32>
    %41 = arith.addf %39, %40 : vector<8x32xf32>
    %42 = math.tanh %41 : vector<8x32xf32>
    %43 = arith.mulf %37, %42 : vector<8x32xf32>
    %c0_20 = arith.constant 0 : index
    %c0_21 = arith.constant 0 : index
    %44 = vector.load %arg8[%c0_20, %c0_21] : memref<8x32xf32, #tpu.memory_space<vmem>>, vector<8x32xf32>
    tpu.vector_store %arg8[%c0_20, %c0_21], %41 {strides = array<i32>} : memref<8x32xf32, #tpu.memory_space<vmem>>, vector<8x32xf32>,
    %c0_22 = arith.constant 0 : index
    %c0_23 = arith.constant 0 : index
    %45 = vector.load %arg7[%c0_22, %c0_23] : memref<8x32xf32, #tpu.memory_space<vmem>>, vector<8x32xf32>
    tpu.vector_store %arg7[%c0_22, %c0_23], %43 {strides = array<i32>} : memref<8x32xf32, #tpu.memory_space<vmem>>, vector<8x32xf32>,
    %46 = arith.truncf %43 : vector<8x32xf32> to vector<8x32xbf16>
    %c0_24 = arith.constant 0 : index
    %c0_25 = arith.constant 0 : index
    %47 = vector.load %arg5[%c0_24, %c0_25] : memref<64x32xbf16, #tpu.memory_space<vmem>>, vector<8x32xbf16>
    tpu.vector_store %arg5[%c0_24, %c0_25], %46 {strides = array<i32>} : memref<64x32xbf16, #tpu.memory_space<vmem>>, vector<8x32xbf16>,
    %c0_26 = arith.constant 0 : index
    %c56 = arith.constant 56 : index
    %c0_27 = arith.constant 0 : index
    %48 = vector.load %arg2[%c0_26, %c56, %c0_27] : memref<1x64x128xbf16, #tpu.memory_space<vmem>>, vector<1x8x128xbf16>
    %49 = vector.shape_cast %48 : vector<1x8x128xbf16> to vector<8x128xbf16>
    %50 = arith.extf %49 : vector<8x128xbf16> to vector<8x128xf32>
    %c0_28 = arith.constant 0 : index
    %c0_29 = arith.constant 0 : index
    %51 = vector.load %arg9[%c0_28, %c0_29] : memref<8x32xf32, #tpu.memory_space<vmem>>, vector<8x32xf32>
    %52 = arith.truncf %51 : vector<8x32xf32> to vector<8x32xbf16>
    %cst_30 = arith.constant dense<0.000000e+00> : vector<8x128xf32>
    %53 = tpu.matmul %52, %4, %cst_30 {dimension_numbers = #tpu.dot_dimension_numbers<[1], [0], [0], [1], [0, 0, 1, 1], [], []>} : vector<8x32xbf16>, vector<32x128xbf16>, vector<8x128xf32> -> vector<8x128xf32>
    %54 = arith.addf %50, %53 : vector<8x128xf32>
    %55 = vector.extract_strided_slice %54 {offsets = [0, 0], sizes = [8, 32], strides = [1, 1]} : vector<8x128xf32> to vector<8x32xf32>
    %cst_31 = arith.constant 5.000000e-01 : f32
    %56 = vector.broadcast %cst_31 : f32 to vector<8x32xf32>
    %57 = arith.mulf %56, %55 : vector<8x32xf32>
    %58 = math.tanh %57 : vector<8x32xf32>
    %cst_32 = arith.constant 5.000000e-01 : f32
    %59 = vector.broadcast %cst_32 : f32 to vector<8x32xf32>
    %60 = arith.mulf %59, %58 : vector<8x32xf32>
    %cst_33 = arith.constant 5.000000e-01 : f32
    %61 = vector.broadcast %cst_33 : f32 to vector<8x32xf32>
    %62 = arith.addf %60, %61 : vector<8x32xf32>
    %63 = vector.extract_strided_slice %54 {offsets = [0, 32], sizes = [8, 32], strides = [1, 1]} : vector<8x128xf32> to vector<8x32xf32>
    %cst_34 = arith.constant 5.000000e-01 : f32
    %64 = vector.broadcast %cst_34 : f32 to vector<8x32xf32>
    %65 = arith.mulf %64, %63 : vector<8x32xf32>
    %66 = math.tanh %65 : vector<8x32xf32>
    %cst_35 = arith.constant 5.000000e-01 : f32
    %67 = vector.broadcast %cst_35 : f32 to vector<8x32xf32>
    %68 = arith.mulf %67, %66 : vector<8x32xf32>
    %cst_36 = arith.constant 5.000000e-01 : f32
    %69 = vector.broadcast %cst_36 : f32 to vector<8x32xf32>
    %70 = arith.addf %68, %69 : vector<8x32xf32>
    %71 = vector.extract_strided_slice %54 {offsets = [0, 64], sizes = [8, 32], strides = [1, 1]} : vector<8x128xf32> to vector<8x32xf32>
    %72 = math.tanh %71 : vector<8x32xf32>
    %73 = vector.extract_strided_slice %54 {offsets = [0, 96], sizes = [8, 32], strides = [1, 1]} : vector<8x128xf32> to vector<8x32xf32>
    %cst_37 = arith.constant 5.000000e-01 : f32
    %74 = vector.broadcast %cst_37 : f32 to vector<8x32xf32>
    %75 = arith.mulf %74, %73 : vector<8x32xf32>
    %76 = math.tanh %75 : vector<8x32xf32>
    %cst_38 = arith.constant 5.000000e-01 : f32
    %77 = vector.broadcast %cst_38 : f32 to vector<8x32xf32>
    %78 = arith.mulf %77, %76 : vector<8x32xf32>
    %cst_39 = arith.constant 5.000000e-01 : f32
    %79 = vector.broadcast %cst_39 : f32 to vector<8x32xf32>
    %80 = arith.addf %78, %79 : vector<8x32xf32>
    %c0_40 = arith.constant 0 : index
    %c0_41 = arith.constant 0 : index
    %81 = vector.load %arg10[%c0_40, %c0_41] : memref<8x32xf32, #tpu.memory_space<vmem>>, vector<8x32xf32>
    %82 = arith.mulf %70, %81 : vector<8x32xf32>
    %83 = arith.mulf %62, %72 : vector<8x32xf32>
    %84 = arith.addf %82, %83 : vector<8x32xf32>
    %85 = math.tanh %84 : vector<8x32xf32>
    %86 = arith.mulf %80, %85 : vector<8x32xf32>
    %c0_42 = arith.constant 0 : index
    %c0_43 = arith.constant 0 : index
    %87 = vector.load %arg10[%c0_42, %c0_43] : memref<8x32xf32, #tpu.memory_space<vmem>>, vector<8x32xf32>
    tpu.vector_store %arg10[%c0_42, %c0_43], %84 {strides = array<i32>} : memref<8x32xf32, #tpu.memory_space<vmem>>, vector<8x32xf32>,
    %c0_44 = arith.constant 0 : index
    %c0_45 = arith.constant 0 : index
    %88 = vector.load %arg9[%c0_44, %c0_45] : memref<8x32xf32, #tpu.memory_space<vmem>>, vector<8x32xf32>
    tpu.vector_store %arg9[%c0_44, %c0_45], %86 {strides = array<i32>} : memref<8x32xf32, #tpu.memory_space<vmem>>, vector<8x32xf32>,
    %89 = arith.truncf %86 : vector<8x32xf32> to vector<8x32xbf16>
    %c56_46 = arith.constant 56 : index
    %c0_47 = arith.constant 0 : index
    %90 = vector.load %arg6[%c56_46, %c0_47] : memref<64x32xbf16, #tpu.memory_space<vmem>>, vector<8x32xbf16>
    tpu.vector_store %arg6[%c56_46, %c0_47], %89 {strides = array<i32>} : memref<64x32xbf16, #tpu.memory_space<vmem>>, vector<8x32xbf16>,
    %c0_48 = arith.constant 0 : index
    %c8 = arith.constant 8 : index
    %c0_49 = arith.constant 0 : index
    %91 = vector.load %arg1[%c0_48, %c8, %c0_49] : memref<1x64x128xbf16, #tpu.memory_space<vmem>>, vector<1x8x128xbf16>
    %92 = vector.shape_cast %91 : vector<1x8x128xbf16> to vector<8x128xbf16>
    %93 = arith.extf %92 : vector<8x128xbf16> to vector<8x128xf32>
    %c0_50 = arith.constant 0 : index
    %c0_51 = arith.constant 0 : index
    %94 = vector.load %arg7[%c0_50, %c0_51] : memref<8x32xf32, #tpu.memory_space<vmem>>, vector<8x32xf32>
    %95 = arith.truncf %94 : vector<8x32xf32> to vector<8x32xbf16>
    %cst_52 = arith.constant dense<0.000000e+00> : vector<8x128xf32>
    %96 = tpu.matmul %95, %3, %cst_52 {dimension_numbers = #tpu.dot_dimension_numbers<[1], [0], [0], [1], [0, 0, 1, 1], [], []>} : vector<8x32xbf16>, vector<32x128xbf16>, vector<8x128xf32> -> vector<8x128xf32>
    %97 = arith.addf %93, %96 : vector<8x128xf32>
    %98 = vector.extract_strided_slice %97 {offsets = [0, 0], sizes = [8, 32], strides = [1, 1]} : vector<8x128xf32> to vector<8x32xf32>
    %cst_53 = arith.constant 5.000000e-01 : f32
    %99 = vector.broadcast %cst_53 : f32 to vector<8x32xf32>
    %100 = arith.mulf %99, %98 : vector<8x32xf32>
    %101 = math.tanh %100 : vector<8x32xf32>
    %cst_54 = arith.constant 5.000000e-01 : f32
    %102 = vector.broadcast %cst_54 : f32 to vector<8x32xf32>
    %103 = arith.mulf %102, %101 : vector<8x32xf32>
    %cst_55 = arith.constant 5.000000e-01 : f32
    %104 = vector.broadcast %cst_55 : f32 to vector<8x32xf32>
    %105 = arith.addf %103, %104 : vector<8x32xf32>
    %106 = vector.extract_strided_slice %97 {offsets = [0, 32], sizes = [8, 32], strides = [1, 1]} : vector<8x128xf32> to vector<8x32xf32>
    %cst_56 = arith.constant 5.000000e-01 : f32
    %107 = vector.broadcast %cst_56 : f32 to vector<8x32xf32>
    %108 = arith.mulf %107, %106 : vector<8x32xf32>
    %109 = math.tanh %108 : vector<8x32xf32>
    %cst_57 = arith.constant 5.000000e-01 : f32
    %110 = vector.broadcast %cst_57 : f32 to vector<8x32xf32>
    %111 = arith.mulf %110, %109 : vector<8x32xf32>
    %cst_58 = arith.constant 5.000000e-01 : f32
    %112 = vector.broadcast %cst_58 : f32 to vector<8x32xf32>
    %113 = arith.addf %111, %112 : vector<8x32xf32>
    %114 = vector.extract_strided_slice %97 {offsets = [0, 64], sizes = [8, 32], strides = [1, 1]} : vector<8x128xf32> to vector<8x32xf32>
    %115 = math.tanh %114 : vector<8x32xf32>
    %116 = vector.extract_strided_slice %97 {offsets = [0, 96], sizes = [8, 32], strides = [1, 1]} : vector<8x128xf32> to vector<8x32xf32>
    %cst_59 = arith.constant 5.000000e-01 : f32
    %117 = vector.broadcast %cst_59 : f32 to vector<8x32xf32>
    %118 = arith.mulf %117, %116 : vector<8x32xf32>
    %119 = math.tanh %118 : vector<8x32xf32>
    %cst_60 = arith.constant 5.000000e-01 : f32
    %120 = vector.broadcast %cst_60 : f32 to vector<8x32xf32>
    %121 = arith.mulf %120, %119 : vector<8x32xf32>
    %cst_61 = arith.constant 5.000000e-01 : f32
    %122 = vector.broadcast %cst_61 : f32 to vector<8x32xf32>
    %123 = arith.addf %121, %122 : vector<8x32xf32>
    %c0_62 = arith.constant 0 : index
    %c0_63 = arith.constant 0 : index
    %124 = vector.load %arg8[%c0_62, %c0_63] : memref<8x32xf32, #tpu.memory_space<vmem>>, vector<8x32xf32>
    %125 = arith.mulf %113, %124 : vector<8x32xf32>
    %126 = arith.mulf %105, %115 : vector<8x32xf32>
    %127 = arith.addf %125, %126 : vector<8x32xf32>
    %128 = math.tanh %127 : vector<8x32xf32>
    %129 = arith.mulf %123, %128 : vector<8x32xf32>
    %c0_64 = arith.constant 0 : index
    %c0_65 = arith.constant 0 : index
    %130 = vector.load %arg8[%c0_64, %c0_65] : memref<8x32xf32, #tpu.memory_space<vmem>>, vector<8x32xf32>
    tpu.vector_store %arg8[%c0_64, %c0_65], %127 {strides = array<i32>} : memref<8x32xf32, #tpu.memory_space<vmem>>, vector<8x32xf32>,
    %c0_66 = arith.constant 0 : index
    %c0_67 = arith.constant 0 : index
    %131 = vector.load %arg7[%c0_66, %c0_67] : memref<8x32xf32, #tpu.memory_space<vmem>>, vector<8x32xf32>
    tpu.vector_store %arg7[%c0_66, %c0_67], %129 {strides = array<i32>} : memref<8x32xf32, #tpu.memory_space<vmem>>, vector<8x32xf32>,
    %132 = arith.truncf %129 : vector<8x32xf32> to vector<8x32xbf16>
    %c8_68 = arith.constant 8 : index
    %c0_69 = arith.constant 0 : index
    %133 = vector.load %arg5[%c8_68, %c0_69] : memref<64x32xbf16, #tpu.memory_space<vmem>>, vector<8x32xbf16>
    tpu.vector_store %arg5[%c8_68, %c0_69], %132 {strides = array<i32>} : memref<64x32xbf16, #tpu.memory_space<vmem>>, vector<8x32xbf16>,
    %c0_70 = arith.constant 0 : index
    %c48 = arith.constant 48 : index
    %c0_71 = arith.constant 0 : index
    %134 = vector.load %arg2[%c0_70, %c48, %c0_71] : memref<1x64x128xbf16, #tpu.memory_space<vmem>>, vector<1x8x128xbf16>
    %135 = vector.shape_cast %134 : vector<1x8x128xbf16> to vector<8x128xbf16>
    %136 = arith.extf %135 : vector<8x128xbf16> to vector<8x128xf32>
    %c0_72 = arith.constant 0 : index
    %c0_73 = arith.constant 0 : index
    %137 = vector.load %arg9[%c0_72, %c0_73] : memref<8x32xf32, #tpu.memory_space<vmem>>, vector<8x32xf32>
    %138 = arith.truncf %137 : vector<8x32xf32> to vector<8x32xbf16>
    %cst_74 = arith.constant dense<0.000000e+00> : vector<8x128xf32>
    %139 = tpu.matmul %138, %4, %cst_74 {dimension_numbers = #tpu.dot_dimension_numbers<[1], [0], [0], [1], [0, 0, 1, 1], [], []>} : vector<8x32xbf16>, vector<32x128xbf16>, vector<8x128xf32> -> vector<8x128xf32>
    %140 = arith.addf %136, %139 : vector<8x128xf32>
    %141 = vector.extract_strided_slice %140 {offsets = [0, 0], sizes = [8, 32], strides = [1, 1]} : vector<8x128xf32> to vector<8x32xf32>
    %cst_75 = arith.constant 5.000000e-01 : f32
    %142 = vector.broadcast %cst_75 : f32 to vector<8x32xf32>
    %143 = arith.mulf %142, %141 : vector<8x32xf32>
    %144 = math.tanh %143 : vector<8x32xf32>
    %cst_76 = arith.constant 5.000000e-01 : f32
    %145 = vector.broadcast %cst_76 : f32 to vector<8x32xf32>
    %146 = arith.mulf %145, %144 : vector<8x32xf32>
    %cst_77 = arith.constant 5.000000e-01 : f32
    %147 = vector.broadcast %cst_77 : f32 to vector<8x32xf32>
    %148 = arith.addf %146, %147 : vector<8x32xf32>
    %149 = vector.extract_strided_slice %140 {offsets = [0, 32], sizes = [8, 32], strides = [1, 1]} : vector<8x128xf32> to vector<8x32xf32>
    %cst_78 = arith.constant 5.000000e-01 : f32
    %150 = vector.broadcast %cst_78 : f32 to vector<8x32xf32>
    %151 = arith.mulf %150, %149 : vector<8x32xf32>
    %152 = math.tanh %151 : vector<8x32xf32>
    %cst_79 = arith.constant 5.000000e-01 : f32
    %153 = vector.broadcast %cst_79 : f32 to vector<8x32xf32>
    %154 = arith.mulf %153, %152 : vector<8x32xf32>
    %cst_80 = arith.constant 5.000000e-01 : f32
    %155 = vector.broadcast %cst_80 : f32 to vector<8x32xf32>
    %156 = arith.addf %154, %155 : vector<8x32xf32>
    %157 = vector.extract_strided_slice %140 {offsets = [0, 64], sizes = [8, 32], strides = [1, 1]} : vector<8x128xf32> to vector<8x32xf32>
    %158 = math.tanh %157 : vector<8x32xf32>
    %159 = vector.extract_strided_slice %140 {offsets = [0, 96], sizes = [8, 32], strides = [1, 1]} : vector<8x128xf32> to vector<8x32xf32>
    %cst_81 = arith.constant 5.000000e-01 : f32
    %160 = vector.broadcast %cst_81 : f32 to vector<8x32xf32>
    %161 = arith.mulf %160, %159 : vector<8x32xf32>
    %162 = math.tanh %161 : vector<8x32xf32>
    %cst_82 = arith.constant 5.000000e-01 : f32
    %163 = vector.broadcast %cst_82 : f32 to vector<8x32xf32>
    %164 = arith.mulf %163, %162 : vector<8x32xf32>
    %cst_83 = arith.constant 5.000000e-01 : f32
    %165 = vector.broadcast %cst_83 : f32 to vector<8x32xf32>
    %166 = arith.addf %164, %165 : vector<8x32xf32>
    %c0_84 = arith.constant 0 : index
    %c0_85 = arith.constant 0 : index
    %167 = vector.load %arg10[%c0_84, %c0_85] : memref<8x32xf32, #tpu.memory_space<vmem>>, vector<8x32xf32>
    %168 = arith.mulf %156, %167 : vector<8x32xf32>
    %169 = arith.mulf %148, %158 : vector<8x32xf32>
    %170 = arith.addf %168, %169 : vector<8x32xf32>
    %171 = math.tanh %170 : vector<8x32xf32>
    %172 = arith.mulf %166, %171 : vector<8x32xf32>
    %c0_86 = arith.constant 0 : index
    %c0_87 = arith.constant 0 : index
    %173 = vector.load %arg10[%c0_86, %c0_87] : memref<8x32xf32, #tpu.memory_space<vmem>>, vector<8x32xf32>
    tpu.vector_store %arg10[%c0_86, %c0_87], %170 {strides = array<i32>} : memref<8x32xf32, #tpu.memory_space<vmem>>, vector<8x32xf32>,
    %c0_88 = arith.constant 0 : index
    %c0_89 = arith.constant 0 : index
    %174 = vector.load %arg9[%c0_88, %c0_89] : memref<8x32xf32, #tpu.memory_space<vmem>>, vector<8x32xf32>
    tpu.vector_store %arg9[%c0_88, %c0_89], %172 {strides = array<i32>} : memref<8x32xf32, #tpu.memory_space<vmem>>, vector<8x32xf32>,
    %175 = arith.truncf %172 : vector<8x32xf32> to vector<8x32xbf16>
    %c48_90 = arith.constant 48 : index
    %c0_91 = arith.constant 0 : index
    %176 = vector.load %arg6[%c48_90, %c0_91] : memref<64x32xbf16, #tpu.memory_space<vmem>>, vector<8x32xbf16>
    tpu.vector_store %arg6[%c48_90, %c0_91], %175 {strides = array<i32>} : memref<64x32xbf16, #tpu.memory_space<vmem>>, vector<8x32xbf16>,
    %c0_92 = arith.constant 0 : index
    %c16 = arith.constant 16 : index
    %c0_93 = arith.constant 0 : index
    %177 = vector.load %arg1[%c0_92, %c16, %c0_93] : memref<1x64x128xbf16, #tpu.memory_space<vmem>>, vector<1x8x128xbf16>
    %178 = vector.shape_cast %177 : vector<1x8x128xbf16> to vector<8x128xbf16>
    %179 = arith.extf %178 : vector<8x128xbf16> to vector<8x128xf32>
    %c0_94 = arith.constant 0 : index
    %c0_95 = arith.constant 0 : index
    %180 = vector.load %arg7[%c0_94, %c0_95] : memref<8x32xf32, #tpu.memory_space<vmem>>, vector<8x32xf32>
    %181 = arith.truncf %180 : vector<8x32xf32> to vector<8x32xbf16>
    %cst_96 = arith.constant dense<0.000000e+00> : vector<8x128xf32>
    %182 = tpu.matmul %181, %3, %cst_96 {dimension_numbers = #tpu.dot_dimension_numbers<[1], [0], [0], [1], [0, 0, 1, 1], [], []>} : vector<8x32xbf16>, vector<32x128xbf16>, vector<8x128xf32> -> vector<8x128xf32>
    %183 = arith.addf %179, %182 : vector<8x128xf32>
    %184 = vector.extract_strided_slice %183 {offsets = [0, 0], sizes = [8, 32], strides = [1, 1]} : vector<8x128xf32> to vector<8x32xf32>
    %cst_97 = arith.constant 5.000000e-01 : f32
    %185 = vector.broadcast %cst_97 : f32 to vector<8x32xf32>
    %186 = arith.mulf %185, %184 : vector<8x32xf32>
    %187 = math.tanh %186 : vector<8x32xf32>
    %cst_98 = arith.constant 5.000000e-01 : f32
    %188 = vector.broadcast %cst_98 : f32 to vector<8x32xf32>
    %189 = arith.mulf %188, %187 : vector<8x32xf32>
    %cst_99 = arith.constant 5.000000e-01 : f32
    %190 = vector.broadcast %cst_99 : f32 to vector<8x32xf32>
    %191 = arith.addf %189, %190 : vector<8x32xf32>
    %192 = vector.extract_strided_slice %183 {offsets = [0, 32], sizes = [8, 32], strides = [1, 1]} : vector<8x128xf32> to vector<8x32xf32>
    %cst_100 = arith.constant 5.000000e-01 : f32
    %193 = vector.broadcast %cst_100 : f32 to vector<8x32xf32>
    %194 = arith.mulf %193, %192 : vector<8x32xf32>
    %195 = math.tanh %194 : vector<8x32xf32>
    %cst_101 = arith.constant 5.000000e-01 : f32
    %196 = vector.broadcast %cst_101 : f32 to vector<8x32xf32>
    %197 = arith.mulf %196, %195 : vector<8x32xf32>
    %cst_102 = arith.constant 5.000000e-01 : f32
    %198 = vector.broadcast %cst_102 : f32 to vector<8x32xf32>
    %199 = arith.addf %197, %198 : vector<8x32xf32>
    %200 = vector.extract_strided_slice %183 {offsets = [0, 64], sizes = [8, 32], strides = [1, 1]} : vector<8x128xf32> to vector<8x32xf32>
    %201 = math.tanh %200 : vector<8x32xf32>
    %202 = vector.extract_strided_slice %183 {offsets = [0, 96], sizes = [8, 32], strides = [1, 1]} : vector<8x128xf32> to vector<8x32xf32>
    %cst_103 = arith.constant 5.000000e-01 : f32
    %203 = vector.broadcast %cst_103 : f32 to vector<8x32xf32>
    %204 = arith.mulf %203, %202 : vector<8x32xf32>
    %205 = math.tanh %204 : vector<8x32xf32>
    %cst_104 = arith.constant 5.000000e-01 : f32
    %206 = vector.broadcast %cst_104 : f32 to vector<8x32xf32>
    %207 = arith.mulf %206, %205 : vector<8x32xf32>
    %cst_105 = arith.constant 5.000000e-01 : f32
    %208 = vector.broadcast %cst_105 : f32 to vector<8x32xf32>
    %209 = arith.addf %207, %208 : vector<8x32xf32>
    %c0_106 = arith.constant 0 : index
    %c0_107 = arith.constant 0 : index
    %210 = vector.load %arg8[%c0_106, %c0_107] : memref<8x32xf32, #tpu.memory_space<vmem>>, vector<8x32xf32>
    %211 = arith.mulf %199, %210 : vector<8x32xf32>
    %212 = arith.mulf %191, %201 : vector<8x32xf32>
    %213 = arith.addf %211, %212 : vector<8x32xf32>
    %214 = math.tanh %213 : vector<8x32xf32>
    %215 = arith.mulf %209, %214 : vector<8x32xf32>
    %c0_108 = arith.constant 0 : index
    %c0_109 = arith.constant 0 : index
    %216 = vector.load %arg8[%c0_108, %c0_109] : memref<8x32xf32, #tpu.memory_space<vmem>>, vector<8x32xf32>
    tpu.vector_store %arg8[%c0_108, %c0_109], %213 {strides = array<i32>} : memref<8x32xf32, #tpu.memory_space<vmem>>, vector<8x32xf32>,
    %c0_110 = arith.constant 0 : index
    %c0_111 = arith.constant 0 : index
    %217 = vector.load %arg7[%c0_110, %c0_111] : memref<8x32xf32, #tpu.memory_space<vmem>>, vector<8x32xf32>
    tpu.vector_store %arg7[%c0_110, %c0_111], %215 {strides = array<i32>} : memref<8x32xf32, #tpu.memory_space<vmem>>, vector<8x32xf32>,
    %218 = arith.truncf %215 : vector<8x32xf32> to vector<8x32xbf16>
    %c16_112 = arith.constant 16 : index
    %c0_113 = arith.constant 0 : index
    %219 = vector.load %arg5[%c16_112, %c0_113] : memref<64x32xbf16, #tpu.memory_space<vmem>>, vector<8x32xbf16>
    tpu.vector_store %arg5[%c16_112, %c0_113], %218 {strides = array<i32>} : memref<64x32xbf16, #tpu.memory_space<vmem>>, vector<8x32xbf16>,
    %c0_114 = arith.constant 0 : index
    %c40 = arith.constant 40 : index
    %c0_115 = arith.constant 0 : index
    %220 = vector.load %arg2[%c0_114, %c40, %c0_115] : memref<1x64x128xbf16, #tpu.memory_space<vmem>>, vector<1x8x128xbf16>
    %221 = vector.shape_cast %220 : vector<1x8x128xbf16> to vector<8x128xbf16>
    %222 = arith.extf %221 : vector<8x128xbf16> to vector<8x128xf32>
    %c0_116 = arith.constant 0 : index
    %c0_117 = arith.constant 0 : index
    %223 = vector.load %arg9[%c0_116, %c0_117] : memref<8x32xf32, #tpu.memory_space<vmem>>, vector<8x32xf32>
    %224 = arith.truncf %223 : vector<8x32xf32> to vector<8x32xbf16>
    %cst_118 = arith.constant dense<0.000000e+00> : vector<8x128xf32>
    %225 = tpu.matmul %224, %4, %cst_118 {dimension_numbers = #tpu.dot_dimension_numbers<[1], [0], [0], [1], [0, 0, 1, 1], [], []>} : vector<8x32xbf16>, vector<32x128xbf16>, vector<8x128xf32> -> vector<8x128xf32>
    %226 = arith.addf %222, %225 : vector<8x128xf32>
    %227 = vector.extract_strided_slice %226 {offsets = [0, 0], sizes = [8, 32], strides = [1, 1]} : vector<8x128xf32> to vector<8x32xf32>
    %cst_119 = arith.constant 5.000000e-01 : f32
    %228 = vector.broadcast %cst_119 : f32 to vector<8x32xf32>
    %229 = arith.mulf %228, %227 : vector<8x32xf32>
    %230 = math.tanh %229 : vector<8x32xf32>
    %cst_120 = arith.constant 5.000000e-01 : f32
    %231 = vector.broadcast %cst_120 : f32 to vector<8x32xf32>
    %232 = arith.mulf %231, %230 : vector<8x32xf32>
    %cst_121 = arith.constant 5.000000e-01 : f32
    %233 = vector.broadcast %cst_121 : f32 to vector<8x32xf32>
    %234 = arith.addf %232, %233 : vector<8x32xf32>
    %235 = vector.extract_strided_slice %226 {offsets = [0, 32], sizes = [8, 32], strides = [1, 1]} : vector<8x128xf32> to vector<8x32xf32>
    %cst_122 = arith.constant 5.000000e-01 : f32
    %236 = vector.broadcast %cst_122 : f32 to vector<8x32xf32>
    %237 = arith.mulf %236, %235 : vector<8x32xf32>
    %238 = math.tanh %237 : vector<8x32xf32>
    %cst_123 = arith.constant 5.000000e-01 : f32
    %239 = vector.broadcast %cst_123 : f32 to vector<8x32xf32>
    %240 = arith.mulf %239, %238 : vector<8x32xf32>
    %cst_124 = arith.constant 5.000000e-01 : f32
    %241 = vector.broadcast %cst_124 : f32 to vector<8x32xf32>
    %242 = arith.addf %240, %241 : vector<8x32xf32>
    %243 = vector.extract_strided_slice %226 {offsets = [0, 64], sizes = [8, 32], strides = [1, 1]} : vector<8x128xf32> to vector<8x32xf32>
    %244 = math.tanh %243 : vector<8x32xf32>
    %245 = vector.extract_strided_slice %226 {offsets = [0, 96], sizes = [8, 32], strides = [1, 1]} : vector<8x128xf32> to vector<8x32xf32>
    %cst_125 = arith.constant 5.000000e-01 : f32
    %246 = vector.broadcast %cst_125 : f32 to vector<8x32xf32>
    %247 = arith.mulf %246, %245 : vector<8x32xf32>
    %248 = math.tanh %247 : vector<8x32xf32>
    %cst_126 = arith.constant 5.000000e-01 : f32
    %249 = vector.broadcast %cst_126 : f32 to vector<8x32xf32>
    %250 = arith.mulf %249, %248 : vector<8x32xf32>
    %cst_127 = arith.constant 5.000000e-01 : f32
    %251 = vector.broadcast %cst_127 : f32 to vector<8x32xf32>
    %252 = arith.addf %250, %251 : vector<8x32xf32>
    %c0_128 = arith.constant 0 : index
    %c0_129 = arith.constant 0 : index
    %253 = vector.load %arg10[%c0_128, %c0_129] : memref<8x32xf32, #tpu.memory_space<vmem>>, vector<8x32xf32>
    %254 = arith.mulf %242, %253 : vector<8x32xf32>
    %255 = arith.mulf %234, %244 : vector<8x32xf32>
    %256 = arith.addf %254, %255 : vector<8x32xf32>
    %257 = math.tanh %256 : vector<8x32xf32>
    %258 = arith.mulf %252, %257 : vector<8x32xf32>
    %c0_130 = arith.constant 0 : index
    %c0_131 = arith.constant 0 : index
    %259 = vector.load %arg10[%c0_130, %c0_131] : memref<8x32xf32, #tpu.memory_space<vmem>>, vector<8x32xf32>
    tpu.vector_store %arg10[%c0_130, %c0_131], %256 {strides = array<i32>} : memref<8x32xf32, #tpu.memory_space<vmem>>, vector<8x32xf32>,
    %c0_132 = arith.constant 0 : index
    %c0_133 = arith.constant 0 : index
    %260 = vector.load %arg9[%c0_132, %c0_133] : memref<8x32xf32, #tpu.memory_space<vmem>>, vector<8x32xf32>
    tpu.vector_store %arg9[%c0_132, %c0_133], %258 {strides = array<i32>} : memref<8x32xf32, #tpu.memory_space<vmem>>, vector<8x32xf32>,
    %261 = arith.truncf %258 : vector<8x32xf32> to vector<8x32xbf16>
    %c40_134 = arith.constant 40 : index
    %c0_135 = arith.constant 0 : index
    %262 = vector.load %arg6[%c40_134, %c0_135] : memref<64x32xbf16, #tpu.memory_space<vmem>>, vector<8x32xbf16>
    tpu.vector_store %arg6[%c40_134, %c0_135], %261 {strides = array<i32>} : memref<64x32xbf16, #tpu.memory_space<vmem>>, vector<8x32xbf16>,
    %c0_136 = arith.constant 0 : index
    %c24 = arith.constant 24 : index
    %c0_137 = arith.constant 0 : index
    %263 = vector.load %arg1[%c0_136, %c24, %c0_137] : memref<1x64x128xbf16, #tpu.memory_space<vmem>>, vector<1x8x128xbf16>
    %264 = vector.shape_cast %263 : vector<1x8x128xbf16> to vector<8x128xbf16>
    %265 = arith.extf %264 : vector<8x128xbf16> to vector<8x128xf32>
    %c0_138 = arith.constant 0 : index
    %c0_139 = arith.constant 0 : index
    %266 = vector.load %arg7[%c0_138, %c0_139] : memref<8x32xf32, #tpu.memory_space<vmem>>, vector<8x32xf32>
    %267 = arith.truncf %266 : vector<8x32xf32> to vector<8x32xbf16>
    %cst_140 = arith.constant dense<0.000000e+00> : vector<8x128xf32>
    %268 = tpu.matmul %267, %3, %cst_140 {dimension_numbers = #tpu.dot_dimension_numbers<[1], [0], [0], [1], [0, 0, 1, 1], [], []>} : vector<8x32xbf16>, vector<32x128xbf16>, vector<8x128xf32> -> vector<8x128xf32>
    %269 = arith.addf %265, %268 : vector<8x128xf32>
    %270 = vector.extract_strided_slice %269 {offsets = [0, 0], sizes = [8, 32], strides = [1, 1]} : vector<8x128xf32> to vector<8x32xf32>
    %cst_141 = arith.constant 5.000000e-01 : f32
    %271 = vector.broadcast %cst_141 : f32 to vector<8x32xf32>
    %272 = arith.mulf %271, %270 : vector<8x32xf32>
    %273 = math.tanh %272 : vector<8x32xf32>
    %cst_142 = arith.constant 5.000000e-01 : f32
    %274 = vector.broadcast %cst_142 : f32 to vector<8x32xf32>
    %275 = arith.mulf %274, %273 : vector<8x32xf32>
    %cst_143 = arith.constant 5.000000e-01 : f32
    %276 = vector.broadcast %cst_143 : f32 to vector<8x32xf32>
    %277 = arith.addf %275, %276 : vector<8x32xf32>
    %278 = vector.extract_strided_slice %269 {offsets = [0, 32], sizes = [8, 32], strides = [1, 1]} : vector<8x128xf32> to vector<8x32xf32>
    %cst_144 = arith.constant 5.000000e-01 : f32
    %279 = vector.broadcast %cst_144 : f32 to vector<8x32xf32>
    %280 = arith.mulf %279, %278 : vector<8x32xf32>
    %281 = math.tanh %280 : vector<8x32xf32>
    %cst_145 = arith.constant 5.000000e-01 : f32
    %282 = vector.broadcast %cst_145 : f32 to vector<8x32xf32>
    %283 = arith.mulf %282, %281 : vector<8x32xf32>
    %cst_146 = arith.constant 5.000000e-01 : f32
    %284 = vector.broadcast %cst_146 : f32 to vector<8x32xf32>
    %285 = arith.addf %283, %284 : vector<8x32xf32>
    %286 = vector.extract_strided_slice %269 {offsets = [0, 64], sizes = [8, 32], strides = [1, 1]} : vector<8x128xf32> to vector<8x32xf32>
    %287 = math.tanh %286 : vector<8x32xf32>
    %288 = vector.extract_strided_slice %269 {offsets = [0, 96], sizes = [8, 32], strides = [1, 1]} : vector<8x128xf32> to vector<8x32xf32>
    %cst_147 = arith.constant 5.000000e-01 : f32
    %289 = vector.broadcast %cst_147 : f32 to vector<8x32xf32>
    %290 = arith.mulf %289, %288 : vector<8x32xf32>
    %291 = math.tanh %290 : vector<8x32xf32>
    %cst_148 = arith.constant 5.000000e-01 : f32
    %292 = vector.broadcast %cst_148 : f32 to vector<8x32xf32>
    %293 = arith.mulf %292, %291 : vector<8x32xf32>
    %cst_149 = arith.constant 5.000000e-01 : f32
    %294 = vector.broadcast %cst_149 : f32 to vector<8x32xf32>
    %295 = arith.addf %293, %294 : vector<8x32xf32>
    %c0_150 = arith.constant 0 : index
    %c0_151 = arith.constant 0 : index
    %296 = vector.load %arg8[%c0_150, %c0_151] : memref<8x32xf32, #tpu.memory_space<vmem>>, vector<8x32xf32>
    %297 = arith.mulf %285, %296 : vector<8x32xf32>
    %298 = arith.mulf %277, %287 : vector<8x32xf32>
    %299 = arith.addf %297, %298 : vector<8x32xf32>
    %300 = math.tanh %299 : vector<8x32xf32>
    %301 = arith.mulf %295, %300 : vector<8x32xf32>
    %c0_152 = arith.constant 0 : index
    %c0_153 = arith.constant 0 : index
    %302 = vector.load %arg8[%c0_152, %c0_153] : memref<8x32xf32, #tpu.memory_space<vmem>>, vector<8x32xf32>
    tpu.vector_store %arg8[%c0_152, %c0_153], %299 {strides = array<i32>} : memref<8x32xf32, #tpu.memory_space<vmem>>, vector<8x32xf32>,
    %c0_154 = arith.constant 0 : index
    %c0_155 = arith.constant 0 : index
    %303 = vector.load %arg7[%c0_154, %c0_155] : memref<8x32xf32, #tpu.memory_space<vmem>>, vector<8x32xf32>
    tpu.vector_store %arg7[%c0_154, %c0_155], %301 {strides = array<i32>} : memref<8x32xf32, #tpu.memory_space<vmem>>, vector<8x32xf32>,
    %304 = arith.truncf %301 : vector<8x32xf32> to vector<8x32xbf16>
    %c24_156 = arith.constant 24 : index
    %c0_157 = arith.constant 0 : index
    %305 = vector.load %arg5[%c24_156, %c0_157] : memref<64x32xbf16, #tpu.memory_space<vmem>>, vector<8x32xbf16>
    tpu.vector_store %arg5[%c24_156, %c0_157], %304 {strides = array<i32>} : memref<64x32xbf16, #tpu.memory_space<vmem>>, vector<8x32xbf16>,
    %c0_158 = arith.constant 0 : index
    %c32 = arith.constant 32 : index
    %c0_159 = arith.constant 0 : index
    %306 = vector.load %arg2[%c0_158, %c32, %c0_159] : memref<1x64x128xbf16, #tpu.memory_space<vmem>>, vector<1x8x128xbf16>
    %307 = vector.shape_cast %306 : vector<1x8x128xbf16> to vector<8x128xbf16>
    %308 = arith.extf %307 : vector<8x128xbf16> to vector<8x128xf32>
    %c0_160 = arith.constant 0 : index
    %c0_161 = arith.constant 0 : index
    %309 = vector.load %arg9[%c0_160, %c0_161] : memref<8x32xf32, #tpu.memory_space<vmem>>, vector<8x32xf32>
    %310 = arith.truncf %309 : vector<8x32xf32> to vector<8x32xbf16>
    %cst_162 = arith.constant dense<0.000000e+00> : vector<8x128xf32>
    %311 = tpu.matmul %310, %4, %cst_162 {dimension_numbers = #tpu.dot_dimension_numbers<[1], [0], [0], [1], [0, 0, 1, 1], [], []>} : vector<8x32xbf16>, vector<32x128xbf16>, vector<8x128xf32> -> vector<8x128xf32>
    %312 = arith.addf %308, %311 : vector<8x128xf32>
    %313 = vector.extract_strided_slice %312 {offsets = [0, 0], sizes = [8, 32], strides = [1, 1]} : vector<8x128xf32> to vector<8x32xf32>
    %cst_163 = arith.constant 5.000000e-01 : f32
    %314 = vector.broadcast %cst_163 : f32 to vector<8x32xf32>
    %315 = arith.mulf %314, %313 : vector<8x32xf32>
    %316 = math.tanh %315 : vector<8x32xf32>
    %cst_164 = arith.constant 5.000000e-01 : f32
    %317 = vector.broadcast %cst_164 : f32 to vector<8x32xf32>
    %318 = arith.mulf %317, %316 : vector<8x32xf32>
    %cst_165 = arith.constant 5.000000e-01 : f32
    %319 = vector.broadcast %cst_165 : f32 to vector<8x32xf32>
    %320 = arith.addf %318, %319 : vector<8x32xf32>
    %321 = vector.extract_strided_slice %312 {offsets = [0, 32], sizes = [8, 32], strides = [1, 1]} : vector<8x128xf32> to vector<8x32xf32>
    %cst_166 = arith.constant 5.000000e-01 : f32
    %322 = vector.broadcast %cst_166 : f32 to vector<8x32xf32>
    %323 = arith.mulf %322, %321 : vector<8x32xf32>
    %324 = math.tanh %323 : vector<8x32xf32>
    %cst_167 = arith.constant 5.000000e-01 : f32
    %325 = vector.broadcast %cst_167 : f32 to vector<8x32xf32>
    %326 = arith.mulf %325, %324 : vector<8x32xf32>
    %cst_168 = arith.constant 5.000000e-01 : f32
    %327 = vector.broadcast %cst_168 : f32 to vector<8x32xf32>
    %328 = arith.addf %326, %327 : vector<8x32xf32>
    %329 = vector.extract_strided_slice %312 {offsets = [0, 64], sizes = [8, 32], strides = [1, 1]} : vector<8x128xf32> to vector<8x32xf32>
    %330 = math.tanh %329 : vector<8x32xf32>
    %331 = vector.extract_strided_slice %312 {offsets = [0, 96], sizes = [8, 32], strides = [1, 1]} : vector<8x128xf32> to vector<8x32xf32>
    %cst_169 = arith.constant 5.000000e-01 : f32
    %332 = vector.broadcast %cst_169 : f32 to vector<8x32xf32>
    %333 = arith.mulf %332, %331 : vector<8x32xf32>
    %334 = math.tanh %333 : vector<8x32xf32>
    %cst_170 = arith.constant 5.000000e-01 : f32
    %335 = vector.broadcast %cst_170 : f32 to vector<8x32xf32>
    %336 = arith.mulf %335, %334 : vector<8x32xf32>
    %cst_171 = arith.constant 5.000000e-01 : f32
    %337 = vector.broadcast %cst_171 : f32 to vector<8x32xf32>
    %338 = arith.addf %336, %337 : vector<8x32xf32>
    %c0_172 = arith.constant 0 : index
    %c0_173 = arith.constant 0 : index
    %339 = vector.load %arg10[%c0_172, %c0_173] : memref<8x32xf32, #tpu.memory_space<vmem>>, vector<8x32xf32>
    %340 = arith.mulf %328, %339 : vector<8x32xf32>
    %341 = arith.mulf %320, %330 : vector<8x32xf32>
    %342 = arith.addf %340, %341 : vector<8x32xf32>
    %343 = math.tanh %342 : vector<8x32xf32>
    %344 = arith.mulf %338, %343 : vector<8x32xf32>
    %c0_174 = arith.constant 0 : index
    %c0_175 = arith.constant 0 : index
    %345 = vector.load %arg10[%c0_174, %c0_175] : memref<8x32xf32, #tpu.memory_space<vmem>>, vector<8x32xf32>
    tpu.vector_store %arg10[%c0_174, %c0_175], %342 {strides = array<i32>} : memref<8x32xf32, #tpu.memory_space<vmem>>, vector<8x32xf32>,
    %c0_176 = arith.constant 0 : index
    %c0_177 = arith.constant 0 : index
    %346 = vector.load %arg9[%c0_176, %c0_177] : memref<8x32xf32, #tpu.memory_space<vmem>>, vector<8x32xf32>
    tpu.vector_store %arg9[%c0_176, %c0_177], %344 {strides = array<i32>} : memref<8x32xf32, #tpu.memory_space<vmem>>, vector<8x32xf32>,
    %347 = arith.truncf %344 : vector<8x32xf32> to vector<8x32xbf16>
    %c32_178 = arith.constant 32 : index
    %c0_179 = arith.constant 0 : index
    %348 = vector.load %arg6[%c32_178, %c0_179] : memref<64x32xbf16, #tpu.memory_space<vmem>>, vector<8x32xbf16>
    tpu.vector_store %arg6[%c32_178, %c0_179], %347 {strides = array<i32>} : memref<64x32xbf16, #tpu.memory_space<vmem>>, vector<8x32xbf16>,
    %c0_180 = arith.constant 0 : index
    %c32_181 = arith.constant 32 : index
    %c0_182 = arith.constant 0 : index
    %349 = vector.load %arg1[%c0_180, %c32_181, %c0_182] : memref<1x64x128xbf16, #tpu.memory_space<vmem>>, vector<1x8x128xbf16>
    %350 = vector.shape_cast %349 : vector<1x8x128xbf16> to vector<8x128xbf16>
    %351 = arith.extf %350 : vector<8x128xbf16> to vector<8x128xf32>
    %c0_183 = arith.constant 0 : index
    %c0_184 = arith.constant 0 : index
    %352 = vector.load %arg7[%c0_183, %c0_184] : memref<8x32xf32, #tpu.memory_space<vmem>>, vector<8x32xf32>
    %353 = arith.truncf %352 : vector<8x32xf32> to vector<8x32xbf16>
    %cst_185 = arith.constant dense<0.000000e+00> : vector<8x128xf32>
    %354 = tpu.matmul %353, %3, %cst_185 {dimension_numbers = #tpu.dot_dimension_numbers<[1], [0], [0], [1], [0, 0, 1, 1], [], []>} : vector<8x32xbf16>, vector<32x128xbf16>, vector<8x128xf32> -> vector<8x128xf32>
    %355 = arith.addf %351, %354 : vector<8x128xf32>
    %356 = vector.extract_strided_slice %355 {offsets = [0, 0], sizes = [8, 32], strides = [1, 1]} : vector<8x128xf32> to vector<8x32xf32>
    %cst_186 = arith.constant 5.000000e-01 : f32
    %357 = vector.broadcast %cst_186 : f32 to vector<8x32xf32>
    %358 = arith.mulf %357, %356 : vector<8x32xf32>
    %359 = math.tanh %358 : vector<8x32xf32>
    %cst_187 = arith.constant 5.000000e-01 : f32
    %360 = vector.broadcast %cst_187 : f32 to vector<8x32xf32>
    %361 = arith.mulf %360, %359 : vector<8x32xf32>
    %cst_188 = arith.constant 5.000000e-01 : f32
    %362 = vector.broadcast %cst_188 : f32 to vector<8x32xf32>
    %363 = arith.addf %361, %362 : vector<8x32xf32>
    %364 = vector.extract_strided_slice %355 {offsets = [0, 32], sizes = [8, 32], strides = [1, 1]} : vector<8x128xf32> to vector<8x32xf32>
    %cst_189 = arith.constant 5.000000e-01 : f32
    %365 = vector.broadcast %cst_189 : f32 to vector<8x32xf32>
    %366 = arith.mulf %365, %364 : vector<8x32xf32>
    %367 = math.tanh %366 : vector<8x32xf32>
    %cst_190 = arith.constant 5.000000e-01 : f32
    %368 = vector.broadcast %cst_190 : f32 to vector<8x32xf32>
    %369 = arith.mulf %368, %367 : vector<8x32xf32>
    %cst_191 = arith.constant 5.000000e-01 : f32
    %370 = vector.broadcast %cst_191 : f32 to vector<8x32xf32>
    %371 = arith.addf %369, %370 : vector<8x32xf32>
    %372 = vector.extract_strided_slice %355 {offsets = [0, 64], sizes = [8, 32], strides = [1, 1]} : vector<8x128xf32> to vector<8x32xf32>
    %373 = math.tanh %372 : vector<8x32xf32>
    %374 = vector.extract_strided_slice %355 {offsets = [0, 96], sizes = [8, 32], strides = [1, 1]} : vector<8x128xf32> to vector<8x32xf32>
    %cst_192 = arith.constant 5.000000e-01 : f32
    %375 = vector.broadcast %cst_192 : f32 to vector<8x32xf32>
    %376 = arith.mulf %375, %374 : vector<8x32xf32>
    %377 = math.tanh %376 : vector<8x32xf32>
    %cst_193 = arith.constant 5.000000e-01 : f32
    %378 = vector.broadcast %cst_193 : f32 to vector<8x32xf32>
    %379 = arith.mulf %378, %377 : vector<8x32xf32>
    %cst_194 = arith.constant 5.000000e-01 : f32
    %380 = vector.broadcast %cst_194 : f32 to vector<8x32xf32>
    %381 = arith.addf %379, %380 : vector<8x32xf32>
    %c0_195 = arith.constant 0 : index
    %c0_196 = arith.constant 0 : index
    %382 = vector.load %arg8[%c0_195, %c0_196] : memref<8x32xf32, #tpu.memory_space<vmem>>, vector<8x32xf32>
    %383 = arith.mulf %371, %382 : vector<8x32xf32>
    %384 = arith.mulf %363, %373 : vector<8x32xf32>
    %385 = arith.addf %383, %384 : vector<8x32xf32>
    %386 = math.tanh %385 : vector<8x32xf32>
    %387 = arith.mulf %381, %386 : vector<8x32xf32>
    %c0_197 = arith.constant 0 : index
    %c0_198 = arith.constant 0 : index
    %388 = vector.load %arg8[%c0_197, %c0_198] : memref<8x32xf32, #tpu.memory_space<vmem>>, vector<8x32xf32>
    tpu.vector_store %arg8[%c0_197, %c0_198], %385 {strides = array<i32>} : memref<8x32xf32, #tpu.memory_space<vmem>>, vector<8x32xf32>,
    %c0_199 = arith.constant 0 : index
    %c0_200 = arith.constant 0 : index
    %389 = vector.load %arg7[%c0_199, %c0_200] : memref<8x32xf32, #tpu.memory_space<vmem>>, vector<8x32xf32>
    tpu.vector_store %arg7[%c0_199, %c0_200], %387 {strides = array<i32>} : memref<8x32xf32, #tpu.memory_space<vmem>>, vector<8x32xf32>,
    %390 = arith.truncf %387 : vector<8x32xf32> to vector<8x32xbf16>
    %c32_201 = arith.constant 32 : index
    %c0_202 = arith.constant 0 : index
    %391 = vector.load %arg5[%c32_201, %c0_202] : memref<64x32xbf16, #tpu.memory_space<vmem>>, vector<8x32xbf16>
    tpu.vector_store %arg5[%c32_201, %c0_202], %390 {strides = array<i32>} : memref<64x32xbf16, #tpu.memory_space<vmem>>, vector<8x32xbf16>,
    %c0_203 = arith.constant 0 : index
    %c24_204 = arith.constant 24 : index
    %c0_205 = arith.constant 0 : index
    %392 = vector.load %arg2[%c0_203, %c24_204, %c0_205] : memref<1x64x128xbf16, #tpu.memory_space<vmem>>, vector<1x8x128xbf16>
    %393 = vector.shape_cast %392 : vector<1x8x128xbf16> to vector<8x128xbf16>
    %394 = arith.extf %393 : vector<8x128xbf16> to vector<8x128xf32>
    %c0_206 = arith.constant 0 : index
    %c0_207 = arith.constant 0 : index
    %395 = vector.load %arg9[%c0_206, %c0_207] : memref<8x32xf32, #tpu.memory_space<vmem>>, vector<8x32xf32>
    %396 = arith.truncf %395 : vector<8x32xf32> to vector<8x32xbf16>
    %cst_208 = arith.constant dense<0.000000e+00> : vector<8x128xf32>
    %397 = tpu.matmul %396, %4, %cst_208 {dimension_numbers = #tpu.dot_dimension_numbers<[1], [0], [0], [1], [0, 0, 1, 1], [], []>} : vector<8x32xbf16>, vector<32x128xbf16>, vector<8x128xf32> -> vector<8x128xf32>
    %398 = arith.addf %394, %397 : vector<8x128xf32>
    %399 = vector.extract_strided_slice %398 {offsets = [0, 0], sizes = [8, 32], strides = [1, 1]} : vector<8x128xf32> to vector<8x32xf32>
    %cst_209 = arith.constant 5.000000e-01 : f32
    %400 = vector.broadcast %cst_209 : f32 to vector<8x32xf32>
    %401 = arith.mulf %400, %399 : vector<8x32xf32>
    %402 = math.tanh %401 : vector<8x32xf32>
    %cst_210 = arith.constant 5.000000e-01 : f32
    %403 = vector.broadcast %cst_210 : f32 to vector<8x32xf32>
    %404 = arith.mulf %403, %402 : vector<8x32xf32>
    %cst_211 = arith.constant 5.000000e-01 : f32
    %405 = vector.broadcast %cst_211 : f32 to vector<8x32xf32>
    %406 = arith.addf %404, %405 : vector<8x32xf32>
    %407 = vector.extract_strided_slice %398 {offsets = [0, 32], sizes = [8, 32], strides = [1, 1]} : vector<8x128xf32> to vector<8x32xf32>
    %cst_212 = arith.constant 5.000000e-01 : f32
    %408 = vector.broadcast %cst_212 : f32 to vector<8x32xf32>
    %409 = arith.mulf %408, %407 : vector<8x32xf32>
    %410 = math.tanh %409 : vector<8x32xf32>
    %cst_213 = arith.constant 5.000000e-01 : f32
    %411 = vector.broadcast %cst_213 : f32 to vector<8x32xf32>
    %412 = arith.mulf %411, %410 : vector<8x32xf32>
    %cst_214 = arith.constant 5.000000e-01 : f32
    %413 = vector.broadcast %cst_214 : f32 to vector<8x32xf32>
    %414 = arith.addf %412, %413 : vector<8x32xf32>
    %415 = vector.extract_strided_slice %398 {offsets = [0, 64], sizes = [8, 32], strides = [1, 1]} : vector<8x128xf32> to vector<8x32xf32>
    %416 = math.tanh %415 : vector<8x32xf32>
    %417 = vector.extract_strided_slice %398 {offsets = [0, 96], sizes = [8, 32], strides = [1, 1]} : vector<8x128xf32> to vector<8x32xf32>
    %cst_215 = arith.constant 5.000000e-01 : f32
    %418 = vector.broadcast %cst_215 : f32 to vector<8x32xf32>
    %419 = arith.mulf %418, %417 : vector<8x32xf32>
    %420 = math.tanh %419 : vector<8x32xf32>
    %cst_216 = arith.constant 5.000000e-01 : f32
    %421 = vector.broadcast %cst_216 : f32 to vector<8x32xf32>
    %422 = arith.mulf %421, %420 : vector<8x32xf32>
    %cst_217 = arith.constant 5.000000e-01 : f32
    %423 = vector.broadcast %cst_217 : f32 to vector<8x32xf32>
    %424 = arith.addf %422, %423 : vector<8x32xf32>
    %c0_218 = arith.constant 0 : index
    %c0_219 = arith.constant 0 : index
    %425 = vector.load %arg10[%c0_218, %c0_219] : memref<8x32xf32, #tpu.memory_space<vmem>>, vector<8x32xf32>
    %426 = arith.mulf %414, %425 : vector<8x32xf32>
    %427 = arith.mulf %406, %416 : vector<8x32xf32>
    %428 = arith.addf %426, %427 : vector<8x32xf32>
    %429 = math.tanh %428 : vector<8x32xf32>
    %430 = arith.mulf %424, %429 : vector<8x32xf32>
    %c0_220 = arith.constant 0 : index
    %c0_221 = arith.constant 0 : index
    %431 = vector.load %arg10[%c0_220, %c0_221] : memref<8x32xf32, #tpu.memory_space<vmem>>, vector<8x32xf32>
    tpu.vector_store %arg10[%c0_220, %c0_221], %428 {strides = array<i32>} : memref<8x32xf32, #tpu.memory_space<vmem>>, vector<8x32xf32>,
    %c0_222 = arith.constant 0 : index
    %c0_223 = arith.constant 0 : index
    %432 = vector.load %arg9[%c0_222, %c0_223] : memref<8x32xf32, #tpu.memory_space<vmem>>, vector<8x32xf32>
    tpu.vector_store %arg9[%c0_222, %c0_223], %430 {strides = array<i32>} : memref<8x32xf32, #tpu.memory_space<vmem>>, vector<8x32xf32>,
    %433 = arith.truncf %430 : vector<8x32xf32> to vector<8x32xbf16>
    %c24_224 = arith.constant 24 : index
    %c0_225 = arith.constant 0 : index
    %434 = vector.load %arg6[%c24_224, %c0_225] : memref<64x32xbf16, #tpu.memory_space<vmem>>, vector<8x32xbf16>
    tpu.vector_store %arg6[%c24_224, %c0_225], %433 {strides = array<i32>} : memref<64x32xbf16, #tpu.memory_space<vmem>>, vector<8x32xbf16>,
    %c0_226 = arith.constant 0 : index
    %c40_227 = arith.constant 40 : index
    %c0_228 = arith.constant 0 : index
    %435 = vector.load %arg1[%c0_226, %c40_227, %c0_228] : memref<1x64x128xbf16, #tpu.memory_space<vmem>>, vector<1x8x128xbf16>
    %436 = vector.shape_cast %435 : vector<1x8x128xbf16> to vector<8x128xbf16>
    %437 = arith.extf %436 : vector<8x128xbf16> to vector<8x128xf32>
    %c0_229 = arith.constant 0 : index
    %c0_230 = arith.constant 0 : index
    %438 = vector.load %arg7[%c0_229, %c0_230] : memref<8x32xf32, #tpu.memory_space<vmem>>, vector<8x32xf32>
    %439 = arith.truncf %438 : vector<8x32xf32> to vector<8x32xbf16>
    %cst_231 = arith.constant dense<0.000000e+00> : vector<8x128xf32>
    %440 = tpu.matmul %439, %3, %cst_231 {dimension_numbers = #tpu.dot_dimension_numbers<[1], [0], [0], [1], [0, 0, 1, 1], [], []>} : vector<8x32xbf16>, vector<32x128xbf16>, vector<8x128xf32> -> vector<8x128xf32>
    %441 = arith.addf %437, %440 : vector<8x128xf32>
    %442 = vector.extract_strided_slice %441 {offsets = [0, 0], sizes = [8, 32], strides = [1, 1]} : vector<8x128xf32> to vector<8x32xf32>
    %cst_232 = arith.constant 5.000000e-01 : f32
    %443 = vector.broadcast %cst_232 : f32 to vector<8x32xf32>
    %444 = arith.mulf %443, %442 : vector<8x32xf32>
    %445 = math.tanh %444 : vector<8x32xf32>
    %cst_233 = arith.constant 5.000000e-01 : f32
    %446 = vector.broadcast %cst_233 : f32 to vector<8x32xf32>
    %447 = arith.mulf %446, %445 : vector<8x32xf32>
    %cst_234 = arith.constant 5.000000e-01 : f32
    %448 = vector.broadcast %cst_234 : f32 to vector<8x32xf32>
    %449 = arith.addf %447, %448 : vector<8x32xf32>
    %450 = vector.extract_strided_slice %441 {offsets = [0, 32], sizes = [8, 32], strides = [1, 1]} : vector<8x128xf32> to vector<8x32xf32>
    %cst_235 = arith.constant 5.000000e-01 : f32
    %451 = vector.broadcast %cst_235 : f32 to vector<8x32xf32>
    %452 = arith.mulf %451, %450 : vector<8x32xf32>
    %453 = math.tanh %452 : vector<8x32xf32>
    %cst_236 = arith.constant 5.000000e-01 : f32
    %454 = vector.broadcast %cst_236 : f32 to vector<8x32xf32>
    %455 = arith.mulf %454, %453 : vector<8x32xf32>
    %cst_237 = arith.constant 5.000000e-01 : f32
    %456 = vector.broadcast %cst_237 : f32 to vector<8x32xf32>
    %457 = arith.addf %455, %456 : vector<8x32xf32>
    %458 = vector.extract_strided_slice %441 {offsets = [0, 64], sizes = [8, 32], strides = [1, 1]} : vector<8x128xf32> to vector<8x32xf32>
    %459 = math.tanh %458 : vector<8x32xf32>
    %460 = vector.extract_strided_slice %441 {offsets = [0, 96], sizes = [8, 32], strides = [1, 1]} : vector<8x128xf32> to vector<8x32xf32>
    %cst_238 = arith.constant 5.000000e-01 : f32
    %461 = vector.broadcast %cst_238 : f32 to vector<8x32xf32>
    %462 = arith.mulf %461, %460 : vector<8x32xf32>
    %463 = math.tanh %462 : vector<8x32xf32>
    %cst_239 = arith.constant 5.000000e-01 : f32
    %464 = vector.broadcast %cst_239 : f32 to vector<8x32xf32>
    %465 = arith.mulf %464, %463 : vector<8x32xf32>
    %cst_240 = arith.constant 5.000000e-01 : f32
    %466 = vector.broadcast %cst_240 : f32 to vector<8x32xf32>
    %467 = arith.addf %465, %466 : vector<8x32xf32>
    %c0_241 = arith.constant 0 : index
    %c0_242 = arith.constant 0 : index
    %468 = vector.load %arg8[%c0_241, %c0_242] : memref<8x32xf32, #tpu.memory_space<vmem>>, vector<8x32xf32>
    %469 = arith.mulf %457, %468 : vector<8x32xf32>
    %470 = arith.mulf %449, %459 : vector<8x32xf32>
    %471 = arith.addf %469, %470 : vector<8x32xf32>
    %472 = math.tanh %471 : vector<8x32xf32>
    %473 = arith.mulf %467, %472 : vector<8x32xf32>
    %c0_243 = arith.constant 0 : index
    %c0_244 = arith.constant 0 : index
    %474 = vector.load %arg8[%c0_243, %c0_244] : memref<8x32xf32, #tpu.memory_space<vmem>>, vector<8x32xf32>
    tpu.vector_store %arg8[%c0_243, %c0_244], %471 {strides = array<i32>} : memref<8x32xf32, #tpu.memory_space<vmem>>, vector<8x32xf32>,
    %c0_245 = arith.constant 0 : index
    %c0_246 = arith.constant 0 : index
    %475 = vector.load %arg7[%c0_245, %c0_246] : memref<8x32xf32, #tpu.memory_space<vmem>>, vector<8x32xf32>
    tpu.vector_store %arg7[%c0_245, %c0_246], %473 {strides = array<i32>} : memref<8x32xf32, #tpu.memory_space<vmem>>, vector<8x32xf32>,
    %476 = arith.truncf %473 : vector<8x32xf32> to vector<8x32xbf16>
    %c40_247 = arith.constant 40 : index
    %c0_248 = arith.constant 0 : index
    %477 = vector.load %arg5[%c40_247, %c0_248] : memref<64x32xbf16, #tpu.memory_space<vmem>>, vector<8x32xbf16>
    tpu.vector_store %arg5[%c40_247, %c0_248], %476 {strides = array<i32>} : memref<64x32xbf16, #tpu.memory_space<vmem>>, vector<8x32xbf16>,
    %c0_249 = arith.constant 0 : index
    %c16_250 = arith.constant 16 : index
    %c0_251 = arith.constant 0 : index
    %478 = vector.load %arg2[%c0_249, %c16_250, %c0_251] : memref<1x64x128xbf16, #tpu.memory_space<vmem>>, vector<1x8x128xbf16>
    %479 = vector.shape_cast %478 : vector<1x8x128xbf16> to vector<8x128xbf16>
    %480 = arith.extf %479 : vector<8x128xbf16> to vector<8x128xf32>
    %c0_252 = arith.constant 0 : index
    %c0_253 = arith.constant 0 : index
    %481 = vector.load %arg9[%c0_252, %c0_253] : memref<8x32xf32, #tpu.memory_space<vmem>>, vector<8x32xf32>
    %482 = arith.truncf %481 : vector<8x32xf32> to vector<8x32xbf16>
    %cst_254 = arith.constant dense<0.000000e+00> : vector<8x128xf32>
    %483 = tpu.matmul %482, %4, %cst_254 {dimension_numbers = #tpu.dot_dimension_numbers<[1], [0], [0], [1], [0, 0, 1, 1], [], []>} : vector<8x32xbf16>, vector<32x128xbf16>, vector<8x128xf32> -> vector<8x128xf32>
    %484 = arith.addf %480, %483 : vector<8x128xf32>
    %485 = vector.extract_strided_slice %484 {offsets = [0, 0], sizes = [8, 32], strides = [1, 1]} : vector<8x128xf32> to vector<8x32xf32>
    %cst_255 = arith.constant 5.000000e-01 : f32
    %486 = vector.broadcast %cst_255 : f32 to vector<8x32xf32>
    %487 = arith.mulf %486, %485 : vector<8x32xf32>
    %488 = math.tanh %487 : vector<8x32xf32>
    %cst_256 = arith.constant 5.000000e-01 : f32
    %489 = vector.broadcast %cst_256 : f32 to vector<8x32xf32>
    %490 = arith.mulf %489, %488 : vector<8x32xf32>
    %cst_257 = arith.constant 5.000000e-01 : f32
    %491 = vector.broadcast %cst_257 : f32 to vector<8x32xf32>
    %492 = arith.addf %490, %491 : vector<8x32xf32>
    %493 = vector.extract_strided_slice %484 {offsets = [0, 32], sizes = [8, 32], strides = [1, 1]} : vector<8x128xf32> to vector<8x32xf32>
    %cst_258 = arith.constant 5.000000e-01 : f32
    %494 = vector.broadcast %cst_258 : f32 to vector<8x32xf32>
    %495 = arith.mulf %494, %493 : vector<8x32xf32>
    %496 = math.tanh %495 : vector<8x32xf32>
    %cst_259 = arith.constant 5.000000e-01 : f32
    %497 = vector.broadcast %cst_259 : f32 to vector<8x32xf32>
    %498 = arith.mulf %497, %496 : vector<8x32xf32>
    %cst_260 = arith.constant 5.000000e-01 : f32
    %499 = vector.broadcast %cst_260 : f32 to vector<8x32xf32>
    %500 = arith.addf %498, %499 : vector<8x32xf32>
    %501 = vector.extract_strided_slice %484 {offsets = [0, 64], sizes = [8, 32], strides = [1, 1]} : vector<8x128xf32> to vector<8x32xf32>
    %502 = math.tanh %501 : vector<8x32xf32>
    %503 = vector.extract_strided_slice %484 {offsets = [0, 96], sizes = [8, 32], strides = [1, 1]} : vector<8x128xf32> to vector<8x32xf32>
    %cst_261 = arith.constant 5.000000e-01 : f32
    %504 = vector.broadcast %cst_261 : f32 to vector<8x32xf32>
    %505 = arith.mulf %504, %503 : vector<8x32xf32>
    %506 = math.tanh %505 : vector<8x32xf32>
    %cst_262 = arith.constant 5.000000e-01 : f32
    %507 = vector.broadcast %cst_262 : f32 to vector<8x32xf32>
    %508 = arith.mulf %507, %506 : vector<8x32xf32>
    %cst_263 = arith.constant 5.000000e-01 : f32
    %509 = vector.broadcast %cst_263 : f32 to vector<8x32xf32>
    %510 = arith.addf %508, %509 : vector<8x32xf32>
    %c0_264 = arith.constant 0 : index
    %c0_265 = arith.constant 0 : index
    %511 = vector.load %arg10[%c0_264, %c0_265] : memref<8x32xf32, #tpu.memory_space<vmem>>, vector<8x32xf32>
    %512 = arith.mulf %500, %511 : vector<8x32xf32>
    %513 = arith.mulf %492, %502 : vector<8x32xf32>
    %514 = arith.addf %512, %513 : vector<8x32xf32>
    %515 = math.tanh %514 : vector<8x32xf32>
    %516 = arith.mulf %510, %515 : vector<8x32xf32>
    %c0_266 = arith.constant 0 : index
    %c0_267 = arith.constant 0 : index
    %517 = vector.load %arg10[%c0_266, %c0_267] : memref<8x32xf32, #tpu.memory_space<vmem>>, vector<8x32xf32>
    tpu.vector_store %arg10[%c0_266, %c0_267], %514 {strides = array<i32>} : memref<8x32xf32, #tpu.memory_space<vmem>>, vector<8x32xf32>,
    %c0_268 = arith.constant 0 : index
    %c0_269 = arith.constant 0 : index
    %518 = vector.load %arg9[%c0_268, %c0_269] : memref<8x32xf32, #tpu.memory_space<vmem>>, vector<8x32xf32>
    tpu.vector_store %arg9[%c0_268, %c0_269], %516 {strides = array<i32>} : memref<8x32xf32, #tpu.memory_space<vmem>>, vector<8x32xf32>,
    %519 = arith.truncf %516 : vector<8x32xf32> to vector<8x32xbf16>
    %c16_270 = arith.constant 16 : index
    %c0_271 = arith.constant 0 : index
    %520 = vector.load %arg6[%c16_270, %c0_271] : memref<64x32xbf16, #tpu.memory_space<vmem>>, vector<8x32xbf16>
    tpu.vector_store %arg6[%c16_270, %c0_271], %519 {strides = array<i32>} : memref<64x32xbf16, #tpu.memory_space<vmem>>, vector<8x32xbf16>,
    %c0_272 = arith.constant 0 : index
    %c48_273 = arith.constant 48 : index
    %c0_274 = arith.constant 0 : index
    %521 = vector.load %arg1[%c0_272, %c48_273, %c0_274] : memref<1x64x128xbf16, #tpu.memory_space<vmem>>, vector<1x8x128xbf16>
    %522 = vector.shape_cast %521 : vector<1x8x128xbf16> to vector<8x128xbf16>
    %523 = arith.extf %522 : vector<8x128xbf16> to vector<8x128xf32>
    %c0_275 = arith.constant 0 : index
    %c0_276 = arith.constant 0 : index
    %524 = vector.load %arg7[%c0_275, %c0_276] : memref<8x32xf32, #tpu.memory_space<vmem>>, vector<8x32xf32>
    %525 = arith.truncf %524 : vector<8x32xf32> to vector<8x32xbf16>
    %cst_277 = arith.constant dense<0.000000e+00> : vector<8x128xf32>
    %526 = tpu.matmul %525, %3, %cst_277 {dimension_numbers = #tpu.dot_dimension_numbers<[1], [0], [0], [1], [0, 0, 1, 1], [], []>} : vector<8x32xbf16>, vector<32x128xbf16>, vector<8x128xf32> -> vector<8x128xf32>
    %527 = arith.addf %523, %526 : vector<8x128xf32>
    %528 = vector.extract_strided_slice %527 {offsets = [0, 0], sizes = [8, 32], strides = [1, 1]} : vector<8x128xf32> to vector<8x32xf32>
    %cst_278 = arith.constant 5.000000e-01 : f32
    %529 = vector.broadcast %cst_278 : f32 to vector<8x32xf32>
    %530 = arith.mulf %529, %528 : vector<8x32xf32>
    %531 = math.tanh %530 : vector<8x32xf32>
    %cst_279 = arith.constant 5.000000e-01 : f32
    %532 = vector.broadcast %cst_279 : f32 to vector<8x32xf32>
    %533 = arith.mulf %532, %531 : vector<8x32xf32>
    %cst_280 = arith.constant 5.000000e-01 : f32
    %534 = vector.broadcast %cst_280 : f32 to vector<8x32xf32>
    %535 = arith.addf %533, %534 : vector<8x32xf32>
    %536 = vector.extract_strided_slice %527 {offsets = [0, 32], sizes = [8, 32], strides = [1, 1]} : vector<8x128xf32> to vector<8x32xf32>
    %cst_281 = arith.constant 5.000000e-01 : f32
    %537 = vector.broadcast %cst_281 : f32 to vector<8x32xf32>
    %538 = arith.mulf %537, %536 : vector<8x32xf32>
    %539 = math.tanh %538 : vector<8x32xf32>
    %cst_282 = arith.constant 5.000000e-01 : f32
    %540 = vector.broadcast %cst_282 : f32 to vector<8x32xf32>
    %541 = arith.mulf %540, %539 : vector<8x32xf32>
    %cst_283 = arith.constant 5.000000e-01 : f32
    %542 = vector.broadcast %cst_283 : f32 to vector<8x32xf32>
    %543 = arith.addf %541, %542 : vector<8x32xf32>
    %544 = vector.extract_strided_slice %527 {offsets = [0, 64], sizes = [8, 32], strides = [1, 1]} : vector<8x128xf32> to vector<8x32xf32>
    %545 = math.tanh %544 : vector<8x32xf32>
    %546 = vector.extract_strided_slice %527 {offsets = [0, 96], sizes = [8, 32], strides = [1, 1]} : vector<8x128xf32> to vector<8x32xf32>
    %cst_284 = arith.constant 5.000000e-01 : f32
    %547 = vector.broadcast %cst_284 : f32 to vector<8x32xf32>
    %548 = arith.mulf %547, %546 : vector<8x32xf32>
    %549 = math.tanh %548 : vector<8x32xf32>
    %cst_285 = arith.constant 5.000000e-01 : f32
    %550 = vector.broadcast %cst_285 : f32 to vector<8x32xf32>
    %551 = arith.mulf %550, %549 : vector<8x32xf32>
    %cst_286 = arith.constant 5.000000e-01 : f32
    %552 = vector.broadcast %cst_286 : f32 to vector<8x32xf32>
    %553 = arith.addf %551, %552 : vector<8x32xf32>
    %c0_287 = arith.constant 0 : index
    %c0_288 = arith.constant 0 : index
    %554 = vector.load %arg8[%c0_287, %c0_288] : memref<8x32xf32, #tpu.memory_space<vmem>>, vector<8x32xf32>
    %555 = arith.mulf %543, %554 : vector<8x32xf32>
    %556 = arith.mulf %535, %545 : vector<8x32xf32>
    %557 = arith.addf %555, %556 : vector<8x32xf32>
    %558 = math.tanh %557 : vector<8x32xf32>
    %559 = arith.mulf %553, %558 : vector<8x32xf32>
    %c0_289 = arith.constant 0 : index
    %c0_290 = arith.constant 0 : index
    %560 = vector.load %arg8[%c0_289, %c0_290] : memref<8x32xf32, #tpu.memory_space<vmem>>, vector<8x32xf32>
    tpu.vector_store %arg8[%c0_289, %c0_290], %557 {strides = array<i32>} : memref<8x32xf32, #tpu.memory_space<vmem>>, vector<8x32xf32>,
    %c0_291 = arith.constant 0 : index
    %c0_292 = arith.constant 0 : index
    %561 = vector.load %arg7[%c0_291, %c0_292] : memref<8x32xf32, #tpu.memory_space<vmem>>, vector<8x32xf32>
    tpu.vector_store %arg7[%c0_291, %c0_292], %559 {strides = array<i32>} : memref<8x32xf32, #tpu.memory_space<vmem>>, vector<8x32xf32>,
    %562 = arith.truncf %559 : vector<8x32xf32> to vector<8x32xbf16>
    %c48_293 = arith.constant 48 : index
    %c0_294 = arith.constant 0 : index
    %563 = vector.load %arg5[%c48_293, %c0_294] : memref<64x32xbf16, #tpu.memory_space<vmem>>, vector<8x32xbf16>
    tpu.vector_store %arg5[%c48_293, %c0_294], %562 {strides = array<i32>} : memref<64x32xbf16, #tpu.memory_space<vmem>>, vector<8x32xbf16>,
    %c0_295 = arith.constant 0 : index
    %c8_296 = arith.constant 8 : index
    %c0_297 = arith.constant 0 : index
    %564 = vector.load %arg2[%c0_295, %c8_296, %c0_297] : memref<1x64x128xbf16, #tpu.memory_space<vmem>>, vector<1x8x128xbf16>
    %565 = vector.shape_cast %564 : vector<1x8x128xbf16> to vector<8x128xbf16>
    %566 = arith.extf %565 : vector<8x128xbf16> to vector<8x128xf32>
    %c0_298 = arith.constant 0 : index
    %c0_299 = arith.constant 0 : index
    %567 = vector.load %arg9[%c0_298, %c0_299] : memref<8x32xf32, #tpu.memory_space<vmem>>, vector<8x32xf32>
    %568 = arith.truncf %567 : vector<8x32xf32> to vector<8x32xbf16>
    %cst_300 = arith.constant dense<0.000000e+00> : vector<8x128xf32>
    %569 = tpu.matmul %568, %4, %cst_300 {dimension_numbers = #tpu.dot_dimension_numbers<[1], [0], [0], [1], [0, 0, 1, 1], [], []>} : vector<8x32xbf16>, vector<32x128xbf16>, vector<8x128xf32> -> vector<8x128xf32>
    %570 = arith.addf %566, %569 : vector<8x128xf32>
    %571 = vector.extract_strided_slice %570 {offsets = [0, 0], sizes = [8, 32], strides = [1, 1]} : vector<8x128xf32> to vector<8x32xf32>
    %cst_301 = arith.constant 5.000000e-01 : f32
    %572 = vector.broadcast %cst_301 : f32 to vector<8x32xf32>
    %573 = arith.mulf %572, %571 : vector<8x32xf32>
    %574 = math.tanh %573 : vector<8x32xf32>
    %cst_302 = arith.constant 5.000000e-01 : f32
    %575 = vector.broadcast %cst_302 : f32 to vector<8x32xf32>
    %576 = arith.mulf %575, %574 : vector<8x32xf32>
    %cst_303 = arith.constant 5.000000e-01 : f32
    %577 = vector.broadcast %cst_303 : f32 to vector<8x32xf32>
    %578 = arith.addf %576, %577 : vector<8x32xf32>
    %579 = vector.extract_strided_slice %570 {offsets = [0, 32], sizes = [8, 32], strides = [1, 1]} : vector<8x128xf32> to vector<8x32xf32>
    %cst_304 = arith.constant 5.000000e-01 : f32
    %580 = vector.broadcast %cst_304 : f32 to vector<8x32xf32>
    %581 = arith.mulf %580, %579 : vector<8x32xf32>
    %582 = math.tanh %581 : vector<8x32xf32>
    %cst_305 = arith.constant 5.000000e-01 : f32
    %583 = vector.broadcast %cst_305 : f32 to vector<8x32xf32>
    %584 = arith.mulf %583, %582 : vector<8x32xf32>
    %cst_306 = arith.constant 5.000000e-01 : f32
    %585 = vector.broadcast %cst_306 : f32 to vector<8x32xf32>
    %586 = arith.addf %584, %585 : vector<8x32xf32>
    %587 = vector.extract_strided_slice %570 {offsets = [0, 64], sizes = [8, 32], strides = [1, 1]} : vector<8x128xf32> to vector<8x32xf32>
    %588 = math.tanh %587 : vector<8x32xf32>
    %589 = vector.extract_strided_slice %570 {offsets = [0, 96], sizes = [8, 32], strides = [1, 1]} : vector<8x128xf32> to vector<8x32xf32>
    %cst_307 = arith.constant 5.000000e-01 : f32
    %590 = vector.broadcast %cst_307 : f32 to vector<8x32xf32>
    %591 = arith.mulf %590, %589 : vector<8x32xf32>
    %592 = math.tanh %591 : vector<8x32xf32>
    %cst_308 = arith.constant 5.000000e-01 : f32
    %593 = vector.broadcast %cst_308 : f32 to vector<8x32xf32>
    %594 = arith.mulf %593, %592 : vector<8x32xf32>
    %cst_309 = arith.constant 5.000000e-01 : f32
    %595 = vector.broadcast %cst_309 : f32 to vector<8x32xf32>
    %596 = arith.addf %594, %595 : vector<8x32xf32>
    %c0_310 = arith.constant 0 : index
    %c0_311 = arith.constant 0 : index
    %597 = vector.load %arg10[%c0_310, %c0_311] : memref<8x32xf32, #tpu.memory_space<vmem>>, vector<8x32xf32>
    %598 = arith.mulf %586, %597 : vector<8x32xf32>
    %599 = arith.mulf %578, %588 : vector<8x32xf32>
    %600 = arith.addf %598, %599 : vector<8x32xf32>
    %601 = math.tanh %600 : vector<8x32xf32>
    %602 = arith.mulf %596, %601 : vector<8x32xf32>
    %c0_312 = arith.constant 0 : index
    %c0_313 = arith.constant 0 : index
    %603 = vector.load %arg10[%c0_312, %c0_313] : memref<8x32xf32, #tpu.memory_space<vmem>>, vector<8x32xf32>
    tpu.vector_store %arg10[%c0_312, %c0_313], %600 {strides = array<i32>} : memref<8x32xf32, #tpu.memory_space<vmem>>, vector<8x32xf32>,
    %c0_314 = arith.constant 0 : index
    %c0_315 = arith.constant 0 : index
    %604 = vector.load %arg9[%c0_314, %c0_315] : memref<8x32xf32, #tpu.memory_space<vmem>>, vector<8x32xf32>
    tpu.vector_store %arg9[%c0_314, %c0_315], %602 {strides = array<i32>} : memref<8x32xf32, #tpu.memory_space<vmem>>, vector<8x32xf32>,
    %605 = arith.truncf %602 : vector<8x32xf32> to vector<8x32xbf16>
    %c8_316 = arith.constant 8 : index
    %c0_317 = arith.constant 0 : index
    %606 = vector.load %arg6[%c8_316, %c0_317] : memref<64x32xbf16, #tpu.memory_space<vmem>>, vector<8x32xbf16>
    tpu.vector_store %arg6[%c8_316, %c0_317], %605 {strides = array<i32>} : memref<64x32xbf16, #tpu.memory_space<vmem>>, vector<8x32xbf16>,
    %c0_318 = arith.constant 0 : index
    %c56_319 = arith.constant 56 : index
    %c0_320 = arith.constant 0 : index
    %607 = vector.load %arg1[%c0_318, %c56_319, %c0_320] : memref<1x64x128xbf16, #tpu.memory_space<vmem>>, vector<1x8x128xbf16>
    %608 = vector.shape_cast %607 : vector<1x8x128xbf16> to vector<8x128xbf16>
    %609 = arith.extf %608 : vector<8x128xbf16> to vector<8x128xf32>
    %c0_321 = arith.constant 0 : index
    %c0_322 = arith.constant 0 : index
    %610 = vector.load %arg7[%c0_321, %c0_322] : memref<8x32xf32, #tpu.memory_space<vmem>>, vector<8x32xf32>
    %611 = arith.truncf %610 : vector<8x32xf32> to vector<8x32xbf16>
    %cst_323 = arith.constant dense<0.000000e+00> : vector<8x128xf32>
    %612 = tpu.matmul %611, %3, %cst_323 {dimension_numbers = #tpu.dot_dimension_numbers<[1], [0], [0], [1], [0, 0, 1, 1], [], []>} : vector<8x32xbf16>, vector<32x128xbf16>, vector<8x128xf32> -> vector<8x128xf32>
    %613 = arith.addf %609, %612 : vector<8x128xf32>
    %614 = vector.extract_strided_slice %613 {offsets = [0, 0], sizes = [8, 32], strides = [1, 1]} : vector<8x128xf32> to vector<8x32xf32>
    %cst_324 = arith.constant 5.000000e-01 : f32
    %615 = vector.broadcast %cst_324 : f32 to vector<8x32xf32>
    %616 = arith.mulf %615, %614 : vector<8x32xf32>
    %617 = math.tanh %616 : vector<8x32xf32>
    %cst_325 = arith.constant 5.000000e-01 : f32
    %618 = vector.broadcast %cst_325 : f32 to vector<8x32xf32>
    %619 = arith.mulf %618, %617 : vector<8x32xf32>
    %cst_326 = arith.constant 5.000000e-01 : f32
    %620 = vector.broadcast %cst_326 : f32 to vector<8x32xf32>
    %621 = arith.addf %619, %620 : vector<8x32xf32>
    %622 = vector.extract_strided_slice %613 {offsets = [0, 32], sizes = [8, 32], strides = [1, 1]} : vector<8x128xf32> to vector<8x32xf32>
    %cst_327 = arith.constant 5.000000e-01 : f32
    %623 = vector.broadcast %cst_327 : f32 to vector<8x32xf32>
    %624 = arith.mulf %623, %622 : vector<8x32xf32>
    %625 = math.tanh %624 : vector<8x32xf32>
    %cst_328 = arith.constant 5.000000e-01 : f32
    %626 = vector.broadcast %cst_328 : f32 to vector<8x32xf32>
    %627 = arith.mulf %626, %625 : vector<8x32xf32>
    %cst_329 = arith.constant 5.000000e-01 : f32
    %628 = vector.broadcast %cst_329 : f32 to vector<8x32xf32>
    %629 = arith.addf %627, %628 : vector<8x32xf32>
    %630 = vector.extract_strided_slice %613 {offsets = [0, 64], sizes = [8, 32], strides = [1, 1]} : vector<8x128xf32> to vector<8x32xf32>
    %631 = math.tanh %630 : vector<8x32xf32>
    %632 = vector.extract_strided_slice %613 {offsets = [0, 96], sizes = [8, 32], strides = [1, 1]} : vector<8x128xf32> to vector<8x32xf32>
    %cst_330 = arith.constant 5.000000e-01 : f32
    %633 = vector.broadcast %cst_330 : f32 to vector<8x32xf32>
    %634 = arith.mulf %633, %632 : vector<8x32xf32>
    %635 = math.tanh %634 : vector<8x32xf32>
    %cst_331 = arith.constant 5.000000e-01 : f32
    %636 = vector.broadcast %cst_331 : f32 to vector<8x32xf32>
    %637 = arith.mulf %636, %635 : vector<8x32xf32>
    %cst_332 = arith.constant 5.000000e-01 : f32
    %638 = vector.broadcast %cst_332 : f32 to vector<8x32xf32>
    %639 = arith.addf %637, %638 : vector<8x32xf32>
    %c0_333 = arith.constant 0 : index
    %c0_334 = arith.constant 0 : index
    %640 = vector.load %arg8[%c0_333, %c0_334] : memref<8x32xf32, #tpu.memory_space<vmem>>, vector<8x32xf32>
    %641 = arith.mulf %629, %640 : vector<8x32xf32>
    %642 = arith.mulf %621, %631 : vector<8x32xf32>
    %643 = arith.addf %641, %642 : vector<8x32xf32>
    %644 = math.tanh %643 : vector<8x32xf32>
    %645 = arith.mulf %639, %644 : vector<8x32xf32>
    %c0_335 = arith.constant 0 : index
    %c0_336 = arith.constant 0 : index
    %646 = vector.load %arg8[%c0_335, %c0_336] : memref<8x32xf32, #tpu.memory_space<vmem>>, vector<8x32xf32>
    tpu.vector_store %arg8[%c0_335, %c0_336], %643 {strides = array<i32>} : memref<8x32xf32, #tpu.memory_space<vmem>>, vector<8x32xf32>,
    %c0_337 = arith.constant 0 : index
    %c0_338 = arith.constant 0 : index
    %647 = vector.load %arg7[%c0_337, %c0_338] : memref<8x32xf32, #tpu.memory_space<vmem>>, vector<8x32xf32>
    tpu.vector_store %arg7[%c0_337, %c0_338], %645 {strides = array<i32>} : memref<8x32xf32, #tpu.memory_space<vmem>>, vector<8x32xf32>,
    %648 = arith.truncf %645 : vector<8x32xf32> to vector<8x32xbf16>
    %c56_339 = arith.constant 56 : index
    %c0_340 = arith.constant 0 : index
    %649 = vector.load %arg5[%c56_339, %c0_340] : memref<64x32xbf16, #tpu.memory_space<vmem>>, vector<8x32xbf16>
    tpu.vector_store %arg5[%c56_339, %c0_340], %648 {strides = array<i32>} : memref<64x32xbf16, #tpu.memory_space<vmem>>, vector<8x32xbf16>,
    %c0_341 = arith.constant 0 : index
    %c0_342 = arith.constant 0 : index
    %c0_343 = arith.constant 0 : index
    %650 = vector.load %arg2[%c0_341, %c0_342, %c0_343] : memref<1x64x128xbf16, #tpu.memory_space<vmem>>, vector<1x8x128xbf16>
    %651 = vector.shape_cast %650 : vector<1x8x128xbf16> to vector<8x128xbf16>
    %652 = arith.extf %651 : vector<8x128xbf16> to vector<8x128xf32>
    %c0_344 = arith.constant 0 : index
    %c0_345 = arith.constant 0 : index
    %653 = vector.load %arg9[%c0_344, %c0_345] : memref<8x32xf32, #tpu.memory_space<vmem>>, vector<8x32xf32>
    %654 = arith.truncf %653 : vector<8x32xf32> to vector<8x32xbf16>
    %cst_346 = arith.constant dense<0.000000e+00> : vector<8x128xf32>
    %655 = tpu.matmul %654, %4, %cst_346 {dimension_numbers = #tpu.dot_dimension_numbers<[1], [0], [0], [1], [0, 0, 1, 1], [], []>} : vector<8x32xbf16>, vector<32x128xbf16>, vector<8x128xf32> -> vector<8x128xf32>
    %656 = arith.addf %652, %655 : vector<8x128xf32>
    %657 = vector.extract_strided_slice %656 {offsets = [0, 0], sizes = [8, 32], strides = [1, 1]} : vector<8x128xf32> to vector<8x32xf32>
    %cst_347 = arith.constant 5.000000e-01 : f32
    %658 = vector.broadcast %cst_347 : f32 to vector<8x32xf32>
    %659 = arith.mulf %658, %657 : vector<8x32xf32>
    %660 = math.tanh %659 : vector<8x32xf32>
    %cst_348 = arith.constant 5.000000e-01 : f32
    %661 = vector.broadcast %cst_348 : f32 to vector<8x32xf32>
    %662 = arith.mulf %661, %660 : vector<8x32xf32>
    %cst_349 = arith.constant 5.000000e-01 : f32
    %663 = vector.broadcast %cst_349 : f32 to vector<8x32xf32>
    %664 = arith.addf %662, %663 : vector<8x32xf32>
    %665 = vector.extract_strided_slice %656 {offsets = [0, 32], sizes = [8, 32], strides = [1, 1]} : vector<8x128xf32> to vector<8x32xf32>
    %cst_350 = arith.constant 5.000000e-01 : f32
    %666 = vector.broadcast %cst_350 : f32 to vector<8x32xf32>
    %667 = arith.mulf %666, %665 : vector<8x32xf32>
    %668 = math.tanh %667 : vector<8x32xf32>
    %cst_351 = arith.constant 5.000000e-01 : f32
    %669 = vector.broadcast %cst_351 : f32 to vector<8x32xf32>
    %670 = arith.mulf %669, %668 : vector<8x32xf32>
    %cst_352 = arith.constant 5.000000e-01 : f32
    %671 = vector.broadcast %cst_352 : f32 to vector<8x32xf32>
    %672 = arith.addf %670, %671 : vector<8x32xf32>
    %673 = vector.extract_strided_slice %656 {offsets = [0, 64], sizes = [8, 32], strides = [1, 1]} : vector<8x128xf32> to vector<8x32xf32>
    %674 = math.tanh %673 : vector<8x32xf32>
    %675 = vector.extract_strided_slice %656 {offsets = [0, 96], sizes = [8, 32], strides = [1, 1]} : vector<8x128xf32> to vector<8x32xf32>
    %cst_353 = arith.constant 5.000000e-01 : f32
    %676 = vector.broadcast %cst_353 : f32 to vector<8x32xf32>
    %677 = arith.mulf %676, %675 : vector<8x32xf32>
    %678 = math.tanh %677 : vector<8x32xf32>
    %cst_354 = arith.constant 5.000000e-01 : f32
    %679 = vector.broadcast %cst_354 : f32 to vector<8x32xf32>
    %680 = arith.mulf %679, %678 : vector<8x32xf32>
    %cst_355 = arith.constant 5.000000e-01 : f32
    %681 = vector.broadcast %cst_355 : f32 to vector<8x32xf32>
    %682 = arith.addf %680, %681 : vector<8x32xf32>
    %c0_356 = arith.constant 0 : index
    %c0_357 = arith.constant 0 : index
    %683 = vector.load %arg10[%c0_356, %c0_357] : memref<8x32xf32, #tpu.memory_space<vmem>>, vector<8x32xf32>
    %684 = arith.mulf %672, %683 : vector<8x32xf32>
    %685 = arith.mulf %664, %674 : vector<8x32xf32>
    %686 = arith.addf %684, %685 : vector<8x32xf32>
    %687 = math.tanh %686 : vector<8x32xf32>
    %688 = arith.mulf %682, %687 : vector<8x32xf32>
    %c0_358 = arith.constant 0 : index
    %c0_359 = arith.constant 0 : index
    %689 = vector.load %arg10[%c0_358, %c0_359] : memref<8x32xf32, #tpu.memory_space<vmem>>, vector<8x32xf32>
    tpu.vector_store %arg10[%c0_358, %c0_359], %686 {strides = array<i32>} : memref<8x32xf32, #tpu.memory_space<vmem>>, vector<8x32xf32>,
    %c0_360 = arith.constant 0 : index
    %c0_361 = arith.constant 0 : index
    %690 = vector.load %arg9[%c0_360, %c0_361] : memref<8x32xf32, #tpu.memory_space<vmem>>, vector<8x32xf32>
    tpu.vector_store %arg9[%c0_360, %c0_361], %688 {strides = array<i32>} : memref<8x32xf32, #tpu.memory_space<vmem>>, vector<8x32xf32>,
    %691 = arith.truncf %688 : vector<8x32xf32> to vector<8x32xbf16>
    %c0_362 = arith.constant 0 : index
    %c0_363 = arith.constant 0 : index
    %692 = vector.load %arg6[%c0_362, %c0_363] : memref<64x32xbf16, #tpu.memory_space<vmem>>, vector<8x32xbf16>
    tpu.vector_store %arg6[%c0_362, %c0_363], %691 {strides = array<i32>} : memref<64x32xbf16, #tpu.memory_space<vmem>>, vector<8x32xbf16>,
    return
  }
  func.func @transform_0(%arg0: i32) -> (i32, i32, i32) {
    %c0_i32 = arith.constant 0 : i32
    %c0_i32_0 = arith.constant 0 : i32
    %c0_i32_1 = arith.constant 0 : i32
    return %c0_i32, %arg0, %c0_i32_0 : i32, i32, i32
  }
  func.func @transform_1(%arg0: i32) -> (i32, i32, i32) {
    %c0_i32 = arith.constant 0 : i32
    %0 = arith.subi %c0_i32, %arg0 : i32
    %c1_i32 = arith.constant 1 : i32
    %c0_i32_0 = arith.constant 0 : i32
    %c0_i32_1 = arith.constant 0 : i32
    return %c1_i32, %0, %c0_i32_0 : i32, i32, i32
  }
  func.func @transform_2(%arg0: i32) -> (i32, i32) {
    %c0_i32 = arith.constant 0 : i32
    %c0_i32_0 = arith.constant 0 : i32
    %c0_i32_1 = arith.constant 0 : i32
    return %c0_i32, %c0_i32_0 : i32, i32
  }
  func.func @transform_3(%arg0: i32) -> (i32, i32) {
    %c0_i32 = arith.constant 0 : i32
    %c0_i32_0 = arith.constant 0 : i32
    %c0_i32_1 = arith.constant 0 : i32
    return %c0_i32, %c0_i32_0 : i32, i32
  }
  func.func @transform_4(%arg0: i32) -> (i32, i32) {
    %c0_i32 = arith.constant 0 : i32
    %c0_i32_0 = arith.constant 0 : i32
    return %arg0, %c0_i32 : i32, i32
  }
  func.func @transform_5(%arg0: i32) -> (i32, i32) {
    %c0_i32 = arith.constant 0 : i32
    %0 = arith.subi %c0_i32, %arg0 : i32
    %c0_i32_0 = arith.constant 0 : i32
    %c0_i32_1 = arith.constant 0 : i32
    return %0, %c0_i32_0 : i32, i32
  }
}

module attributes {stable_mosaic.version = 11 : i64} {
  func.func @_proj_kernel(%arg0: i32, %arg1: memref<64x128xbf16, #tpu.memory_space<vmem>>, %arg2: memref<128x256xbf16, #tpu.memory_space<vmem>>, %arg3: memref<1x256xf32, #tpu.memory_space<vmem>>, %arg4: memref<2x64x128xbf16, #tpu.memory_space<vmem>>) attributes {dimension_semantics = [#tpu.dimension_semantics<parallel>], iteration_bounds = array<i64: 1>, scalar_prefetch = 0 : i64, scratch_operands = 0 : i64, tpu.core_type = #tpu.core_type<tc>, window_params = [{transform_indices = @transform_0, window_bounds = array<i64: 64, 128>}, {pipeline_mode = #tpu.pipeline_mode<synchronous>, transform_indices = @transform_1, window_bounds = array<i64: 128, 256>}, {pipeline_mode = #tpu.pipeline_mode<synchronous>, transform_indices = @transform_2, window_bounds = array<i64: 1, 256>}, {transform_indices = @transform_3, window_bounds = array<i64: 2, 64, 128>}]} {
    %c0 = arith.constant 0 : index
    %c0_0 = arith.constant 0 : index
    %0 = vector.load %arg1[%c0, %c0_0] : memref<64x128xbf16, #tpu.memory_space<vmem>>, vector<64x128xbf16>
    %c0_1 = arith.constant 0 : index
    %c0_2 = arith.constant 0 : index
    %1 = vector.load %arg2[%c0_1, %c0_2] : memref<128x256xbf16, #tpu.memory_space<vmem>>, vector<128x256xbf16>
    %cst = arith.constant dense<0.000000e+00> : vector<64x256xf32>
    %2 = tpu.matmul %0, %1, %cst {dimension_numbers = #tpu.dot_dimension_numbers<[1], [0], [0], [1], [0, 0, 1, 1], [], []>} : vector<64x128xbf16>, vector<128x256xbf16>, vector<64x256xf32> -> vector<64x256xf32>
    %c0_3 = arith.constant 0 : index
    %c0_4 = arith.constant 0 : index
    %3 = vector.load %arg3[%c0_3, %c0_4] : memref<1x256xf32, #tpu.memory_space<vmem>>, vector<1x256xf32>
    %4 = vector.broadcast %3 : vector<1x256xf32> to vector<64x256xf32>
    %5 = arith.addf %2, %4 : vector<64x256xf32>
    %6 = vector.extract_strided_slice %5 {offsets = [0, 0], sizes = [64, 128], strides = [1, 1]} : vector<64x256xf32> to vector<64x128xf32>
    %7 = arith.truncf %6 : vector<64x128xf32> to vector<64x128xbf16>
    %c0_5 = arith.constant 0 : index
    %c0_6 = arith.constant 0 : index
    %c0_7 = arith.constant 0 : index
    %8 = vector.load %arg4[%c0_5, %c0_6, %c0_7] : memref<2x64x128xbf16, #tpu.memory_space<vmem>>, vector<1x64x128xbf16>
    %9 = vector.shape_cast %8 : vector<1x64x128xbf16> to vector<64x128xbf16>
    %10 = vector.shape_cast %7 : vector<64x128xbf16> to vector<1x64x128xbf16>
    tpu.vector_store %arg4[%c0_5, %c0_6, %c0_7], %10 {strides = array<i32>} : memref<2x64x128xbf16, #tpu.memory_space<vmem>>, vector<1x64x128xbf16>,
    %11 = vector.extract_strided_slice %5 {offsets = [0, 128], sizes = [64, 128], strides = [1, 1]} : vector<64x256xf32> to vector<64x128xf32>
    %12 = arith.truncf %11 : vector<64x128xf32> to vector<64x128xbf16>
    %c1 = arith.constant 1 : index
    %c0_8 = arith.constant 0 : index
    %c0_9 = arith.constant 0 : index
    %13 = vector.load %arg4[%c1, %c0_8, %c0_9] : memref<2x64x128xbf16, #tpu.memory_space<vmem>>, vector<1x64x128xbf16>
    %14 = vector.shape_cast %13 : vector<1x64x128xbf16> to vector<64x128xbf16>
    %15 = vector.shape_cast %12 : vector<64x128xbf16> to vector<1x64x128xbf16>
    tpu.vector_store %arg4[%c1, %c0_8, %c0_9], %15 {strides = array<i32>} : memref<2x64x128xbf16, #tpu.memory_space<vmem>>, vector<1x64x128xbf16>,
    return
  }
  func.func @transform_0(%arg0: i32) -> (i32, i32) {
    %c0_i32 = arith.constant 0 : i32
    %c0_i32_0 = arith.constant 0 : i32
    return %arg0, %c0_i32 : i32, i32
  }
  func.func @transform_1(%arg0: i32) -> (i32, i32) {
    %c0_i32 = arith.constant 0 : i32
    %c0_i32_0 = arith.constant 0 : i32
    %c0_i32_1 = arith.constant 0 : i32
    return %c0_i32, %c0_i32_0 : i32, i32
  }
  func.func @transform_2(%arg0: i32) -> (i32, i32) {
    %c0_i32 = arith.constant 0 : i32
    %c0_i32_0 = arith.constant 0 : i32
    %c0_i32_1 = arith.constant 0 : i32
    return %c0_i32, %c0_i32_0 : i32, i32
  }
  func.func @transform_3(%arg0: i32) -> (i32, i32, i32) {
    %c0_i32 = arith.constant 0 : i32
    %c0_i32_0 = arith.constant 0 : i32
    %c0_i32_1 = arith.constant 0 : i32
    return %c0_i32, %arg0, %c0_i32_0 : i32, i32, i32
  }
}

module attributes {stable_mosaic.version = 11 : i64} {
  func.func @_bilinear_out_kernel(%arg0: i32, %arg1: memref<64x32xbf16, #tpu.memory_space<vmem>>, %arg2: memref<64x32xbf16, #tpu.memory_space<vmem>>, %arg3: memref<32x128xbf16, #tpu.memory_space<vmem>>, %arg4: memref<32x128xbf16, #tpu.memory_space<vmem>>, %arg5: memref<1x128xf32, #tpu.memory_space<vmem>>, %arg6: memref<64x128xbf16, #tpu.memory_space<vmem>>) attributes {dimension_semantics = [#tpu.dimension_semantics<parallel>], iteration_bounds = array<i64: 1>, scalar_prefetch = 0 : i64, scratch_operands = 0 : i64, tpu.core_type = #tpu.core_type<tc>, window_params = [{transform_indices = @transform_0, window_bounds = array<i64: 64, 32>}, {transform_indices = @transform_1, window_bounds = array<i64: 64, 32>}, {pipeline_mode = #tpu.pipeline_mode<synchronous>, transform_indices = @transform_2, window_bounds = array<i64: 32, 128>}, {pipeline_mode = #tpu.pipeline_mode<synchronous>, transform_indices = @transform_3, window_bounds = array<i64: 32, 128>}, {pipeline_mode = #tpu.pipeline_mode<synchronous>, transform_indices = @transform_4, window_bounds = array<i64: 1, 128>}, {transform_indices = @transform_5, window_bounds = array<i64: 64, 128>}]} {
    %c0 = arith.constant 0 : index
    %c0_0 = arith.constant 0 : index
    %0 = vector.load %arg1[%c0, %c0_0] : memref<64x32xbf16, #tpu.memory_space<vmem>>, vector<64x32xbf16>
    %c0_1 = arith.constant 0 : index
    %c0_2 = arith.constant 0 : index
    %1 = vector.load %arg3[%c0_1, %c0_2] : memref<32x128xbf16, #tpu.memory_space<vmem>>, vector<32x128xbf16>
    %cst = arith.constant dense<0.000000e+00> : vector<64x128xf32>
    %2 = tpu.matmul %0, %1, %cst {dimension_numbers = #tpu.dot_dimension_numbers<[1], [0], [0], [1], [0, 0, 1, 1], [], []>} : vector<64x32xbf16>, vector<32x128xbf16>, vector<64x128xf32> -> vector<64x128xf32>
    %c0_3 = arith.constant 0 : index
    %c0_4 = arith.constant 0 : index
    %3 = vector.load %arg2[%c0_3, %c0_4] : memref<64x32xbf16, #tpu.memory_space<vmem>>, vector<64x32xbf16>
    %c0_5 = arith.constant 0 : index
    %c0_6 = arith.constant 0 : index
    %4 = vector.load %arg4[%c0_5, %c0_6] : memref<32x128xbf16, #tpu.memory_space<vmem>>, vector<32x128xbf16>
    %cst_7 = arith.constant dense<0.000000e+00> : vector<64x128xf32>
    %5 = tpu.matmul %3, %4, %cst_7 {dimension_numbers = #tpu.dot_dimension_numbers<[1], [0], [0], [1], [0, 0, 1, 1], [], []>} : vector<64x32xbf16>, vector<32x128xbf16>, vector<64x128xf32> -> vector<64x128xf32>
    %6 = arith.addf %2, %5 : vector<64x128xf32>
    %c0_8 = arith.constant 0 : index
    %c0_9 = arith.constant 0 : index
    %7 = vector.load %arg5[%c0_8, %c0_9] : memref<1x128xf32, #tpu.memory_space<vmem>>, vector<1x128xf32>
    %8 = vector.broadcast %7 : vector<1x128xf32> to vector<64x128xf32>
    %9 = arith.addf %6, %8 : vector<64x128xf32>
    %10 = arith.truncf %9 : vector<64x128xf32> to vector<64x128xbf16>
    %c0_10 = arith.constant 0 : index
    %c0_11 = arith.constant 0 : index
    %11 = vector.load %arg6[%c0_10, %c0_11] : memref<64x128xbf16, #tpu.memory_space<vmem>>, vector<64x128xbf16>
    tpu.vector_store %arg6[%c0_10, %c0_11], %10 {strides = array<i32>} : memref<64x128xbf16, #tpu.memory_space<vmem>>, vector<64x128xbf16>,
    return
  }
  func.func @transform_0(%arg0: i32) -> (i32, i32) {
    %c0_i32 = arith.constant 0 : i32
    %c0_i32_0 = arith.constant 0 : i32
    return %arg0, %c0_i32 : i32, i32
  }
  func.func @transform_1(%arg0: i32) -> (i32, i32) {
    %c0_i32 = arith.constant 0 : i32
    %c0_i32_0 = arith.constant 0 : i32
    return %arg0, %c0_i32 : i32, i32
  }
  func.func @transform_2(%arg0: i32) -> (i32, i32) {
    %c0_i32 = arith.constant 0 : i32
    %c0_i32_0 = arith.constant 0 : i32
    %c0_i32_1 = arith.constant 0 : i32
    return %c0_i32, %c0_i32_0 : i32, i32
  }
  func.func @transform_3(%arg0: i32) -> (i32, i32) {
    %c0_i32 = arith.constant 0 : i32
    %c0_i32_0 = arith.constant 0 : i32
    %c0_i32_1 = arith.constant 0 : i32
    return %c0_i32, %c0_i32_0 : i32, i32
  }
  func.func @transform_4(%arg0: i32) -> (i32, i32) {
    %c0_i32 = arith.constant 0 : i32
    %c0_i32_0 = arith.constant 0 : i32
    %c0_i32_1 = arith.constant 0 : i32
    return %c0_i32, %c0_i32_0 : i32, i32
  }
  func.func @transform_5(%arg0: i32) -> (i32, i32) {
    %c0_i32 = arith.constant 0 : i32
    %c0_i32_0 = arith.constant 0 : i32
    return %arg0, %c0_i32 : i32, i32
  }
}

module attributes {stable_mosaic.version = 11 : i64} {
  func.func @_bilinear_out_kernel(%arg0: i32, %arg1: memref<64x32xbf16, #tpu.memory_space<vmem>>, %arg2: memref<64x32xbf16, #tpu.memory_space<vmem>>, %arg3: memref<32x128xbf16, #tpu.memory_space<vmem>>, %arg4: memref<32x128xbf16, #tpu.memory_space<vmem>>, %arg5: memref<1x128xf32, #tpu.memory_space<vmem>>, %arg6: memref<64x128xf32, #tpu.memory_space<vmem>>) attributes {dimension_semantics = [#tpu.dimension_semantics<parallel>], iteration_bounds = array<i64: 1>, scalar_prefetch = 0 : i64, scratch_operands = 0 : i64, tpu.core_type = #tpu.core_type<tc>, window_params = [{transform_indices = @transform_0, window_bounds = array<i64: 64, 32>}, {transform_indices = @transform_1, window_bounds = array<i64: 64, 32>}, {pipeline_mode = #tpu.pipeline_mode<synchronous>, transform_indices = @transform_2, window_bounds = array<i64: 32, 128>}, {pipeline_mode = #tpu.pipeline_mode<synchronous>, transform_indices = @transform_3, window_bounds = array<i64: 32, 128>}, {pipeline_mode = #tpu.pipeline_mode<synchronous>, transform_indices = @transform_4, window_bounds = array<i64: 1, 128>}, {transform_indices = @transform_5, window_bounds = array<i64: 64, 128>}]} {
    %c0 = arith.constant 0 : index
    %c0_0 = arith.constant 0 : index
    %0 = vector.load %arg1[%c0, %c0_0] : memref<64x32xbf16, #tpu.memory_space<vmem>>, vector<64x32xbf16>
    %c0_1 = arith.constant 0 : index
    %c0_2 = arith.constant 0 : index
    %1 = vector.load %arg3[%c0_1, %c0_2] : memref<32x128xbf16, #tpu.memory_space<vmem>>, vector<32x128xbf16>
    %cst = arith.constant dense<0.000000e+00> : vector<64x128xf32>
    %2 = tpu.matmul %0, %1, %cst {dimension_numbers = #tpu.dot_dimension_numbers<[1], [0], [0], [1], [0, 0, 1, 1], [], []>} : vector<64x32xbf16>, vector<32x128xbf16>, vector<64x128xf32> -> vector<64x128xf32>
    %c0_3 = arith.constant 0 : index
    %c0_4 = arith.constant 0 : index
    %3 = vector.load %arg2[%c0_3, %c0_4] : memref<64x32xbf16, #tpu.memory_space<vmem>>, vector<64x32xbf16>
    %c0_5 = arith.constant 0 : index
    %c0_6 = arith.constant 0 : index
    %4 = vector.load %arg4[%c0_5, %c0_6] : memref<32x128xbf16, #tpu.memory_space<vmem>>, vector<32x128xbf16>
    %cst_7 = arith.constant dense<0.000000e+00> : vector<64x128xf32>
    %5 = tpu.matmul %3, %4, %cst_7 {dimension_numbers = #tpu.dot_dimension_numbers<[1], [0], [0], [1], [0, 0, 1, 1], [], []>} : vector<64x32xbf16>, vector<32x128xbf16>, vector<64x128xf32> -> vector<64x128xf32>
    %6 = arith.addf %2, %5 : vector<64x128xf32>
    %c0_8 = arith.constant 0 : index
    %c0_9 = arith.constant 0 : index
    %7 = vector.load %arg5[%c0_8, %c0_9] : memref<1x128xf32, #tpu.memory_space<vmem>>, vector<1x128xf32>
    %8 = vector.broadcast %7 : vector<1x128xf32> to vector<64x128xf32>
    %9 = arith.addf %6, %8 : vector<64x128xf32>
    %c0_10 = arith.constant 0 : index
    %c0_11 = arith.constant 0 : index
    %10 = vector.load %arg6[%c0_10, %c0_11] : memref<64x128xf32, #tpu.memory_space<vmem>>, vector<64x128xf32>
    tpu.vector_store %arg6[%c0_10, %c0_11], %9 {strides = array<i32>} : memref<64x128xf32, #tpu.memory_space<vmem>>, vector<64x128xf32>,
    return
  }
  func.func @transform_0(%arg0: i32) -> (i32, i32) {
    %c0_i32 = arith.constant 0 : i32
    %c0_i32_0 = arith.constant 0 : i32
    return %arg0, %c0_i32 : i32, i32
  }
  func.func @transform_1(%arg0: i32) -> (i32, i32) {
    %c0_i32 = arith.constant 0 : i32
    %c0_i32_0 = arith.constant 0 : i32
    return %arg0, %c0_i32 : i32, i32
  }
  func.func @transform_2(%arg0: i32) -> (i32, i32) {
    %c0_i32 = arith.constant 0 : i32
    %c0_i32_0 = arith.constant 0 : i32
    %c0_i32_1 = arith.constant 0 : i32
    return %c0_i32, %c0_i32_0 : i32, i32
  }
  func.func @transform_3(%arg0: i32) -> (i32, i32) {
    %c0_i32 = arith.constant 0 : i32
    %c0_i32_0 = arith.constant 0 : i32
    %c0_i32_1 = arith.constant 0 : i32
    return %c0_i32, %c0_i32_0 : i32, i32
  }
  func.func @transform_4(%arg0: i32) -> (i32, i32) {
    %c0_i32 = arith.constant 0 : i32
    %c0_i32_0 = arith.constant 0 : i32
    %c0_i32_1 = arith.constant 0 : i32
    return %c0_i32, %c0_i32_0 : i32, i32
  }
  func.func @transform_5(%arg0: i32) -> (i32, i32) {
    %c0_i32 = arith.constant 0 : i32
    %c0_i32_0 = arith.constant 0 : i32
    return %arg0, %c0_i32 : i32, i32
  }
}

</mosaic_0001>

<llo_original>
// kernel: decoder_forward.6
$region0: #{decoder_forward.6}
  #allocation0 [shape = 'u32[]', space=smem, size = 0x4, offset = 0x4, fixed_abs, tag = 'smem constant byte address 0x4 - core index']
  #allocation1 [shape = 'u32[144,128]{1,0:T(1,128)}', space=vmem, size = 0x12000, scoped, tag = 'internal scratch']
  %s0 = inlined_call_operand.vmem [shape: f32[64,32], index: 0, kind: input, shape index: {}]
  %s1 = inlined_call_operand.vmem [shape: bf16[32,256], index: 1, kind: input, shape index: {}]
  %s2 = inlined_call_operand.vmem [shape: f32[1,256], index: 2, kind: input, shape index: {}]
  %s3 = inlined_call_operand.vmem [shape: bf16[2,64,128], index: 3, kind: output, shape index: {}]
  %s4 = sld [smem:[#allocation0]]
  $region22: #{decoder_forward.6} parent=0
    _
  %s6 = ssub.s32 1, %s4
  %s7 = scalar_select 0, %s6, %s4
  // Predicated region
  $region2: #{decoder_forward.6} parent=0 // pred_check
    _
  $region3: #{decoder_forward.6} parent=0 // pred_check_branch
    %9 = sbr.rel (0) target = $region5
  $region4: #{decoder_forward.6} parent=0 // pred_region
    _
  $region5: #{decoder_forward.6} parent=0 // pred_fallthru
    _
  // Predicated region
  $region6: #{decoder_forward.6} parent=0 // pred_check
    _
  $region7: #{decoder_forward.6} parent=0 // pred_check_branch
    %11 = sbr.rel (0) target = $region9
  $region8: #{decoder_forward.6} parent=0 // pred_region
    _
  $region9: #{decoder_forward.6} parent=0 // pred_fallthru
    _
  // Predicated region
  $region10: #{decoder_forward.6} parent=0 // pred_check
    _
  $region11: #{decoder_forward.6} parent=0 // pred_check_branch
    %13 = sbr.rel (0) target = $region13
  $region12: #{decoder_forward.6} parent=0 // pred_region
    _
  $region13: #{decoder_forward.6} parent=0 // pred_fallthru
    _
  %v15 = vld [vmem:[%s0] sm:$0xff]
  %v16 = vld [vmem:[%s0 + $0x8] sm:$0xff]
  %v17 = vld [vmem:[%s0 + $0x10] sm:$0xff]
  %v18 = vld [vmem:[%s0 + $0x18] sm:$0xff]
  %v19 = vld [vmem:[%s0 + $0x20] sm:$0xff]
  %v20 = vld [vmem:[%s0 + $0x28] sm:$0xff]
  %v21 = vld [vmem:[%s0 + $0x30] sm:$0xff]
  %v22 = vld [vmem:[%s0 + $0x38] sm:$0xff]
  %v23 = vpack.c.bf16 %v16, %v15
  %v24 = vpack.c.bf16 %v18, %v17
  %v25 = vpack.c.bf16 %v20, %v19
  %v26 = vpack.c.bf16 %v22, %v21
  %v27 = vld [vmem:[%s1] sm:$0xff]
  %v28 = vld [vmem:[%s1 + $0x8] sm:$0xff]
  %v29 = vld [vmem:[%s1 + $0x10] sm:$0xff]
  %v30 = vld [vmem:[%s1 + $0x18] sm:$0xff]
  %v31 = vld [vmem:[%s2] sm:$0x3]
  %v33 = vlaneseq
  %v34 = vshrl.u32 %v33, 7
  %v35 = vsub.s32 0, %v34
  %v36 = vrot.slane %v31, %v35
  %v37 = vlaneseq
  %v38 = vshrl.u32 %v37, 7
  %v39 = vsub.s32 1, %v38
  %v40 = vrot.slane %v31, %v39
  %v47 = vunpack.c.l.b16 %v27
  %v48 = vunpack.c.h.b16 %v27
  %v49 = vunpack.c.l.b16 %v28
  %v50 = vunpack.c.h.b16 %v28
  %v51 = vunpack.c.l.b16 %v29
  %v52 = vunpack.c.h.b16 %v29
  %v53 = vunpack.c.l.b16 %v30
  %v54 = vunpack.c.h.b16 %v30
  %v55 = vpack.c.b16 %v49, %v47
  %v56 = vpack.c.b16 %v50, %v48
  %v57 = vpack.c.b16 %v53, %v51
  %v58 = vpack.c.b16 %v54, %v52
  %vm63 = vcmask 261120
  %v65 = vsel %vm63, %v23, 0
  %v68 = vsel %vm63, %v24, 0
  %v71 = vsel %vm63, %v25, 0
  %v74 = vsel %vm63, %v26, 0
  %76 = vmatprep.subr.bf16.mxu0 0
  %77 = vmatpush1.bf16.msra.mxu0 0
  %78 = vmatprep.subr.bf16.mxu0 0
  %79 = vmatpush1.bf16.msra.mxu0 0
  %80 = vmatprep.subr.bf16.mxu0 0
  %81 = vmatpush1.bf16.msra.mxu0 0
  %82 = vmatprep.subr.bf16.mxu0 0
  %83 = vmatpush1.bf16.msra.mxu0 0
  %84 = vmatprep.subr.bf16.mxu0 0
  %85 = vmatpush1.bf16.msra.mxu0 0
  %86 = vmatprep.subr.bf16.mxu0 0
  %87 = vmatpush1.bf16.msra.mxu0 0
  %88 = vmatprep.subr.bf16.mxu0 %v58
  %89 = vmatpush1.bf16.msra.mxu0 %v57
  %90 = vmatprep.subr.bf16.mxu0 %v56
  %91 = vmatpush1.bf16.msra.mxu0 %v55
  %92 = vmatprep.subr.bf16.mxu0 0
  %93 = vmatpush2.bf16.msra.mxu0 0
  %94 = vmatprep.subr.bf16.mxu0 0
  %95 = vmatpush2.bf16.msra.mxu0 0
  %96 = vmatprep.subr.bf16.mxu0 0
  %97 = vmatpush2.bf16.msra.mxu0 0
  %98 = vmatprep.subr.bf16.mxu0 0
  %99 = vmatpush2.bf16.msra.mxu0 0
  %100 = vmatprep.subr.bf16.mxu0 0
  %101 = vmatpush2.bf16.msra.mxu0 0
  %102 = vmatprep.subr.bf16.mxu0 0
  %103 = vmatpush2.bf16.msra.mxu0 0
  %104 = vmatprep.subr.bf16.mxu0 0
  %105 = vmatpush2.bf16.msra.mxu0 0
  %106 = vmatprep.subr.bf16.mxu0 0
  %107 = vmatpush2.bf16.msra.mxu0 0
  %108 = vmatprep.mubr.bf16.mxu0 0
  %109 = vmatmul.mubr.bf16.gmra.mxu0 %v65
  %v110 = vpop.f32.mrf.mxu0
  %v111 = vadd.f32 %v36, %v110
  %v112 = vpop.f32.mrf.mxu0
  %v113 = vadd.f32 %v40, %v112
  %v114 = vpop.f32.mrf.mxu0
  %v115 = vadd.f32 %v36, %v114
  %v116 = vpop.f32.mrf.mxu0
  %v117 = vadd.f32 %v40, %v116
  %118 = vmatprep.mubr.bf16.mxu0 0
  %119 = vmatmul.mubr.bf16.gmra.mxu0 %v68
  %v120 = vpop.f32.mrf.mxu0
  %v121 = vadd.f32 %v36, %v120
  %v122 = vpop.f32.mrf.mxu0
  %v123 = vadd.f32 %v40, %v122
  %v124 = vpop.f32.mrf.mxu0
  %v125 = vadd.f32 %v36, %v124
  %v126 = vpop.f32.mrf.mxu0
  %v127 = vadd.f32 %v40, %v126
  %128 = vmatprep.mubr.bf16.mxu0 0
  %129 = vmatmul.mubr.bf16.gmra.mxu0 %v71
  %v130 = vpop.f32.mrf.mxu0
  %v131 = vadd.f32 %v36, %v130
  %v132 = vpop.f32.mrf.mxu0
  %v133 = vadd.f32 %v40, %v132
  %v134 = vpop.f32.mrf.mxu0
  %v135 = vadd.f32 %v36, %v134
  %v136 = vpop.f32.mrf.mxu0
  %v137 = vadd.f32 %v40, %v136
  %138 = vmatprep.mubr.bf16.mxu0 0
  %139 = vmatmul.mubr.bf16.gmra.mxu0 %v74
  %v140 = vpop.f32.mrf.mxu0
  %v141 = vadd.f32 %v36, %v140
  %v142 = vpop.f32.mrf.mxu0
  %v143 = vadd.f32 %v40, %v142
  %v144 = vpop.f32.mrf.mxu0
  %v145 = vadd.f32 %v36, %v144
  %v146 = vpop.f32.mrf.mxu0
  %v147 = vadd.f32 %v40, %v146
  %148 = vdwg.mxu0
  %v149 = vpack.c.bf16 %v115, %v111
  %v150 = vpack.c.bf16 %v125, %v121
  %v151 = vpack.c.bf16 %v135, %v131
  %v152 = vpack.c.bf16 %v145, %v141
  %v157 = vunpack.c.l.b16 %v149
  %v158 = vunpack.c.h.b16 %v149
  %v159 = vunpack.c.l.b16 %v150
  %v160 = vunpack.c.h.b16 %v150
  %v161 = vunpack.c.l.b16 %v151
  %v162 = vunpack.c.h.b16 %v151
  %v163 = vunpack.c.l.b16 %v152
  %v164 = vunpack.c.h.b16 %v152
  %v165 = vpack.c.b16 %v157, %v157
  %v166 = vpack.c.b16 %v158, %v158
  %v167 = vpack.c.b16 %v159, %v159
  %v168 = vpack.c.b16 %v160, %v160
  %v169 = vpack.c.b16 %v161, %v161
  %v170 = vpack.c.b16 %v162, %v162
  %v171 = vpack.c.b16 %v163, %v163
  %v172 = vpack.c.b16 %v164, %v164
  %181 = vst [vmem:[%s3] sm:$0xf] %v165
  %182 = vst [vmem:[%s3 + $0x4] sm:$0xf] %v166
  %183 = vst [vmem:[%s3 + $0x8] sm:$0xf] %v167
  %184 = vst [vmem:[%s3 + $0xc] sm:$0xf] %v168
  %185 = vst [vmem:[%s3 + $0x10] sm:$0xf] %v169
  %186 = vst [vmem:[%s3 + $0x14] sm:$0xf] %v170
  %187 = vst [vmem:[%s3 + $0x18] sm:$0xf] %v171
  %188 = vst [vmem:[%s3 + $0x1c] sm:$0xf] %v172
  %v189 = vpack.c.bf16 %v117, %v113
  %v190 = vpack.c.bf16 %v127, %v123
  %v191 = vpack.c.bf16 %v137, %v133
  %v192 = vpack.c.bf16 %v147, %v143
  %v197 = vunpack.c.l.b16 %v189
  %v198 = vunpack.c.h.b16 %v189
  %v199 = vunpack.c.l.b16 %v190
  %v200 = vunpack.c.h.b16 %v190
  %v201 = vunpack.c.l.b16 %v191
  %v202 = vunpack.c.h.b16 %v191
  %v203 = vunpack.c.l.b16 %v192
  %v204 = vunpack.c.h.b16 %v192
  %v205 = vpack.c.b16 %v197, %v197
  %v206 = vpack.c.b16 %v198, %v198
  %v207 = vpack.c.b16 %v199, %v199
  %v208 = vpack.c.b16 %v200, %v200
  %v209 = vpack.c.b16 %v201, %v201
  %v210 = vpack.c.b16 %v202, %v202
  %v211 = vpack.c.b16 %v203, %v203
  %v212 = vpack.c.b16 %v204, %v204
  %s221 = scalar_lea.vmem %s3, 32
  %222 = vst [vmem:[%s221] sm:$0xf] %v205
  %223 = vst [vmem:[%s221 + $0x4] sm:$0xf] %v206
  %224 = vst [vmem:[%s221 + $0x8] sm:$0xf] %v207
  %225 = vst [vmem:[%s221 + $0xc] sm:$0xf] %v208
  %226 = vst [vmem:[%s221 + $0x10] sm:$0xf] %v209
  %227 = vst [vmem:[%s221 + $0x14] sm:$0xf] %v210
  %228 = vst [vmem:[%s221 + $0x18] sm:$0xf] %v211
  %229 = vst [vmem:[%s221 + $0x1c] sm:$0xf] %v212
  // Predicated region
  $region14: #{decoder_forward.6} parent=0 // pred_check
    _
  $region15: #{decoder_forward.6} parent=0 // pred_check_branch
    %231 = sbr.rel (0) target = $region17
  $region16: #{decoder_forward.6} parent=0 // pred_region
    _
  $region17: #{decoder_forward.6} parent=0 // pred_fallthru
    _
  // Predicated region
  $region18: #{decoder_forward.6} parent=0 // pred_check
    _
  $region19: #{decoder_forward.6} parent=0 // pred_check_branch
    %233 = sbr.rel (0) target = $region21
  $region20: #{decoder_forward.6} parent=0 // pred_region
    _
  $region21: #{decoder_forward.6} parent=0 // pred_fallthru
    _

// kernel: decoder_forward.9
$region0: #{decoder_forward.9}
  #allocation0 [shape = 'u32[]', space=smem, size = 0x4, offset = 0x4, fixed_abs, tag = 'smem constant byte address 0x4 - core index']
  #allocation1 [shape = 'u32[144,128]{1,0:T(1,128)}', space=vmem, size = 0x12000, scoped, tag = 'internal scratch']
  %s0 = inlined_call_operand.vmem [shape: bf16[64,128], index: 0, kind: input, shape index: {}]
  %s1 = inlined_call_operand.vmem [shape: bf16[128,256], index: 1, kind: input, shape index: {}]
  %s2 = inlined_call_operand.vmem [shape: f32[1,256], index: 2, kind: input, shape index: {}]
  %s3 = inlined_call_operand.vmem [shape: bf16[2,64,128], index: 3, kind: output, shape index: {}]
  %s4 = sld [smem:[#allocation0]]
  $region22: #{decoder_forward.9} parent=0
    _
  %s6 = ssub.s32 1, %s4
  %s7 = scalar_select 0, %s6, %s4
  // Predicated region
  $region2: #{decoder_forward.9} parent=0 // pred_check
    _
  $region3: #{decoder_forward.9} parent=0 // pred_check_branch
    %9 = sbr.rel (0) target = $region5
  $region4: #{decoder_forward.9} parent=0 // pred_region
    _
  $region5: #{decoder_forward.9} parent=0 // pred_fallthru
    _
  // Predicated region
  $region6: #{decoder_forward.9} parent=0 // pred_check
    _
  $region7: #{decoder_forward.9} parent=0 // pred_check_branch
    %11 = sbr.rel (0) target = $region9
  $region8: #{decoder_forward.9} parent=0 // pred_region
    _
  $region9: #{decoder_forward.9} parent=0 // pred_fallthru
    _
  // Predicated region
  $region10: #{decoder_forward.9} parent=0 // pred_check
    _
  $region11: #{decoder_forward.9} parent=0 // pred_check_branch
    %13 = sbr.rel (0) target = $region13
  $region12: #{decoder_forward.9} parent=0 // pred_region
    _
  $region13: #{decoder_forward.9} parent=0 // pred_fallthru
    _
  %v15 = vld [vmem:[%s0] sm:$0xf]
  %v16 = vld [vmem:[%s0 + $0x4] sm:$0xf]
  %v17 = vld [vmem:[%s0 + $0x8] sm:$0xf]
  %v18 = vld [vmem:[%s0 + $0xc] sm:$0xf]
  %v19 = vld [vmem:[%s0 + $0x10] sm:$0xf]
  %v20 = vld [vmem:[%s0 + $0x14] sm:$0xf]
  %v21 = vld [vmem:[%s0 + $0x18] sm:$0xf]
  %v22 = vld [vmem:[%s0 + $0x1c] sm:$0xf]
  %v23 = vld [vmem:[%s1] sm:$0xff]
  %v24 = vld [vmem:[%s1 + $0x8] sm:$0xff]
  %v25 = vld [vmem:[%s1 + $0x10] sm:$0xff]
  %v26 = vld [vmem:[%s1 + $0x18] sm:$0xff]
  %v27 = vld [vmem:[%s1 + $0x20] sm:$0xff]
  %v28 = vld [vmem:[%s1 + $0x28] sm:$0xff]
  %v29 = vld [vmem:[%s1 + $0x30] sm:$0xff]
  %v30 = vld [vmem:[%s1 + $0x38] sm:$0xff]
  %v31 = vld [vmem:[%s1 + $0x40] sm:$0xff]
  %v32 = vld [vmem:[%s1 + $0x48] sm:$0xff]
  %v33 = vld [vmem:[%s1 + $0x50] sm:$0xff]
  %v34 = vld [vmem:[%s1 + $0x58] sm:$0xff]
  %v35 = vld [vmem:[%s1 + $0x60] sm:$0xff]
  %v36 = vld [vmem:[%s1 + $0x68] sm:$0xff]
  %v37 = vld [vmem:[%s1 + $0x70] sm:$0xff]
  %v38 = vld [vmem:[%s1 + $0x78] sm:$0xff]
  %v39 = vld [vmem:[%s2] sm:$0x3]
  %v41 = vlaneseq
  %v42 = vshrl.u32 %v41, 7
  %v43 = vsub.s32 0, %v42
  %v44 = vrot.slane %v39, %v43
  %v45 = vlaneseq
  %v46 = vshrl.u32 %v45, 7
  %v47 = vsub.s32 1, %v46
  %v48 = vrot.slane %v39, %v47
  %v59 = vunpack.c.l.b16 %v15
  %v60 = vunpack.c.l.b16 %v16
  %v61 = vunpack.c.l.b16 %v17
  %v62 = vunpack.c.l.b16 %v18
  %v63 = vunpack.c.l.b16 %v19
  %v64 = vunpack.c.l.b16 %v20
  %v65 = vunpack.c.l.b16 %v21
  %v66 = vunpack.c.l.b16 %v22
  %v67 = vpack.c.b16 %v60, %v59
  %v68 = vpack.c.b16 %v62, %v61
  %v69 = vpack.c.b16 %v64, %v63
  %v70 = vpack.c.b16 %v66, %v65
  %v91 = vunpack.c.l.b16 %v23
  %v92 = vunpack.c.h.b16 %v23
  %v93 = vunpack.c.l.b16 %v24
  %v94 = vunpack.c.h.b16 %v24
  %v95 = vunpack.c.l.b16 %v25
  %v96 = vunpack.c.h.b16 %v25
  %v97 = vunpack.c.l.b16 %v26
  %v98 = vunpack.c.h.b16 %v26
  %v99 = vunpack.c.l.b16 %v27
  %v100 = vunpack.c.h.b16 %v27
  %v101 = vunpack.c.l.b16 %v28
  %v102 = vunpack.c.h.b16 %v28
  %v103 = vunpack.c.l.b16 %v29
  %v104 = vunpack.c.h.b16 %v29
  %v105 = vunpack.c.l.b16 %v30
  %v106 = vunpack.c.h.b16 %v30
  %v107 = vunpack.c.l.b16 %v31
  %v108 = vunpack.c.h.b16 %v31
  %v109 = vunpack.c.l.b16 %v32
  %v110 = vunpack.c.h.b16 %v32
  %v111 = vunpack.c.l.b16 %v33
  %v112 = vunpack.c.h.b16 %v33
  %v113 = vunpack.c.l.b16 %v34
  %v114 = vunpack.c.h.b16 %v34
  %v115 = vunpack.c.l.b16 %v35
  %v116 = vunpack.c.h.b16 %v35
  %v117 = vunpack.c.l.b16 %v36
  %v118 = vunpack.c.h.b16 %v36
  %v119 = vunpack.c.l.b16 %v37
  %v120 = vunpack.c.h.b16 %v37
  %v121 = vunpack.c.l.b16 %v38
  %v122 = vunpack.c.h.b16 %v38
  %v123 = vpack.c.b16 %v93, %v91
  %v124 = vpack.c.b16 %v94, %v92
  %v125 = vpack.c.b16 %v97, %v95
  %v126 = vpack.c.b16 %v98, %v96
  %v127 = vpack.c.b16 %v101, %v99
  %v128 = vpack.c.b16 %v102, %v100
  %v129 = vpack.c.b16 %v105, %v103
  %v130 = vpack.c.b16 %v106, %v104
  %v131 = vpack.c.b16 %v109, %v107
  %v132 = vpack.c.b16 %v110, %v108
  %v133 = vpack.c.b16 %v113, %v111
  %v134 = vpack.c.b16 %v114, %v112
  %v135 = vpack.c.b16 %v117, %v115
  %v136 = vpack.c.b16 %v118, %v116
  %v137 = vpack.c.b16 %v121, %v119
  %v138 = vpack.c.b16 %v122, %v120
  %155 = vmatprep.subr.bf16.mxu0 %v138
  %156 = vmatpush1.bf16.msra.mxu0 %v137
  %157 = vmatprep.subr.bf16.mxu0 %v136
  %158 = vmatpush1.bf16.msra.mxu0 %v135
  %159 = vmatprep.subr.bf16.mxu0 %v134
  %160 = vmatpush1.bf16.msra.mxu0 %v133
  %161 = vmatprep.subr.bf16.mxu0 %v132
  %162 = vmatpush1.bf16.msra.mxu0 %v131
  %163 = vmatprep.subr.bf16.mxu0 %v130
  %164 = vmatpush1.bf16.msra.mxu0 %v129
  %165 = vmatprep.subr.bf16.mxu0 %v128
  %166 = vmatpush1.bf16.msra.mxu0 %v127
  %167 = vmatprep.subr.bf16.mxu0 %v126
  %168 = vmatpush1.bf16.msra.mxu0 %v125
  %169 = vmatprep.subr.bf16.mxu0 %v124
  %170 = vmatpush1.bf16.msra.mxu0 %v123
  %171 = vmatprep.subr.bf16.mxu0 0
  %172 = vmatpush2.bf16.msra.mxu0 0
  %173 = vmatprep.subr.bf16.mxu0 0
  %174 = vmatpush2.bf16.msra.mxu0 0
  %175 = vmatprep.subr.bf16.mxu0 0
  %176 = vmatpush2.bf16.msra.mxu0 0
  %177 = vmatprep.subr.bf16.mxu0 0
  %178 = vmatpush2.bf16.msra.mxu0 0
  %179 = vmatprep.subr.bf16.mxu0 0
  %180 = vmatpush2.bf16.msra.mxu0 0
  %181 = vmatprep.subr.bf16.mxu0 0
  %182 = vmatpush2.bf16.msra.mxu0 0
  %183 = vmatprep.subr.bf16.mxu0 0
  %184 = vmatpush2.bf16.msra.mxu0 0
  %185 = vmatprep.subr.bf16.mxu0 0
  %186 = vmatpush2.bf16.msra.mxu0 0
  %187 = vmatprep.mubr.bf16.mxu0 0
  %188 = vmatmul.mubr.bf16.gmra.mxu0 %v67
  %v189 = vpop.f32.mrf.mxu0
  %v190 = vadd.f32 %v44, %v189
  %v191 = vpop.f32.mrf.mxu0
  %v192 = vadd.f32 %v48, %v191
  %v193 = vpop.f32.mrf.mxu0
  %v194 = vadd.f32 %v44, %v193
  %v195 = vpop.f32.mrf.mxu0
  %v196 = vadd.f32 %v48, %v195
  %197 = vmatprep.mubr.bf16.mxu0 0
  %198 = vmatmul.mubr.bf16.gmra.mxu0 %v68
  %v199 = vpop.f32.mrf.mxu0
  %v200 = vadd.f32 %v44, %v199
  %v201 = vpop.f32.mrf.mxu0
  %v202 = vadd.f32 %v48, %v201
  %v203 = vpop.f32.mrf.mxu0
  %v204 = vadd.f32 %v44, %v203
  %v205 = vpop.f32.mrf.mxu0
  %v206 = vadd.f32 %v48, %v205
  %207 = vmatprep.mubr.bf16.mxu0 0
  %208 = vmatmul.mubr.bf16.gmra.mxu0 %v69
  %v209 = vpop.f32.mrf.mxu0
  %v210 = vadd.f32 %v44, %v209
  %v211 = vpop.f32.mrf.mxu0
  %v212 = vadd.f32 %v48, %v211
  %v213 = vpop.f32.mrf.mxu0
  %v214 = vadd.f32 %v44, %v213
  %v215 = vpop.f32.mrf.mxu0
  %v216 = vadd.f32 %v48, %v215
  %217 = vmatprep.mubr.bf16.mxu0 0
  %218 = vmatmul.mubr.bf16.gmra.mxu0 %v70
  %v219 = vpop.f32.mrf.mxu0
  %v220 = vadd.f32 %v44, %v219
  %v221 = vpop.f32.mrf.mxu0
  %v222 = vadd.f32 %v48, %v221
  %v223 = vpop.f32.mrf.mxu0
  %v224 = vadd.f32 %v44, %v223
  %v225 = vpop.f32.mrf.mxu0
  %v226 = vadd.f32 %v48, %v225
  %227 = vdwg.mxu0
  %v228 = vpack.c.bf16 %v194, %v190
  %v229 = vpack.c.bf16 %v204, %v200
  %v230 = vpack.c.bf16 %v214, %v210
  %v231 = vpack.c.bf16 %v224, %v220
  %v236 = vunpack.c.l.b16 %v228
  %v237 = vunpack.c.h.b16 %v228
  %v238 = vunpack.c.l.b16 %v229
  %v239 = vunpack.c.h.b16 %v229
  %v240 = vunpack.c.l.b16 %v230
  %v241 = vunpack.c.h.b16 %v230
  %v242 = vunpack.c.l.b16 %v231
  %v243 = vunpack.c.h.b16 %v231
  %v244 = vpack.c.b16 %v236, %v236
  %v245 = vpack.c.b16 %v237, %v237
  %v246 = vpack.c.b16 %v238, %v238
  %v247 = vpack.c.b16 %v239, %v239
  %v248 = vpack.c.b16 %v240, %v240
  %v249 = vpack.c.b16 %v241, %v241
  %v250 = vpack.c.b16 %v242, %v242
  %v251 = vpack.c.b16 %v243, %v243
  %260 = vst [vmem:[%s3] sm:$0xf] %v244
  %261 = vst [vmem:[%s3 + $0x4] sm:$0xf] %v245
  %262 = vst [vmem:[%s3 + $0x8] sm:$0xf] %v246
  %263 = vst [vmem:[%s3 + $0xc] sm:$0xf] %v247
  %264 = vst [vmem:[%s3 + $0x10] sm:$0xf] %v248
  %265 = vst [vmem:[%s3 + $0x14] sm:$0xf] %v249
  %266 = vst [vmem:[%s3 + $0x18] sm:$0xf] %v250
  %267 = vst [vmem:[%s3 + $0x1c] sm:$0xf] %v251
  %v268 = vpack.c.bf16 %v196, %v192
  %v269 = vpack.c.bf16 %v206, %v202
  %v270 = vpack.c.bf16 %v216, %v212
  %v271 = vpack.c.bf16 %v226, %v222
  %v276 = vunpack.c.l.b16 %v268
  %v277 = vunpack.c.h.b16 %v268
  %v278 = vunpack.c.l.b16 %v269
  %v279 = vunpack.c.h.b16 %v269
  %v280 = vunpack.c.l.b16 %v270
  %v281 = vunpack.c.h.b16 %v270
  %v282 = vunpack.c.l.b16 %v271
  %v283 = vunpack.c.h.b16 %v271
  %v284 = vpack.c.b16 %v276, %v276
  %v285 = vpack.c.b16 %v277, %v277
  %v286 = vpack.c.b16 %v278, %v278
  %v287 = vpack.c.b16 %v279, %v279
  %v288 = vpack.c.b16 %v280, %v280
  %v289 = vpack.c.b16 %v281, %v281
  %v290 = vpack.c.b16 %v282, %v282
  %v291 = vpack.c.b16 %v283, %v283
  %s300 = scalar_lea.vmem %s3, 32
  %301 = vst [vmem:[%s300] sm:$0xf] %v284
  %302 = vst [vmem:[%s300 + $0x4] sm:$0xf] %v285
  %303 = vst [vmem:[%s300 + $0x8] sm:$0xf] %v286
  %304 = vst [vmem:[%s300 + $0xc] sm:$0xf] %v287
  %305 = vst [vmem:[%s300 + $0x10] sm:$0xf] %v288
  %306 = vst [vmem:[%s300 + $0x14] sm:$0xf] %v289
  %307 = vst [vmem:[%s300 + $0x18] sm:$0xf] %v290
  %308 = vst [vmem:[%s300 + $0x1c] sm:$0xf] %v291
  // Predicated region
  $region14: #{decoder_forward.9} parent=0 // pred_check
    _
  $region15: #{decoder_forward.9} parent=0 // pred_check_branch
    %310 = sbr.rel (0) target = $region17
  $region16: #{decoder_forward.9} parent=0 // pred_region
    _
  $region17: #{decoder_forward.9} parent=0 // pred_fallthru
    _
  // Predicated region
  $region18: #{decoder_forward.9} parent=0 // pred_check
    _
  $region19: #{decoder_forward.9} parent=0 // pred_check_branch
    %312 = sbr.rel (0) target = $region21
  $region20: #{decoder_forward.9} parent=0 // pred_region
    _
  $region21: #{decoder_forward.9} parent=0 // pred_fallthru
    _

// kernel: decoder_forward.8
$region0: #{decoder_forward.8}
  #allocation0 [shape = 'u32[]', space=smem, size = 0x4, offset = 0x4, fixed_abs, tag = 'smem constant byte address 0x4 - core index']
  #allocation1 [shape = 'u32[144,128]{1,0:T(1,128)}', space=vmem, size = 0x12000, scoped, tag = 'internal scratch']
  %s0 = inlined_call_operand.vmem [shape: bf16[64,32], index: 0, kind: input, shape index: {}]
  %s1 = inlined_call_operand.vmem [shape: bf16[64,32], index: 1, kind: input, shape index: {}]
  %s2 = inlined_call_operand.vmem [shape: bf16[32,128], index: 2, kind: input, shape index: {}]
  %s3 = inlined_call_operand.vmem [shape: bf16[32,128], index: 3, kind: input, shape index: {}]
  %s4 = inlined_call_operand.vmem [shape: f32[1,128], index: 4, kind: input, shape index: {}]
  %s5 = inlined_call_operand.vmem [shape: bf16[64,128], index: 5, kind: output, shape index: {}]
  %s6 = sld [smem:[#allocation0]]
  $region30: #{decoder_forward.8} parent=0
    _
  %s8 = ssub.s32 1, %s6
  %s9 = scalar_select 0, %s8, %s6
  // Predicated region
  $region2: #{decoder_forward.8} parent=0 // pred_check
    _
  $region3: #{decoder_forward.8} parent=0 // pred_check_branch
    %11 = sbr.rel (0) target = $region5
  $region4: #{decoder_forward.8} parent=0 // pred_region
    _
  $region5: #{decoder_forward.8} parent=0 // pred_fallthru
    _
  // Predicated region
  $region6: #{decoder_forward.8} parent=0 // pred_check
    _
  $region7: #{decoder_forward.8} parent=0 // pred_check_branch
    %13 = sbr.rel (0) target = $region9
  $region8: #{decoder_forward.8} parent=0 // pred_region
    _
  $region9: #{decoder_forward.8} parent=0 // pred_fallthru
    _
  // Predicated region
  $region10: #{decoder_forward.8} parent=0 // pred_check
    _
  $region11: #{decoder_forward.8} parent=0 // pred_check_branch
    %15 = sbr.rel (0) target = $region13
  $region12: #{decoder_forward.8} parent=0 // pred_region
    _
  $region13: #{decoder_forward.8} parent=0 // pred_fallthru
    _
  // Predicated region
  $region14: #{decoder_forward.8} parent=0 // pred_check
    _
  $region15: #{decoder_forward.8} parent=0 // pred_check_branch
    %17 = sbr.rel (0) target = $region17
  $region16: #{decoder_forward.8} parent=0 // pred_region
    _
  $region17: #{decoder_forward.8} parent=0 // pred_fallthru
    _
  // Predicated region
  $region18: #{decoder_forward.8} parent=0 // pred_check
    _
  $region19: #{decoder_forward.8} parent=0 // pred_check_branch
    %19 = sbr.rel (0) target = $region21
  $region20: #{decoder_forward.8} parent=0 // pred_region
    _
  $region21: #{decoder_forward.8} parent=0 // pred_fallthru
    _
  %v21 = vld [vmem:[%s0] sm:$0xf]
  %v22 = vld [vmem:[%s0 + $0x4] sm:$0xf]
  %v23 = vld [vmem:[%s0 + $0x8] sm:$0xf]
  %v24 = vld [vmem:[%s0 + $0xc] sm:$0xf]
  %v25 = vld [vmem:[%s0 + $0x10] sm:$0xf]
  %v26 = vld [vmem:[%s0 + $0x14] sm:$0xf]
  %v27 = vld [vmem:[%s0 + $0x18] sm:$0xf]
  %v28 = vld [vmem:[%s0 + $0x1c] sm:$0xf]
  %v29 = vld [vmem:[%s2] sm:$0xf]
  %v30 = vld [vmem:[%s2 + $0x4] sm:$0xf]
  %v31 = vld [vmem:[%s2 + $0x8] sm:$0xf]
  %v32 = vld [vmem:[%s2 + $0xc] sm:$0xf]
  %v33 = vld [vmem:[%s1] sm:$0xf]
  %v34 = vld [vmem:[%s1 + $0x4] sm:$0xf]
  %v35 = vld [vmem:[%s1 + $0x8] sm:$0xf]
  %v36 = vld [vmem:[%s1 + $0xc] sm:$0xf]
  %v37 = vld [vmem:[%s1 + $0x10] sm:$0xf]
  %v38 = vld [vmem:[%s1 + $0x14] sm:$0xf]
  %v39 = vld [vmem:[%s1 + $0x18] sm:$0xf]
  %v40 = vld [vmem:[%s1 + $0x1c] sm:$0xf]
  %v41 = vld [vmem:[%s3] sm:$0xf]
  %v42 = vld [vmem:[%s3 + $0x4] sm:$0xf]
  %v43 = vld [vmem:[%s3 + $0x8] sm:$0xf]
  %v44 = vld [vmem:[%s3 + $0xc] sm:$0xf]
  %v53 = vunpack.c.l.b16 %v33
  %v54 = vunpack.c.l.b16 %v34
  %v55 = vunpack.c.l.b16 %v35
  %v56 = vunpack.c.l.b16 %v36
  %v57 = vunpack.c.l.b16 %v37
  %v58 = vunpack.c.l.b16 %v38
  %v59 = vunpack.c.l.b16 %v39
  %v60 = vunpack.c.l.b16 %v40
  %v61 = vpack.c.b16 %v54, %v53
  %v62 = vpack.c.b16 %v56, %v55
  %v63 = vpack.c.b16 %v58, %v57
  %v64 = vpack.c.b16 %v60, %v59
  %v69 = vunpack.c.l.b16 %v41
  %v70 = vunpack.c.l.b16 %v42
  %v71 = vunpack.c.l.b16 %v43
  %v72 = vunpack.c.l.b16 %v44
  %v73 = vpack.c.b16 %v70, %v69
  %v74 = vpack.c.b16 %v72, %v71
  %vm77 = vcmask 261120
  %v79 = vsel %vm77, %v61, 0
  %v82 = vsel %vm77, %v62, 0
  %v85 = vsel %vm77, %v63, 0
  %v88 = vsel %vm77, %v64, 0
  %90 = vmatprep.subr.bf16.mxu0 0
  %91 = vmatpush1.bf16.msra.mxu0 0
  %92 = vmatprep.subr.bf16.mxu0 0
  %93 = vmatpush1.bf16.msra.mxu0 0
  %94 = vmatprep.subr.bf16.mxu0 0
  %95 = vmatpush1.bf16.msra.mxu0 0
  %96 = vmatprep.subr.bf16.mxu0 0
  %97 = vmatpush1.bf16.msra.mxu0 0
  %98 = vmatprep.subr.bf16.mxu0 0
  %99 = vmatpush1.bf16.msra.mxu0 0
  %100 = vmatprep.subr.bf16.mxu0 0
  %101 = vmatpush1.bf16.msra.mxu0 0
  %102 = vmatprep.subr.bf16.mxu0 0
  %103 = vmatpush1.bf16.msra.mxu0 %v74
  %104 = vmatprep.subr.bf16.mxu0 0
  %105 = vmatpush1.bf16.msra.mxu0 %v73
  %106 = vmatprep.subr.bf16.mxu0 0
  %107 = vmatpush2.bf16.msra.mxu0 0
  %108 = vmatprep.subr.bf16.mxu0 0
  %109 = vmatpush2.bf16.msra.mxu0 0
  %110 = vmatprep.subr.bf16.mxu0 0
  %111 = vmatpush2.bf16.msra.mxu0 0
  %112 = vmatprep.subr.bf16.mxu0 0
  %113 = vmatpush2.bf16.msra.mxu0 0
  %114 = vmatprep.subr.bf16.mxu0 0
  %115 = vmatpush2.bf16.msra.mxu0 0
  %116 = vmatprep.subr.bf16.mxu0 0
  %117 = vmatpush2.bf16.msra.mxu0 0
  %118 = vmatprep.subr.bf16.mxu0 0
  %119 = vmatpush2.bf16.msra.mxu0 0
  %120 = vmatprep.subr.bf16.mxu0 0
  %121 = vmatpush2.bf16.msra.mxu0 0
  %122 = vmatprep.mubr.bf16.mxu0 0
  %123 = vmatmul.mubr.bf16.gmra.mxu0 %v79
  %v124 = vpop.f32.mrf.mxu0
  %v125 = vadd.f32 0.0, %v124
  %v126 = vpop.f32.mrf.mxu0
  %v127 = vpop.f32.mrf.mxu0
  %v128 = vadd.f32 0.0, %v127
  %v129 = vpop.f32.mrf.mxu0
  %130 = vmatprep.mubr.bf16.mxu0 0
  %131 = vmatmul.mubr.bf16.gmra.mxu0 %v82
  %v132 = vpop.f32.mrf.mxu0
  %v133 = vadd.f32 0.0, %v132
  %v134 = vpop.f32.mrf.mxu0
  %v135 = vpop.f32.mrf.mxu0
  %v136 = vadd.f32 0.0, %v135
  %v137 = vpop.f32.mrf.mxu0
  %138 = vmatprep.mubr.bf16.mxu0 0
  %139 = vmatmul.mubr.bf16.gmra.mxu0 %v85
  %v140 = vpop.f32.mrf.mxu0
  %v141 = vadd.f32 0.0, %v140
  %v142 = vpop.f32.mrf.mxu0
  %v143 = vpop.f32.mrf.mxu0
  %v144 = vadd.f32 0.0, %v143
  %v145 = vpop.f32.mrf.mxu0
  %146 = vmatprep.mubr.bf16.mxu0 0
  %147 = vmatmul.mubr.bf16.gmra.mxu0 %v88
  %v148 = vpop.f32.mrf.mxu0
  %v149 = vadd.f32 0.0, %v148
  %v150 = vpop.f32.mrf.mxu0
  %v151 = vpop.f32.mrf.mxu0
  %v152 = vadd.f32 0.0, %v151
  %v153 = vpop.f32.mrf.mxu0
  %154 = vdwg.mxu0
  %v163 = vunpack.c.l.b16 %v21
  %v164 = vunpack.c.l.b16 %v22
  %v165 = vunpack.c.l.b16 %v23
  %v166 = vunpack.c.l.b16 %v24
  %v167 = vunpack.c.l.b16 %v25
  %v168 = vunpack.c.l.b16 %v26
  %v169 = vunpack.c.l.b16 %v27
  %v170 = vunpack.c.l.b16 %v28
  %v171 = vpack.c.b16 %v164, %v163
  %v172 = vpack.c.b16 %v166, %v165
  %v173 = vpack.c.b16 %v168, %v167
  %v174 = vpack.c.b16 %v170, %v169
  %v179 = vunpack.c.l.b16 %v29
  %v180 = vunpack.c.l.b16 %v30
  %v181 = vunpack.c.l.b16 %v31
  %v182 = vunpack.c.l.b16 %v32
  %v183 = vpack.c.b16 %v180, %v179
  %v184 = vpack.c.b16 %v182, %v181
  %v188 = vsel %vm77, %v171, 0
  %v191 = vsel %vm77, %v172, 0
  %v194 = vsel %vm77, %v173, 0
  %v197 = vsel %vm77, %v174, 0
  %199 = vmatprep.subr.bf16.mxu0 0
  %200 = vmatpush1.bf16.msra.mxu0 0
  %201 = vmatprep.subr.bf16.mxu0 0
  %202 = vmatpush1.bf16.msra.mxu0 0
  %203 = vmatprep.subr.bf16.mxu0 0
  %204 = vmatpush1.bf16.msra.mxu0 0
  %205 = vmatprep.subr.bf16.mxu0 0
  %206 = vmatpush1.bf16.msra.mxu0 0
  %207 = vmatprep.subr.bf16.mxu0 0
  %208 = vmatpush1.bf16.msra.mxu0 0
  %209 = vmatprep.subr.bf16.mxu0 0
  %210 = vmatpush1.bf16.msra.mxu0 0
  %211 = vmatprep.subr.bf16.mxu0 0
  %212 = vmatpush1.bf16.msra.mxu0 %v184
  %213 = vmatprep.subr.bf16.mxu0 0
  %214 = vmatpush1.bf16.msra.mxu0 %v183
  %215 = vmatprep.subr.bf16.mxu0 0
  %216 = vmatpush2.bf16.msra.mxu0 0
  %217 = vmatprep.subr.bf16.mxu0 0
  %218 = vmatpush2.bf16.msra.mxu0 0
  %219 = vmatprep.subr.bf16.mxu0 0
  %220 = vmatpush2.bf16.msra.mxu0 0
  %221 = vmatprep.subr.bf16.mxu0 0
  %222 = vmatpush2.bf16.msra.mxu0 0
  %223 = vmatprep.subr.bf16.mxu0 0
  %224 = vmatpush2.bf16.msra.mxu0 0
  %225 = vmatprep.subr.bf16.mxu0 0
  %226 = vmatpush2.bf16.msra.mxu0 0
  %227 = vmatprep.subr.bf16.mxu0 0
  %228 = vmatpush2.bf16.msra.mxu0 0
  %229 = vmatprep.subr.bf16.mxu0 0
  %230 = vmatpush2.bf16.msra.mxu0 0
  %231 = vmatprep.mubr.bf16.mxu0 0
  %232 = vmatmul.mubr.bf16.gmra.mxu0 %v188
  %v233 = vpop.f32.mrf.mxu0
  %v234 = vadd.f32 %v125, %v233
  %v235 = vpop.f32.mrf.mxu0
  %v236 = vpop.f32.mrf.mxu0
  %v237 = vadd.f32 %v128, %v236
  %v238 = vpop.f32.mrf.mxu0
  %239 = vmatprep.mubr.bf16.mxu0 0
  %240 = vmatmul.mubr.bf16.gmra.mxu0 %v191
  %v241 = vpop.f32.mrf.mxu0
  %v242 = vadd.f32 %v133, %v241
  %v243 = vpop.f32.mrf.mxu0
  %v244 = vpop.f32.mrf.mxu0
  %v245 = vadd.f32 %v136, %v244
  %v246 = vpop.f32.mrf.mxu0
  %247 = vmatprep.mubr.bf16.mxu0 0
  %248 = vmatmul.mubr.bf16.gmra.mxu0 %v194
  %v249 = vpop.f32.mrf.mxu0
  %v250 = vadd.f32 %v141, %v249
  %v251 = vpop.f32.mrf.mxu0
  %v252 = vpop.f32.mrf.mxu0
  %v253 = vadd.f32 %v144, %v252
  %v254 = vpop.f32.mrf.mxu0
  %255 = vmatprep.mubr.bf16.mxu0 0
  %256 = vmatmul.mubr.bf16.gmra.mxu0 %v197
  %v257 = vpop.f32.mrf.mxu0
  %v258 = vadd.f32 %v149, %v257
  %v259 = vpop.f32.mrf.mxu0
  %v260 = vpop.f32.mrf.mxu0
  %v261 = vadd.f32 %v152, %v260
  %v262 = vpop.f32.mrf.mxu0
  %263 = vdwg.mxu0
  %v264 = vld [vmem:[%s4] sm:$0x1]
  %v266 = vlaneseq
  %v267 = vshrl.u32 %v266, 7
  %v268 = vsub.s32 0, %v267
  %v269 = vrot.slane %v264, %v268
  %v271 = vadd.f32 %v234, %v269
  %v272 = vadd.f32 %v237, %v269
  %v273 = vadd.f32 %v242, %v269
  %v274 = vadd.f32 %v245, %v269
  %v275 = vadd.f32 %v250, %v269
  %v276 = vadd.f32 %v253, %v269
  %v277 = vadd.f32 %v258, %v269
  %v278 = vadd.f32 %v261, %v269
  %v279 = vpack.c.bf16 %v272, %v271
  %v280 = vpack.c.bf16 %v274, %v273
  %v281 = vpack.c.bf16 %v276, %v275
  %v282 = vpack.c.bf16 %v278, %v277
  %v287 = vunpack.c.l.b16 %v279
  %v288 = vunpack.c.h.b16 %v279
  %v289 = vunpack.c.l.b16 %v280
  %v290 = vunpack.c.h.b16 %v280
  %v291 = vunpack.c.l.b16 %v281
  %v292 = vunpack.c.h.b16 %v281
  %v293 = vunpack.c.l.b16 %v282
  %v294 = vunpack.c.h.b16 %v282
  %v295 = vpack.c.b16 %v287, %v287
  %v296 = vpack.c.b16 %v288, %v288
  %v297 = vpack.c.b16 %v289, %v289
  %v298 = vpack.c.b16 %v290, %v290
  %v299 = vpack.c.b16 %v291, %v291
  %v300 = vpack.c.b16 %v292, %v292
  %v301 = vpack.c.b16 %v293, %v293
  %v302 = vpack.c.b16 %v294, %v294
  %311 = vst [vmem:[%s5] sm:$0xf] %v295
  %312 = vst [vmem:[%s5 + $0x4] sm:$0xf] %v296
  %313 = vst [vmem:[%s5 + $0x8] sm:$0xf] %v297
  %314 = vst [vmem:[%s5 + $0xc] sm:$0xf] %v298
  %315 = vst [vmem:[%s5 + $0x10] sm:$0xf] %v299
  %316 = vst [vmem:[%s5 + $0x14] sm:$0xf] %v300
  %317 = vst [vmem:[%s5 + $0x18] sm:$0xf] %v301
  %318 = vst [vmem:[%s5 + $0x1c] sm:$0xf] %v302
  // Predicated region
  $region22: #{decoder_forward.8} parent=0 // pred_check
    _
  $region23: #{decoder_forward.8} parent=0 // pred_check_branch
    %320 = sbr.rel (0) target = $region25
  $region24: #{decoder_forward.8} parent=0 // pred_region
    _
  $region25: #{decoder_forward.8} parent=0 // pred_fallthru
    _
  // Predicated region
  $region26: #{decoder_forward.8} parent=0 // pred_check
    _
  $region27: #{decoder_forward.8} parent=0 // pred_check_branch
    %322 = sbr.rel (0) target = $region29
  $region28: #{decoder_forward.8} parent=0 // pred_region
    _
  $region29: #{decoder_forward.8} parent=0 // pred_fallthru
    _

// kernel: decoder_forward.11
$region0: #{decoder_forward.11}
  #allocation0 [shape = 'u32[]', space=smem, size = 0x4, offset = 0x4, fixed_abs, tag = 'smem constant byte address 0x4 - core index']
  #allocation1 [shape = 'u32[144,128]{1,0:T(1,128)}', space=vmem, size = 0x12000, scoped, tag = 'internal scratch']
  %s0 = inlined_call_operand.vmem [shape: bf16[64,32], index: 0, kind: input, shape index: {}]
  %s1 = inlined_call_operand.vmem [shape: bf16[64,32], index: 1, kind: input, shape index: {}]
  %s2 = inlined_call_operand.vmem [shape: bf16[32,128], index: 2, kind: input, shape index: {}]
  %s3 = inlined_call_operand.vmem [shape: bf16[32,128], index: 3, kind: input, shape index: {}]
  %s4 = inlined_call_operand.vmem [shape: f32[1,128], index: 4, kind: input, shape index: {}]
  %s5 = inlined_call_operand.vmem [shape: f32[64,128], index: 5, kind: output, shape index: {}]
  %s6 = sld [smem:[#allocation0]]
  $region30: #{decoder_forward.11} parent=0
    _
  %s8 = ssub.s32 1, %s6
  %s9 = scalar_select 0, %s8, %s6
  // Predicated region
  $region2: #{decoder_forward.11} parent=0 // pred_check
    _
  $region3: #{decoder_forward.11} parent=0 // pred_check_branch
    %11 = sbr.rel (0) target = $region5
  $region4: #{decoder_forward.11} parent=0 // pred_region
    _
  $region5: #{decoder_forward.11} parent=0 // pred_fallthru
    _
  // Predicated region
  $region6: #{decoder_forward.11} parent=0 // pred_check
    _
  $region7: #{decoder_forward.11} parent=0 // pred_check_branch
    %13 = sbr.rel (0) target = $region9
  $region8: #{decoder_forward.11} parent=0 // pred_region
    _
  $region9: #{decoder_forward.11} parent=0 // pred_fallthru
    _
  // Predicated region
  $region10: #{decoder_forward.11} parent=0 // pred_check
    _
  $region11: #{decoder_forward.11} parent=0 // pred_check_branch
    %15 = sbr.rel (0) target = $region13
  $region12: #{decoder_forward.11} parent=0 // pred_region
    _
  $region13: #{decoder_forward.11} parent=0 // pred_fallthru
    _
  // Predicated region
  $region14: #{decoder_forward.11} parent=0 // pred_check
    _
  $region15: #{decoder_forward.11} parent=0 // pred_check_branch
    %17 = sbr.rel (0) target = $region17
  $region16: #{decoder_forward.11} parent=0 // pred_region
    _
  $region17: #{decoder_forward.11} parent=0 // pred_fallthru
    _
  // Predicated region
  $region18: #{decoder_forward.11} parent=0 // pred_check
    _
  $region19: #{decoder_forward.11} parent=0 // pred_check_branch
    %19 = sbr.rel (0) target = $region21
  $region20: #{decoder_forward.11} parent=0 // pred_region
    _
  $region21: #{decoder_forward.11} parent=0 // pred_fallthru
    _
  %v21 = vld [vmem:[%s0] sm:$0xf]
  %v22 = vld [vmem:[%s0 + $0x4] sm:$0xf]
  %v23 = vld [vmem:[%s0 + $0x8] sm:$0xf]
  %v24 = vld [vmem:[%s0 + $0xc] sm:$0xf]
  %v25 = vld [vmem:[%s0 + $0x10] sm:$0xf]
  %v26 = vld [vmem:[%s0 + $0x14] sm:$0xf]
  %v27 = vld [vmem:[%s0 + $0x18] sm:$0xf]
  %v28 = vld [vmem:[%s0 + $0x1c] sm:$0xf]
  %v29 = vld [vmem:[%s2] sm:$0xf]
  %v30 = vld [vmem:[%s2 + $0x4] sm:$0xf]
  %v31 = vld [vmem:[%s2 + $0x8] sm:$0xf]
  %v32 = vld [vmem:[%s2 + $0xc] sm:$0xf]
  %v33 = vld [vmem:[%s1] sm:$0xf]
  %v34 = vld [vmem:[%s1 + $0x4] sm:$0xf]
  %v35 = vld [vmem:[%s1 + $0x8] sm:$0xf]
  %v36 = vld [vmem:[%s1 + $0xc] sm:$0xf]
  %v37 = vld [vmem:[%s1 + $0x10] sm:$0xf]
  %v38 = vld [vmem:[%s1 + $0x14] sm:$0xf]
  %v39 = vld [vmem:[%s1 + $0x18] sm:$0xf]
  %v40 = vld [vmem:[%s1 + $0x1c] sm:$0xf]
  %v41 = vld [vmem:[%s3] sm:$0xf]
  %v42 = vld [vmem:[%s3 + $0x4] sm:$0xf]
  %v43 = vld [vmem:[%s3 + $0x8] sm:$0xf]
  %v44 = vld [vmem:[%s3 + $0xc] sm:$0xf]
  %v53 = vunpack.c.l.b16 %v33
  %v54 = vunpack.c.l.b16 %v34
  %v55 = vunpack.c.l.b16 %v35
  %v56 = vunpack.c.l.b16 %v36
  %v57 = vunpack.c.l.b16 %v37
  %v58 = vunpack.c.l.b16 %v38
  %v59 = vunpack.c.l.b16 %v39
  %v60 = vunpack.c.l.b16 %v40
  %v61 = vpack.c.b16 %v54, %v53
  %v62 = vpack.c.b16 %v56, %v55
  %v63 = vpack.c.b16 %v58, %v57
  %v64 = vpack.c.b16 %v60, %v59
  %v69 = vunpack.c.l.b16 %v41
  %v70 = vunpack.c.l.b16 %v42
  %v71 = vunpack.c.l.b16 %v43
  %v72 = vunpack.c.l.b16 %v44
  %v73 = vpack.c.b16 %v70, %v69
  %v74 = vpack.c.b16 %v72, %v71
  %vm77 = vcmask 261120
  %v79 = vsel %vm77, %v61, 0
  %v82 = vsel %vm77, %v62, 0
  %v85 = vsel %vm77, %v63, 0
  %v88 = vsel %vm77, %v64, 0
  %90 = vmatprep.subr.bf16.mxu0 0
  %91 = vmatpush1.bf16.msra.mxu0 0
  %92 = vmatprep.subr.bf16.mxu0 0
  %93 = vmatpush1.bf16.msra.mxu0 0
  %94 = vmatprep.subr.bf16.mxu0 0
  %95 = vmatpush1.bf16.msra.mxu0 0
  %96 = vmatprep.subr.bf16.mxu0 0
  %97 = vmatpush1.bf16.msra.mxu0 0
  %98 = vmatprep.subr.bf16.mxu0 0
  %99 = vmatpush1.bf16.msra.mxu0 0
  %100 = vmatprep.subr.bf16.mxu0 0
  %101 = vmatpush1.bf16.msra.mxu0 0
  %102 = vmatprep.subr.bf16.mxu0 0
  %103 = vmatpush1.bf16.msra.mxu0 %v74
  %104 = vmatprep.subr.bf16.mxu0 0
  %105 = vmatpush1.bf16.msra.mxu0 %v73
  %106 = vmatprep.subr.bf16.mxu0 0
  %107 = vmatpush2.bf16.msra.mxu0 0
  %108 = vmatprep.subr.bf16.mxu0 0
  %109 = vmatpush2.bf16.msra.mxu0 0
  %110 = vmatprep.subr.bf16.mxu0 0
  %111 = vmatpush2.bf16.msra.mxu0 0
  %112 = vmatprep.subr.bf16.mxu0 0
  %113 = vmatpush2.bf16.msra.mxu0 0
  %114 = vmatprep.subr.bf16.mxu0 0
  %115 = vmatpush2.bf16.msra.mxu0 0
  %116 = vmatprep.subr.bf16.mxu0 0
  %117 = vmatpush2.bf16.msra.mxu0 0
  %118 = vmatprep.subr.bf16.mxu0 0
  %119 = vmatpush2.bf16.msra.mxu0 0
  %120 = vmatprep.subr.bf16.mxu0 0
  %121 = vmatpush2.bf16.msra.mxu0 0
  %122 = vmatprep.mubr.bf16.mxu0 0
  %123 = vmatmul.mubr.bf16.gmra.mxu0 %v79
  %v124 = vpop.f32.mrf.mxu0
  %v125 = vadd.f32 0.0, %v124
  %v126 = vpop.f32.mrf.mxu0
  %v127 = vpop.f32.mrf.mxu0
  %v128 = vadd.f32 0.0, %v127
  %v129 = vpop.f32.mrf.mxu0
  %130 = vmatprep.mubr.bf16.mxu0 0
  %131 = vmatmul.mubr.bf16.gmra.mxu0 %v82
  %v132 = vpop.f32.mrf.mxu0
  %v133 = vadd.f32 0.0, %v132
  %v134 = vpop.f32.mrf.mxu0
  %v135 = vpop.f32.mrf.mxu0
  %v136 = vadd.f32 0.0, %v135
  %v137 = vpop.f32.mrf.mxu0
  %138 = vmatprep.mubr.bf16.mxu0 0
  %139 = vmatmul.mubr.bf16.gmra.mxu0 %v85
  %v140 = vpop.f32.mrf.mxu0
  %v141 = vadd.f32 0.0, %v140
  %v142 = vpop.f32.mrf.mxu0
  %v143 = vpop.f32.mrf.mxu0
  %v144 = vadd.f32 0.0, %v143
  %v145 = vpop.f32.mrf.mxu0
  %146 = vmatprep.mubr.bf16.mxu0 0
  %147 = vmatmul.mubr.bf16.gmra.mxu0 %v88
  %v148 = vpop.f32.mrf.mxu0
  %v149 = vadd.f32 0.0, %v148
  %v150 = vpop.f32.mrf.mxu0
  %v151 = vpop.f32.mrf.mxu0
  %v152 = vadd.f32 0.0, %v151
  %v153 = vpop.f32.mrf.mxu0
  %154 = vdwg.mxu0
  %v163 = vunpack.c.l.b16 %v21
  %v164 = vunpack.c.l.b16 %v22
  %v165 = vunpack.c.l.b16 %v23
  %v166 = vunpack.c.l.b16 %v24
  %v167 = vunpack.c.l.b16 %v25
  %v168 = vunpack.c.l.b16 %v26
  %v169 = vunpack.c.l.b16 %v27
  %v170 = vunpack.c.l.b16 %v28
  %v171 = vpack.c.b16 %v164, %v163
  %v172 = vpack.c.b16 %v166, %v165
  %v173 = vpack.c.b16 %v168, %v167
  %v174 = vpack.c.b16 %v170, %v169
  %v179 = vunpack.c.l.b16 %v29
  %v180 = vunpack.c.l.b16 %v30
  %v181 = vunpack.c.l.b16 %v31
  %v182 = vunpack.c.l.b16 %v32
  %v183 = vpack.c.b16 %v180, %v179
  %v184 = vpack.c.b16 %v182, %v181
  %v188 = vsel %vm77, %v171, 0
  %v191 = vsel %vm77, %v172, 0
  %v194 = vsel %vm77, %v173, 0
  %v197 = vsel %vm77, %v174, 0
  %199 = vmatprep.subr.bf16.mxu0 0
  %200 = vmatpush1.bf16.msra.mxu0 0
  %201 = vmatprep.subr.bf16.mxu0 0
  %202 = vmatpush1.bf16.msra.mxu0 0
  %203 = vmatprep.subr.bf16.mxu0 0
  %204 = vmatpush1.bf16.msra.mxu0 0
  %205 = vmatprep.subr.bf16.mxu0 0
  %206 = vmatpush1.bf16.msra.mxu0 0
  %207 = vmatprep.subr.bf16.mxu0 0
  %208 = vmatpush1.bf16.msra.mxu0 0
  %209 = vmatprep.subr.bf16.mxu0 0
  %210 = vmatpush1.bf16.msra.mxu0 0
  %211 = vmatprep.subr.bf16.mxu0 0
  %212 = vmatpush1.bf16.msra.mxu0 %v184
  %213 = vmatprep.subr.bf16.mxu0 0
  %214 = vmatpush1.bf16.msra.mxu0 %v183
  %215 = vmatprep.subr.bf16.mxu0 0
  %216 = vmatpush2.bf16.msra.mxu0 0
  %217 = vmatprep.subr.bf16.mxu0 0
  %218 = vmatpush2.bf16.msra.mxu0 0
  %219 = vmatprep.subr.bf16.mxu0 0
  %220 = vmatpush2.bf16.msra.mxu0 0
  %221 = vmatprep.subr.bf16.mxu0 0
  %222 = vmatpush2.bf16.msra.mxu0 0
  %223 = vmatprep.subr.bf16.mxu0 0
  %224 = vmatpush2.bf16.msra.mxu0 0
  %225 = vmatprep.subr.bf16.mxu0 0
  %226 = vmatpush2.bf16.msra.mxu0 0
  %227 = vmatprep.subr.bf16.mxu0 0
  %228 = vmatpush2.bf16.msra.mxu0 0
  %229 = vmatprep.subr.bf16.mxu0 0
  %230 = vmatpush2.bf16.msra.mxu0 0
  %231 = vmatprep.mubr.bf16.mxu0 0
  %232 = vmatmul.mubr.bf16.gmra.mxu0 %v188
  %v233 = vpop.f32.mrf.mxu0
  %v234 = vadd.f32 %v125, %v233
  %v235 = vpop.f32.mrf.mxu0
  %v236 = vpop.f32.mrf.mxu0
  %v237 = vadd.f32 %v128, %v236
  %v238 = vpop.f32.mrf.mxu0
  %239 = vmatprep.mubr.bf16.mxu0 0
  %240 = vmatmul.mubr.bf16.gmra.mxu0 %v191
  %v241 = vpop.f32.mrf.mxu0
  %v242 = vadd.f32 %v133, %v241
  %v243 = vpop.f32.mrf.mxu0
  %v244 = vpop.f32.mrf.mxu0
  %v245 = vadd.f32 %v136, %v244
  %v246 = vpop.f32.mrf.mxu0
  %247 = vmatprep.mubr.bf16.mxu0 0
  %248 = vmatmul.mubr.bf16.gmra.mxu0 %v194
  %v249 = vpop.f32.mrf.mxu0
  %v250 = vadd.f32 %v141, %v249
  %v251 = vpop.f32.mrf.mxu0
  %v252 = vpop.f32.mrf.mxu0
  %v253 = vadd.f32 %v144, %v252
  %v254 = vpop.f32.mrf.mxu0
  %255 = vmatprep.mubr.bf16.mxu0 0
  %256 = vmatmul.mubr.bf16.gmra.mxu0 %v197
  %v257 = vpop.f32.mrf.mxu0
  %v258 = vadd.f32 %v149, %v257
  %v259 = vpop.f32.mrf.mxu0
  %v260 = vpop.f32.mrf.mxu0
  %v261 = vadd.f32 %v152, %v260
  %v262 = vpop.f32.mrf.mxu0
  %263 = vdwg.mxu0
  %v264 = vld [vmem:[%s4] sm:$0x1]
  %v266 = vlaneseq
  %v267 = vshrl.u32 %v266, 7
  %v268 = vsub.s32 0, %v267
  %v269 = vrot.slane %v264, %v268
  %v271 = vadd.f32 %v234, %v269
  %v272 = vadd.f32 %v237, %v269
  %v273 = vadd.f32 %v242, %v269
  %v274 = vadd.f32 %v245, %v269
  %v275 = vadd.f32 %v250, %v269
  %v276 = vadd.f32 %v253, %v269
  %v277 = vadd.f32 %v258, %v269
  %v278 = vadd.f32 %v261, %v269
  %279 = vst [vmem:[%s5] sm:$0xff] %v271
  %280 = vst [vmem:[%s5 + $0x8] sm:$0xff] %v272
  %281 = vst [vmem:[%s5 + $0x10] sm:$0xff] %v273
  %282 = vst [vmem:[%s5 + $0x18] sm:$0xff] %v274
  %283 = vst [vmem:[%s5 + $0x20] sm:$0xff] %v275
  %284 = vst [vmem:[%s5 + $0x28] sm:$0xff] %v276
  %285 = vst [vmem:[%s5 + $0x30] sm:$0xff] %v277
  %286 = vst [vmem:[%s5 + $0x38] sm:$0xff] %v278
  // Predicated region
  $region22: #{decoder_forward.11} parent=0 // pred_check
    _
  $region23: #{decoder_forward.11} parent=0 // pred_check_branch
    %288 = sbr.rel (0) target = $region25
  $region24: #{decoder_forward.11} parent=0 // pred_region
    _
  $region25: #{decoder_forward.11} parent=0 // pred_fallthru
    _
  // Predicated region
  $region26: #{decoder_forward.11} parent=0 // pred_check
    _
  $region27: #{decoder_forward.11} parent=0 // pred_check_branch
    %290 = sbr.rel (0) target = $region29
  $region28: #{decoder_forward.11} parent=0 // pred_region
    _
  $region29: #{decoder_forward.11} parent=0 // pred_fallthru
    _

// kernel: decoder_forward.7
$region0: #{decoder_forward.7}
  #allocation0 [shape = 'u32[]', space=smem, size = 0x4, offset = 0x4, fixed_abs, tag = 'smem constant byte address 0x4 - core index']
  #allocation1 [shape = 'u32[144,128]{1,0:T(1,128)}', space=vmem, size = 0x12000, scoped, tag = 'internal scratch']
  #allocation2 [shape = 'f32[8,32]{1,0:T(8,128)}', space=vmem, size = 0x1000, scoped, tag = 'scratch operand']
  #allocation3 [shape = 'f32[8,32]{1,0:T(8,128)}', space=vmem, size = 0x1000, scoped, tag = 'scratch operand']
  #allocation4 [shape = 'f32[8,32]{1,0:T(8,128)}', space=vmem, size = 0x1000, scoped, tag = 'scratch operand']
  #allocation5 [shape = 'f32[8,32]{1,0:T(8,128)}', space=vmem, size = 0x1000, scoped, tag = 'scratch operand']
  %s0 = inlined_call_operand.vmem [shape: bf16[2,64,128], index: 0, kind: input, shape index: {}, may-alias: {0,1}]
  %s1 = inlined_call_operand.vmem [shape: bf16[2,64,128], index: 1, kind: input, shape index: {}, may-alias: {0,1}]
  %s2 = inlined_call_operand.vmem [shape: bf16[32,128], index: 2, kind: input, shape index: {}]
  %s3 = inlined_call_operand.vmem [shape: bf16[32,128], index: 3, kind: input, shape index: {}]
  %s4 = inlined_call_operand.vmem [shape: bf16[64,32], index: 4, kind: output, shape index: {0}]
  %s5 = inlined_call_operand.vmem [shape: bf16[64,32], index: 5, kind: output, shape index: {1}]
  %6 = xla_tuple %s4, %s5
  %s7 = sld [smem:[#allocation0]]
  $region38: #{decoder_forward.7} parent=0
    _
  %s9 = ssub.s32 1, %s7
  %s10 = scalar_select 0, %s9, %s7
  // Predicated region
  $region2: #{decoder_forward.7} parent=0 // pred_check
    _
  $region3: #{decoder_forward.7} parent=0 // pred_check_branch
    %12 = sbr.rel (0) target = $region5
  $region4: #{decoder_forward.7} parent=0 // pred_region
    _
  $region5: #{decoder_forward.7} parent=0 // pred_fallthru
    _
  // Predicated region
  $region6: #{decoder_forward.7} parent=0 // pred_check
    _
  $region7: #{decoder_forward.7} parent=0 // pred_check_branch
    %14 = sbr.rel (0) target = $region9
  $region8: #{decoder_forward.7} parent=0 // pred_region
    %s15 = ssub.s32 0, 0
    %s16 = smul.u32 8, %s15
    %p17 = scmp.lt.s32.totalorder %s16, 7
    %s18 = scalar_select %p17, %s16, 7
    %s19 = sadd.s32 %s18, 8
    %s20 = smul.addr %s19, 4
    %s21 = scalar_lea.vmem %s1, %s20
    %s22 = ssub.s32 0, 0
    %s23 = smul.u32 8, %s22
  $region9: #{decoder_forward.7} parent=0 // pred_fallthru
    _
  // Predicated region
  $region10: #{decoder_forward.7} parent=0 // pred_check
    _
  $region11: #{decoder_forward.7} parent=0 // pred_check_branch
    %25 = sbr.rel (0) target = $region13
  $region12: #{decoder_forward.7} parent=0 // pred_region
    _
  $region13: #{decoder_forward.7} parent=0 // pred_fallthru
    _
  // Predicated region
  $region14: #{decoder_forward.7} parent=0 // pred_check
    _
  $region15: #{decoder_forward.7} parent=0 // pred_check_branch
    %27 = sbr.rel (0) target = $region17
  $region16: #{decoder_forward.7} parent=0 // pred_region
    _
  $region17: #{decoder_forward.7} parent=0 // pred_fallthru
    _
  %s28 = ssub.s32 0, 0
  %s29 = smul.u32 8, %s28
  %p30 = scmp.lt.s32.totalorder %s29, 7
  %s31 = scalar_select %p30, %s29, 7
  %s32 = sadd.s32 %s31, 8
  %s33 = smul.addr %s32, 4
  %s34 = scalar_lea.vmem %s1, %s33
  %s35 = ssub.s32 0, 0
  %s36 = smul.u32 8, %s35
  %p37 = scmp.lt.s32.totalorder %s36, 7
  %s38 = scalar_select %p37, %s36, 7
  %s39 = smul.addr %s38, 4
  %s40 = scalar_lea.vmem %s5, %s39
  %s41 = ssub.s32 0, 0
  %s42 = smul.u32 8, %s41
  %p43 = scmp.lt.s32.totalorder %s42, 7
  %s44 = scalar_select %p43, %s42, 7
  %s45 = sadd.s32 %s44, 8
  %s46 = smul.addr %s45, 4
  %s47 = scalar_lea.vmem %s1, %s46
  %s48 = ssub.s32 0, 0
  %s49 = smul.u32 8, %s48
  %s50 = ssub.s32 0, 0
  %s51 = smul.u32 8, %s50
  %p52 = scmp.lt.s32.totalorder %s51, 7
  %s53 = scalar_select %p52, %s51, 7
  %s54 = smul.addr %s53, 4
  %s55 = scalar_lea.vmem %s5, %s54
  %s56 = ssub.s32 0, 0
  %s57 = smul.u32 8, %s56
  %p59 = scmp.eq.s32.totalorder 0, 0
  // Predicated region
  $region18: #{decoder_forward.7} parent=0 // pred_check
    %p60 = pneg %p59
  $region19: #{decoder_forward.7} parent=0 // pred_check_branch
    %62 = sbr.rel (%p60) target = $region21
  $region20: #{decoder_forward.7} parent=0 // pred_region
    %vm63 = vcmask 261120
    %64 = vst.msk [vmem:[#allocation2] sm:$0xff] %vm63, 0.0
    %65 = vst.msk [vmem:[#allocation3] sm:$0xff] %vm63, 0.0
    %66 = vst.msk [vmem:[#allocation4] sm:$0xff] %vm63, 0.0
    %67 = vst.msk [vmem:[#allocation5] sm:$0xff] %vm63, 0.0
  $region21: #{decoder_forward.7} parent=0 // pred_fallthru
    _
  %v68 = vld [vmem:[%s2] sm:$0xf]
  %v69 = vld [vmem:[%s2 + $0x4] sm:$0xf]
  %v70 = vld [vmem:[%s2 + $0x8] sm:$0xf]
  %v71 = vld [vmem:[%s2 + $0xc] sm:$0xf]
  %v72 = vld [vmem:[%s3] sm:$0xf]
  %v73 = vld [vmem:[%s3 + $0x4] sm:$0xf]
  %v74 = vld [vmem:[%s3 + $0x8] sm:$0xf]
  %v75 = vld [vmem:[%s3 + $0xc] sm:$0xf]
  %v76 = vld [vmem:[%s0] sm:$0xf]
  %v77 = vunpack.c.l.bf16 %v76
  %v78 = vld [vmem:[#allocation2] sm:$0xff]
  %v79 = vpack.c.bf16 %v78, %v78
  %v84 = vunpack.c.l.b16 %v68
  %v85 = vunpack.c.l.b16 %v69
  %v86 = vunpack.c.l.b16 %v70
  %v87 = vunpack.c.l.b16 %v71
  %v88 = vpack.c.b16 %v85, %v84
  %v89 = vpack.c.b16 %v87, %v86
  %vm92 = vcmask 261120
  %v94 = vsel %vm92, %v79, 0
  %96 = vmatprep.subr.bf16.mxu0 0
  %97 = vmatpush1.bf16.msra.mxu0 0
  %98 = vmatprep.subr.bf16.mxu0 0
  %99 = vmatpush1.bf16.msra.mxu0 0
  %100 = vmatprep.subr.bf16.mxu0 0
  %101 = vmatpush1.bf16.msra.mxu0 0
  %102 = vmatprep.subr.bf16.mxu0 0
  %103 = vmatpush1.bf16.msra.mxu0 0
  %104 = vmatprep.subr.bf16.mxu0 0
  %105 = vmatpush1.bf16.msra.mxu0 0
  %106 = vmatprep.subr.bf16.mxu0 0
  %107 = vmatpush1.bf16.msra.mxu0 0
  %108 = vmatprep.subr.bf16.mxu0 0
  %109 = vmatpush1.bf16.msra.mxu0 %v89
  %110 = vmatprep.subr.bf16.mxu0 0
  %111 = vmatpush1.bf16.msra.mxu0 %v88
  %112 = vmatprep.subr.bf16.mxu0 0
  %113 = vmatpush2.bf16.msra.mxu0 0
  %114 = vmatprep.subr.bf16.mxu0 0
  %115 = vmatpush2.bf16.msra.mxu0 0
  %116 = vmatprep.subr.bf16.mxu0 0
  %117 = vmatpush2.bf16.msra.mxu0 0
  %118 = vmatprep.subr.bf16.mxu0 0
  %119 = vmatpush2.bf16.msra.mxu0 0
  %120 = vmatprep.subr.bf16.mxu0 0
  %121 = vmatpush2.bf16.msra.mxu0 0
  %122 = vmatprep.subr.bf16.mxu0 0
  %123 = vmatpush2.bf16.msra.mxu0 0
  %124 = vmatprep.subr.bf16.mxu0 0
  %125 = vmatpush2.bf16.msra.mxu0 0
  %126 = vmatprep.subr.bf16.mxu0 0
  %127 = vmatpush2.bf16.msra.mxu0 0
  %128 = vmatprep.mubr.bf16.mxu0 0
  %129 = vmatmul.mubr.bf16.gmra.mxu0 %v94
  %v130 = vpop.f32.mrf.mxu0
  %v131 = vadd.f32 0.0, %v130
  %v132 = vpop.f32.mrf.mxu0
  %v133 = vpop.f32.mrf.mxu0
  %v134 = vpop.f32.mrf.mxu0
  %135 = vdwg.mxu0
  %v136 = vadd.f32 %v77, %v131
  %v137 = vmul.f32 %v136, 0.5
  %v138 = vtanh.pop %v137
  %v139 = vmul.f32 %v138, 0.5
  %v140 = vadd.f32 %v139, 0.5
  %v141 = vtanh.pop %v136
  %v142 = vld [vmem:[#allocation3] sm:$0xff]
  %144 = vrot.lane.b32.xlu0 %v142, 32
  %v145 = vpop.permute.xlu0 %144
  %v147 = vmul.f32 %v140, %v145
  %149 = vrot.lane.b32.xlu0 %v141, 64
  %v150 = vpop.permute.xlu0 %149
  %v152 = vmul.f32 %v140, %v150
  %154 = vrot.lane.b32.xlu0 %v152, 32
  %v155 = vpop.permute.xlu0 %154
  %v157 = vadd.f32 %v147, %v155
  %v158 = vtanh.pop %v157
  %160 = vrot.lane.b32.xlu0 %v158, 64
  %v161 = vpop.permute.xlu0 %160
  %v163 = vmul.f32 %v140, %v161
  %165 = vrot.lane.b32.xlu0 %v157, 96
  %v166 = vpop.permute.xlu0 %165
  %168 = vst.msk [vmem:[#allocation3] sm:$0xff] %vm92, %v166
  %170 = vrot.lane.b32.xlu0 %v163, 32
  %v171 = vpop.permute.xlu0 %170
  %173 = vst.msk [vmem:[#allocation2] sm:$0xff] %vm92, %v171
  %v174 = vpack.c.bf16 %v163, %v163
  %v176 = vunpack.c.l.b16 %v174
  %v177 = vpack.c.b16 %v176, %v176
  %178 = vrot.lane.b32.xlu0 %v177, 32
  %v179 = vpop.permute.xlu0 %178
  %vm181 = vcmask 257024
  %182 = vst.msk [vmem:[%s4] sm:$0xf] %vm181, %v179
  %v183 = vld [vmem:[%s47 + $0x1c] sm:$0xf]
  %v184 = vunpack.c.l.bf16 %v183
  %v185 = vld [vmem:[#allocation4] sm:$0xff]
  %v186 = vpack.c.bf16 %v185, %v185
  %v191 = vunpack.c.l.b16 %v72
  %v192 = vunpack.c.l.b16 %v73
  %v193 = vunpack.c.l.b16 %v74
  %v194 = vunpack.c.l.b16 %v75
  %v195 = vpack.c.b16 %v192, %v191
  %v196 = vpack.c.b16 %v194, %v193
  %v200 = vsel %vm92, %v186, 0
  %202 = vmatprep.subr.bf16.mxu0 0
  %203 = vmatpush1.bf16.msra.mxu0 0
  %204 = vmatprep.subr.bf16.mxu0 0
  %205 = vmatpush1.bf16.msra.mxu0 0
  %206 = vmatprep.subr.bf16.mxu0 0
  %207 = vmatpush1.bf16.msra.mxu0 0
  %208 = vmatprep.subr.bf16.mxu0 0
  %209 = vmatpush1.bf16.msra.mxu0 0
  %210 = vmatprep.subr.bf16.mxu0 0
  %211 = vmatpush1.bf16.msra.mxu0 0
  %212 = vmatprep.subr.bf16.mxu0 0
  %213 = vmatpush1.bf16.msra.mxu0 0
  %214 = vmatprep.subr.bf16.mxu0 0
  %215 = vmatpush1.bf16.msra.mxu0 %v196
  %216 = vmatprep.subr.bf16.mxu0 0
  %217 = vmatpush1.bf16.msra.mxu0 %v195
  %218 = vmatprep.subr.bf16.mxu0 0
  %219 = vmatpush2.bf16.msra.mxu0 0
  %220 = vmatprep.subr.bf16.mxu0 0
  %221 = vmatpush2.bf16.msra.mxu0 0
  %222 = vmatprep.subr.bf16.mxu0 0
  %223 = vmatpush2.bf16.msra.mxu0 0
  %224 = vmatprep.subr.bf16.mxu0 0
  %225 = vmatpush2.bf16.msra.mxu0 0
  %226 = vmatprep.subr.bf16.mxu0 0
  %227 = vmatpush2.bf16.msra.mxu0 0
  %228 = vmatprep.subr.bf16.mxu0 0
  %229 = vmatpush2.bf16.msra.mxu0 0
  %230 = vmatprep.subr.bf16.mxu0 0
  %231 = vmatpush2.bf16.msra.mxu0 0
  %232 = vmatprep.subr.bf16.mxu0 0
  %233 = vmatpush2.bf16.msra.mxu0 0
  %234 = vmatprep.mubr.bf16.mxu0 0
  %235 = vmatmul.mubr.bf16.gmra.mxu0 %v200
  %v236 = vpop.f32.mrf.mxu0
  %v237 = vadd.f32 0.0, %v236
  %v238 = vpop.f32.mrf.mxu0
  %v239 = vpop.f32.mrf.mxu0
  %v240 = vpop.f32.mrf.mxu0
  %241 = vdwg.mxu0
  %v242 = vadd.f32 %v184, %v237
  %v243 = vmul.f32 %v242, 0.5
  %v244 = vtanh.pop %v243
  %v245 = vmul.f32 %v244, 0.5
  %v246 = vadd.f32 %v245, 0.5
  %v247 = vtanh.pop %v242
  %v248 = vld [vmem:[#allocation5] sm:$0xff]
  %250 = vrot.lane.b32.xlu0 %v248, 32
  %v251 = vpop.permute.xlu0 %250
  %v253 = vmul.f32 %v246, %v251
  %255 = vrot.lane.b32.xlu0 %v247, 64
  %v256 = vpop.permute.xlu0 %255
  %v258 = vmul.f32 %v246, %v256
  %260 = vrot.lane.b32.xlu0 %v258, 32
  %v261 = vpop.permute.xlu0 %260
  %v263 = vadd.f32 %v253, %v261
  %v264 = vtanh.pop %v263
  %266 = vrot.lane.b32.xlu0 %v264, 64
  %v267 = vpop.permute.xlu0 %266
  %v269 = vmul.f32 %v246, %v267
  %271 = vrot.lane.b32.xlu0 %v263, 96
  %v272 = vpop.permute.xlu0 %271
  %274 = vst.msk [vmem:[#allocation5] sm:$0xff] %vm92, %v272
  %276 = vrot.lane.b32.xlu0 %v269, 32
  %v277 = vpop.permute.xlu0 %276
  %279 = vst.msk [vmem:[#allocation4] sm:$0xff] %vm92, %v277
  %v280 = vpack.c.bf16 %v269, %v269
  %v282 = vunpack.c.l.b16 %v280
  %v283 = vpack.c.b16 %v282, %v282
  %284 = vrot.lane.b32.xlu0 %v283, 32
  %v285 = vpop.permute.xlu0 %284
  %287 = vst.msk [vmem:[%s55 + $0x1c] sm:$0xf] %vm181, %v285
  %v288 = vld [vmem:[%s0 + $0x4] sm:$0xf]
  %v289 = vunpack.c.l.bf16 %v288
  %v290 = vld [vmem:[#allocation2] sm:$0xff]
  %v291 = vpack.c.bf16 %v290, %v290
  %v293 = vsel %vm92, %v291, 0
  %295 = vmatprep.subr.bf16.mxu0 0
  %296 = vmatpush1.bf16.msra.mxu0 0
  %297 = vmatprep.subr.bf16.mxu0 0
  %298 = vmatpush1.bf16.msra.mxu0 0
  %299 = vmatprep.subr.bf16.mxu0 0
  %300 = vmatpush1.bf16.msra.mxu0 0
  %301 = vmatprep.subr.bf16.mxu0 0
  %302 = vmatpush1.bf16.msra.mxu0 0
  %303 = vmatprep.subr.bf16.mxu0 0
  %304 = vmatpush1.bf16.msra.mxu0 0
  %305 = vmatprep.subr.bf16.mxu0 0
  %306 = vmatpush1.bf16.msra.mxu0 0
  %307 = vmatprep.subr.bf16.mxu0 0
  %308 = vmatpush1.bf16.msra.mxu0 %v89
  %309 = vmatprep.subr.bf16.mxu0 0
  %310 = vmatpush1.bf16.msra.mxu0 %v88
  %311 = vmatprep.subr.bf16.mxu0 0
  %312 = vmatpush2.bf16.msra.mxu0 0
  %313 = vmatprep.subr.bf16.mxu0 0
  %314 = vmatpush2.bf16.msra.mxu0 0
  %315 = vmatprep.subr.bf16.mxu0 0
  %316 = vmatpush2.bf16.msra.mxu0 0
  %317 = vmatprep.subr.bf16.mxu0 0
  %318 = vmatpush2.bf16.msra.mxu0 0
  %319 = vmatprep.subr.bf16.mxu0 0
  %320 = vmatpush2.bf16.msra.mxu0 0
  %321 = vmatprep.subr.bf16.mxu0 0
  %322 = vmatpush2.bf16.msra.mxu0 0
  %323 = vmatprep.subr.bf16.mxu0 0
  %324 = vmatpush2.bf16.msra.mxu0 0
  %325 = vmatprep.subr.bf16.mxu0 0
  %326 = vmatpush2.bf16.msra.mxu0 0
  %327 = vmatprep.mubr.bf16.mxu0 0
  %328 = vmatmul.mubr.bf16.gmra.mxu0 %v293
  %v329 = vpop.f32.mrf.mxu0
  %v330 = vadd.f32 0.0, %v329
  %v331 = vpop.f32.mrf.mxu0
  %v332 = vpop.f32.mrf.mxu0
  %v333 = vpop.f32.mrf.mxu0
  %334 = vdwg.mxu0
  %v335 = vadd.f32 %v289, %v330
  %v336 = vmul.f32 %v335, 0.5
  %v337 = vtanh.pop %v336
  %v338 = vmul.f32 %v337, 0.5
  %v339 = vadd.f32 %v338, 0.5
  %v340 = vtanh.pop %v335
  %v341 = vld [vmem:[#allocation3] sm:$0xff]
  %343 = vrot.lane.b32.xlu0 %v341, 32
  %v344 = vpop.permute.xlu0 %343
  %v346 = vmul.f32 %v339, %v344
  %348 = vrot.lane.b32.xlu0 %v340, 64
  %v349 = vpop.permute.xlu0 %348
  %v351 = vmul.f32 %v339, %v349
  %353 = vrot.lane.b32.xlu0 %v351, 32
  %v354 = vpop.permute.xlu0 %353
  %v356 = vadd.f32 %v346, %v354
  %v357 = vtanh.pop %v356
  %359 = vrot.lane.b32.xlu0 %v357, 64
  %v360 = vpop.permute.xlu0 %359
  %v362 = vmul.f32 %v339, %v360
  %364 = vrot.lane.b32.xlu0 %v356, 96
  %v365 = vpop.permute.xlu0 %364
  %367 = vst.msk [vmem:[#allocation3] sm:$0xff] %vm92, %v365
  %369 = vrot.lane.b32.xlu0 %v362, 32
  %v370 = vpop.permute.xlu0 %369
  %372 = vst.msk [vmem:[#allocation2] sm:$0xff] %vm92, %v370
  %v373 = vpack.c.bf16 %v362, %v362
  %v375 = vunpack.c.l.b16 %v373
  %v376 = vpack.c.b16 %v375, %v375
  %377 = vrot.lane.b32.xlu0 %v376, 32
  %v378 = vpop.permute.xlu0 %377
  %380 = vst.msk [vmem:[%s4 + $0x4] sm:$0xf] %vm181, %v378
  %v381 = vld [vmem:[%s47 + $0x18] sm:$0xf]
  %v382 = vunpack.c.l.bf16 %v381
  %v383 = vld [vmem:[#allocation4] sm:$0xff]
  %v384 = vpack.c.bf16 %v383, %v383
  %v386 = vsel %vm92, %v384, 0
  %388 = vmatprep.subr.bf16.mxu0 0
  %389 = vmatpush1.bf16.msra.mxu0 0
  %390 = vmatprep.subr.bf16.mxu0 0
  %391 = vmatpush1.bf16.msra.mxu0 0
  %392 = vmatprep.subr.bf16.mxu0 0
  %393 = vmatpush1.bf16.msra.mxu0 0
  %394 = vmatprep.subr.bf16.mxu0 0
  %395 = vmatpush1.bf16.msra.mxu0 0
  %396 = vmatprep.subr.bf16.mxu0 0
  %397 = vmatpush1.bf16.msra.mxu0 0
  %398 = vmatprep.subr.bf16.mxu0 0
  %399 = vmatpush1.bf16.msra.mxu0 0
  %400 = vmatprep.subr.bf16.mxu0 0
  %401 = vmatpush1.bf16.msra.mxu0 %v196
  %402 = vmatprep.subr.bf16.mxu0 0
  %403 = vmatpush1.bf16.msra.mxu0 %v195
  %404 = vmatprep.subr.bf16.mxu0 0
  %405 = vmatpush2.bf16.msra.mxu0 0
  %406 = vmatprep.subr.bf16.mxu0 0
  %407 = vmatpush2.bf16.msra.mxu0 0
  %408 = vmatprep.subr.bf16.mxu0 0
  %409 = vmatpush2.bf16.msra.mxu0 0
  %410 = vmatprep.subr.bf16.mxu0 0
  %411 = vmatpush2.bf16.msra.mxu0 0
  %412 = vmatprep.subr.bf16.mxu0 0
  %413 = vmatpush2.bf16.msra.mxu0 0
  %414 = vmatprep.subr.bf16.mxu0 0
  %415 = vmatpush2.bf16.msra.mxu0 0
  %416 = vmatprep.subr.bf16.mxu0 0
  %417 = vmatpush2.bf16.msra.mxu0 0
  %418 = vmatprep.subr.bf16.mxu0 0
  %419 = vmatpush2.bf16.msra.mxu0 0
  %420 = vmatprep.mubr.bf16.mxu0 0
  %421 = vmatmul.mubr.bf16.gmra.mxu0 %v386
  %v422 = vpop.f32.mrf.mxu0
  %v423 = vadd.f32 0.0, %v422
  %v424 = vpop.f32.mrf.mxu0
  %v425 = vpop.f32.mrf.mxu0
  %v426 = vpop.f32.mrf.mxu0
  %427 = vdwg.mxu0
  %v428 = vadd.f32 %v382, %v423
  %v429 = vmul.f32 %v428, 0.5
  %v430 = vtanh.pop %v429
  %v431 = vmul.f32 %v430, 0.5
  %v432 = vadd.f32 %v431, 0.5
  %v433 = vtanh.pop %v428
  %v434 = vld [vmem:[#allocation5] sm:$0xff]
  %436 = vrot.lane.b32.xlu0 %v434, 32
  %v437 = vpop.permute.xlu0 %436
  %v439 = vmul.f32 %v432, %v437
  %441 = vrot.lane.b32.xlu0 %v433, 64
  %v442 = vpop.permute.xlu0 %441
  %v444 = vmul.f32 %v432, %v442
  %446 = vrot.lane.b32.xlu0 %v444, 32
  %v447 = vpop.permute.xlu0 %446
  %v449 = vadd.f32 %v439, %v447
  %v450 = vtanh.pop %v449
  %452 = vrot.lane.b32.xlu0 %v450, 64
  %v453 = vpop.permute.xlu0 %452
  %v455 = vmul.f32 %v432, %v453
  %457 = vrot.lane.b32.xlu0 %v449, 96
  %v458 = vpop.permute.xlu0 %457
  %460 = vst.msk [vmem:[#allocation5] sm:$0xff] %vm92, %v458
  %462 = vrot.lane.b32.xlu0 %v455, 32
  %v463 = vpop.permute.xlu0 %462
  %465 = vst.msk [vmem:[#allocation4] sm:$0xff] %vm92, %v463
  %v466 = vpack.c.bf16 %v455, %v455
  %v468 = vunpack.c.l.b16 %v466
  %v469 = vpack.c.b16 %v468, %v468
  %470 = vrot.lane.b32.xlu0 %v469, 32
  %v471 = vpop.permute.xlu0 %470
  %473 = vst.msk [vmem:[%s55 + $0x18] sm:$0xf] %vm181, %v471
  %v474 = vld [vmem:[%s0 + $0x8] sm:$0xf]
  %v475 = vunpack.c.l.bf16 %v474
  %v476 = vld [vmem:[#allocation2] sm:$0xff]
  %v477 = vpack.c.bf16 %v476, %v476
  %v479 = vsel %vm92, %v477, 0
  %481 = vmatprep.subr.bf16.mxu0 0
  %482 = vmatpush1.bf16.msra.mxu0 0
  %483 = vmatprep.subr.bf16.mxu0 0
  %484 = vmatpush1.bf16.msra.mxu0 0
  %485 = vmatprep.subr.bf16.mxu0 0
  %486 = vmatpush1.bf16.msra.mxu0 0
  %487 = vmatprep.subr.bf16.mxu0 0
  %488 = vmatpush1.bf16.msra.mxu0 0
  %489 = vmatprep.subr.bf16.mxu0 0
  %490 = vmatpush1.bf16.msra.mxu0 0
  %491 = vmatprep.subr.bf16.mxu0 0
  %492 = vmatpush1.bf16.msra.mxu0 0
  %493 = vmatprep.subr.bf16.mxu0 0
  %494 = vmatpush1.bf16.msra.mxu0 %v89
  %495 = vmatprep.subr.bf16.mxu0 0
  %496 = vmatpush1.bf16.msra.mxu0 %v88
  %497 = vmatprep.subr.bf16.mxu0 0
  %498 = vmatpush2.bf16.msra.mxu0 0
  %499 = vmatprep.subr.bf16.mxu0 0
  %500 = vmatpush2.bf16.msra.mxu0 0
  %501 = vmatprep.subr.bf16.mxu0 0
  %502 = vmatpush2.bf16.msra.mxu0 0
  %503 = vmatprep.subr.bf16.mxu0 0
  %504 = vmatpush2.bf16.msra.mxu0 0
  %505 = vmatprep.subr.bf16.mxu0 0
  %506 = vmatpush2.bf16.msra.mxu0 0
  %507 = vmatprep.subr.bf16.mxu0 0
  %508 = vmatpush2.bf16.msra.mxu0 0
  %509 = vmatprep.subr.bf16.mxu0 0
  %510 = vmatpush2.bf16.msra.mxu0 0
  %511 = vmatprep.subr.bf16.mxu0 0
  %512 = vmatpush2.bf16.msra.mxu0 0
  %513 = vmatprep.mubr.bf16.mxu0 0
  %514 = vmatmul.mubr.bf16.gmra.mxu0 %v479
  %v515 = vpop.f32.mrf.mxu0
  %v516 = vadd.f32 0.0, %v515
  %v517 = vpop.f32.mrf.mxu0
  %v518 = vpop.f32.mrf.mxu0
  %v519 = vpop.f32.mrf.mxu0
  %520 = vdwg.mxu0
  %v521 = vadd.f32 %v475, %v516
  %v522 = vmul.f32 %v521, 0.5
  %v523 = vtanh.pop %v522
  %v524 = vmul.f32 %v523, 0.5
  %v525 = vadd.f32 %v524, 0.5
  %v526 = vtanh.pop %v521
  %v527 = vld [vmem:[#allocation3] sm:$0xff]
  %529 = vrot.lane.b32.xlu0 %v527, 32
  %v530 = vpop.permute.xlu0 %529
  %v532 = vmul.f32 %v525, %v530
  %534 = vrot.lane.b32.xlu0 %v526, 64
  %v535 = vpop.permute.xlu0 %534
  %v537 = vmul.f32 %v525, %v535
  %539 = vrot.lane.b32.xlu0 %v537, 32
  %v540 = vpop.permute.xlu0 %539
  %v542 = vadd.f32 %v532, %v540
  %v543 = vtanh.pop %v542
  %545 = vrot.lane.b32.xlu0 %v543, 64
  %v546 = vpop.permute.xlu0 %545
  %v548 = vmul.f32 %v525, %v546
  %550 = vrot.lane.b32.xlu0 %v542, 96
  %v551 = vpop.permute.xlu0 %550
  %553 = vst.msk [vmem:[#allocation3] sm:$0xff] %vm92, %v551
  %555 = vrot.lane.b32.xlu0 %v548, 32
  %v556 = vpop.permute.xlu0 %555
  %558 = vst.msk [vmem:[#allocation2] sm:$0xff] %vm92, %v556
  %v559 = vpack.c.bf16 %v548, %v548
  %v561 = vunpack.c.l.b16 %v559
  %v562 = vpack.c.b16 %v561, %v561
  %563 = vrot.lane.b32.xlu0 %v562, 32
  %v564 = vpop.permute.xlu0 %563
  %566 = vst.msk [vmem:[%s4 + $0x8] sm:$0xf] %vm181, %v564
  %v567 = vld [vmem:[%s47 + $0x14] sm:$0xf]
  %v568 = vunpack.c.l.bf16 %v567
  %v569 = vld [vmem:[#allocation4] sm:$0xff]
  %v570 = vpack.c.bf16 %v569, %v569
  %v572 = vsel %vm92, %v570, 0
  %574 = vmatprep.subr.bf16.mxu0 0
  %575 = vmatpush1.bf16.msra.mxu0 0
  %576 = vmatprep.subr.bf16.mxu0 0
  %577 = vmatpush1.bf16.msra.mxu0 0
  %578 = vmatprep.subr.bf16.mxu0 0
  %579 = vmatpush1.bf16.msra.mxu0 0
  %580 = vmatprep.subr.bf16.mxu0 0
  %581 = vmatpush1.bf16.msra.mxu0 0
  %582 = vmatprep.subr.bf16.mxu0 0
  %583 = vmatpush1.bf16.msra.mxu0 0
  %584 = vmatprep.subr.bf16.mxu0 0
  %585 = vmatpush1.bf16.msra.mxu0 0
  %586 = vmatprep.subr.bf16.mxu0 0
  %587 = vmatpush1.bf16.msra.mxu0 %v196
  %588 = vmatprep.subr.bf16.mxu0 0
  %589 = vmatpush1.bf16.msra.mxu0 %v195
  %590 = vmatprep.subr.bf16.mxu0 0
  %591 = vmatpush2.bf16.msra.mxu0 0
  %592 = vmatprep.subr.bf16.mxu0 0
  %593 = vmatpush2.bf16.msra.mxu0 0
  %594 = vmatprep.subr.bf16.mxu0 0
  %595 = vmatpush2.bf16.msra.mxu0 0
  %596 = vmatprep.subr.bf16.mxu0 0
  %597 = vmatpush2.bf16.msra.mxu0 0
  %598 = vmatprep.subr.bf16.mxu0 0
  %599 = vmatpush2.bf16.msra.mxu0 0
  %600 = vmatprep.subr.bf16.mxu0 0
  %601 = vmatpush2.bf16.msra.mxu0 0
  %602 = vmatprep.subr.bf16.mxu0 0
  %603 = vmatpush2.bf16.msra.mxu0 0
  %604 = vmatprep.subr.bf16.mxu0 0
  %605 = vmatpush2.bf16.msra.mxu0 0
  %606 = vmatprep.mubr.bf16.mxu0 0
  %607 = vmatmul.mubr.bf16.gmra.mxu0 %v572
  %v608 = vpop.f32.mrf.mxu0
  %v609 = vadd.f32 0.0, %v608
  %v610 = vpop.f32.mrf.mxu0
  %v611 = vpop.f32.mrf.mxu0
  %v612 = vpop.f32.mrf.mxu0
  %613 = vdwg.mxu0
  %v614 = vadd.f32 %v568, %v609
  %v615 = vmul.f32 %v614, 0.5
  %v616 = vtanh.pop %v615
  %v617 = vmul.f32 %v616, 0.5
  %v618 = vadd.f32 %v617, 0.5
  %v619 = vtanh.pop %v614
  %v620 = vld [vmem:[#allocation5] sm:$0xff]
  %622 = vrot.lane.b32.xlu0 %v620, 32
  %v623 = vpop.permute.xlu0 %622
  %v625 = vmul.f32 %v618, %v623
  %627 = vrot.lane.b32.xlu0 %v619, 64
  %v628 = vpop.permute.xlu0 %627
  %v630 = vmul.f32 %v618, %v628
  %632 = vrot.lane.b32.xlu0 %v630, 32
  %v633 = vpop.permute.xlu0 %632
  %v635 = vadd.f32 %v625, %v633
  %v636 = vtanh.pop %v635
  %638 = vrot.lane.b32.xlu0 %v636, 64
  %v639 = vpop.permute.xlu0 %638
  %v641 = vmul.f32 %v618, %v639
  %643 = vrot.lane.b32.xlu0 %v635, 96
  %v644 = vpop.permute.xlu0 %643
  %646 = vst.msk [vmem:[#allocation5] sm:$0xff] %vm92, %v644
  %648 = vrot.lane.b32.xlu0 %v641, 32
  %v649 = vpop.permute.xlu0 %648
  %651 = vst.msk [vmem:[#allocation4] sm:$0xff] %vm92, %v649
  %v652 = vpack.c.bf16 %v641, %v641
  %v654 = vunpack.c.l.b16 %v652
  %v655 = vpack.c.b16 %v654, %v654
  %656 = vrot.lane.b32.xlu0 %v655, 32
  %v657 = vpop.permute.xlu0 %656
  %659 = vst.msk [vmem:[%s55 + $0x14] sm:$0xf] %vm181, %v657
  %v660 = vld [vmem:[%s0 + $0xc] sm:$0xf]
  %v661 = vunpack.c.l.bf16 %v660
  %v662 = vld [vmem:[#allocation2] sm:$0xff]
  %v663 = vpack.c.bf16 %v662, %v662
  %v665 = vsel %vm92, %v663, 0
  %667 = vmatprep.subr.bf16.mxu0 0
  %668 = vmatpush1.bf16.msra.mxu0 0
  %669 = vmatprep.subr.bf16.mxu0 0
  %670 = vmatpush1.bf16.msra.mxu0 0
  %671 = vmatprep.subr.bf16.mxu0 0
  %672 = vmatpush1.bf16.msra.mxu0 0
  %673 = vmatprep.subr.bf16.mxu0 0
  %674 = vmatpush1.bf16.msra.mxu0 0
  %675 = vmatprep.subr.bf16.mxu0 0
  %676 = vmatpush1.bf16.msra.mxu0 0
  %677 = vmatprep.subr.bf16.mxu0 0
  %678 = vmatpush1.bf16.msra.mxu0 0
  %679 = vmatprep.subr.bf16.mxu0 0
  %680 = vmatpush1.bf16.msra.mxu0 %v89
  %681 = vmatprep.subr.bf16.mxu0 0
  %682 = vmatpush1.bf16.msra.mxu0 %v88
  %683 = vmatprep.subr.bf16.mxu0 0
  %684 = vmatpush2.bf16.msra.mxu0 0
  %685 = vmatprep.subr.bf16.mxu0 0
  %686 = vmatpush2.bf16.msra.mxu0 0
  %687 = vmatprep.subr.bf16.mxu0 0
  %688 = vmatpush2.bf16.msra.mxu0 0
  %689 = vmatprep.subr.bf16.mxu0 0
  %690 = vmatpush2.bf16.msra.mxu0 0
  %691 = vmatprep.subr.bf16.mxu0 0
  %692 = vmatpush2.bf16.msra.mxu0 0
  %693 = vmatprep.subr.bf16.mxu0 0
  %694 = vmatpush2.bf16.msra.mxu0 0
  %695 = vmatprep.subr.bf16.mxu0 0
  %696 = vmatpush2.bf16.msra.mxu0 0
  %697 = vmatprep.subr.bf16.mxu0 0
  %698 = vmatpush2.bf16.msra.mxu0 0
  %699 = vmatprep.mubr.bf16.mxu0 0
  %700 = vmatmul.mubr.bf16.gmra.mxu0 %v665
  %v701 = vpop.f32.mrf.mxu0
  %v702 = vadd.f32 0.0, %v701
  %v703 = vpop.f32.mrf.mxu0
  %v704 = vpop.f32.mrf.mxu0
  %v705 = vpop.f32.mrf.mxu0
  %706 = vdwg.mxu0
  %v707 = vadd.f32 %v661, %v702
  %v708 = vmul.f32 %v707, 0.5
  %v709 = vtanh.pop %v708
  %v710 = vmul.f32 %v709, 0.5
  %v711 = vadd.f32 %v710, 0.5
  %v712 = vtanh.pop %v707
  %v713 = vld [vmem:[#allocation3] sm:$0xff]
  %715 = vrot.lane.b32.xlu0 %v713, 32
  %v716 = vpop.permute.xlu0 %715
  %v718 = vmul.f32 %v711, %v716
  %720 = vrot.lane.b32.xlu0 %v712, 64
  %v721 = vpop.permute.xlu0 %720
  %v723 = vmul.f32 %v711, %v721
  %725 = vrot.lane.b32.xlu0 %v723, 32
  %v726 = vpop.permute.xlu0 %725
  %v728 = vadd.f32 %v718, %v726
  %v729 = vtanh.pop %v728
  %731 = vrot.lane.b32.xlu0 %v729, 64
  %v732 = vpop.permute.xlu0 %731
  %v734 = vmul.f32 %v711, %v732
  %736 = vrot.lane.b32.xlu0 %v728, 96
  %v737 = vpop.permute.xlu0 %736
  %739 = vst.msk [vmem:[#allocation3] sm:$0xff] %vm92, %v737
  %741 = vrot.lane.b32.xlu0 %v734, 32
  %v742 = vpop.permute.xlu0 %741
  %744 = vst.msk [vmem:[#allocation2] sm:$0xff] %vm92, %v742
  %v745 = vpack.c.bf16 %v734, %v734
  %v747 = vunpack.c.l.b16 %v745
  %v748 = vpack.c.b16 %v747, %v747
  %749 = vrot.lane.b32.xlu0 %v748, 32
  %v750 = vpop.permute.xlu0 %749
  %752 = vst.msk [vmem:[%s4 + $0xc] sm:$0xf] %vm181, %v750
  %v753 = vld [vmem:[%s47 + $0x10] sm:$0xf]
  %v754 = vunpack.c.l.bf16 %v753
  %v755 = vld [vmem:[#allocation4] sm:$0xff]
  %v756 = vpack.c.bf16 %v755, %v755
  %v758 = vsel %vm92, %v756, 0
  %760 = vmatprep.subr.bf16.mxu0 0
  %761 = vmatpush1.bf16.msra.mxu0 0
  %762 = vmatprep.subr.bf16.mxu0 0
  %763 = vmatpush1.bf16.msra.mxu0 0
  %764 = vmatprep.subr.bf16.mxu0 0
  %765 = vmatpush1.bf16.msra.mxu0 0
  %766 = vmatprep.subr.bf16.mxu0 0
  %767 = vmatpush1.bf16.msra.mxu0 0
  %768 = vmatprep.subr.bf16.mxu0 0
  %769 = vmatpush1.bf16.msra.mxu0 0
  %770 = vmatprep.subr.bf16.mxu0 0
  %771 = vmatpush1.bf16.msra.mxu0 0
  %772 = vmatprep.subr.bf16.mxu0 0
  %773 = vmatpush1.bf16.msra.mxu0 %v196
  %774 = vmatprep.subr.bf16.mxu0 0
  %775 = vmatpush1.bf16.msra.mxu0 %v195
  %776 = vmatprep.subr.bf16.mxu0 0
  %777 = vmatpush2.bf16.msra.mxu0 0
  %778 = vmatprep.subr.bf16.mxu0 0
  %779 = vmatpush2.bf16.msra.mxu0 0
  %780 = vmatprep.subr.bf16.mxu0 0
  %781 = vmatpush2.bf16.msra.mxu0 0
  %782 = vmatprep.subr.bf16.mxu0 0
  %783 = vmatpush2.bf16.msra.mxu0 0
  %784 = vmatprep.subr.bf16.mxu0 0
  %785 = vmatpush2.bf16.msra.mxu0 0
  %786 = vmatprep.subr.bf16.mxu0 0
  %787 = vmatpush2.bf16.msra.mxu0 0
  %788 = vmatprep.subr.bf16.mxu0 0
  %789 = vmatpush2.bf16.msra.mxu0 0
  %790 = vmatprep.subr.bf16.mxu0 0
  %791 = vmatpush2.bf16.msra.mxu0 0
  %792 = vmatprep.mubr.bf16.mxu0 0
  %793 = vmatmul.mubr.bf16.gmra.mxu0 %v758
  %v794 = vpop.f32.mrf.mxu0
  %v795 = vadd.f32 0.0, %v794
  %v796 = vpop.f32.mrf.mxu0
  %v797 = vpop.f32.mrf.mxu0
  %v798 = vpop.f32.mrf.mxu0
  %799 = vdwg.mxu0
  %v800 = vadd.f32 %v754, %v795
  %v801 = vmul.f32 %v800, 0.5
  %v802 = vtanh.pop %v801
  %v803 = vmul.f32 %v802, 0.5
  %v804 = vadd.f32 %v803, 0.5
  %v805 = vtanh.pop %v800
  %v806 = vld [vmem:[#allocation5] sm:$0xff]
  %808 = vrot.lane.b32.xlu0 %v806, 32
  %v809 = vpop.permute.xlu0 %808
  %v811 = vmul.f32 %v804, %v809
  %813 = vrot.lane.b32.xlu0 %v805, 64
  %v814 = vpop.permute.xlu0 %813
  %v816 = vmul.f32 %v804, %v814
  %818 = vrot.lane.b32.xlu0 %v816, 32
  %v819 = vpop.permute.xlu0 %818
  %v821 = vadd.f32 %v811, %v819
  %v822 = vtanh.pop %v821
  %824 = vrot.lane.b32.xlu0 %v822, 64
  %v825 = vpop.permute.xlu0 %824
  %v827 = vmul.f32 %v804, %v825
  %829 = vrot.lane.b32.xlu0 %v821, 96
  %v830 = vpop.permute.xlu0 %829
  %832 = vst.msk [vmem:[#allocation5] sm:$0xff] %vm92, %v830
  %834 = vrot.lane.b32.xlu0 %v827, 32
  %v835 = vpop.permute.xlu0 %834
  %837 = vst.msk [vmem:[#allocation4] sm:$0xff] %vm92, %v835
  %v838 = vpack.c.bf16 %v827, %v827
  %v840 = vunpack.c.l.b16 %v838
  %v841 = vpack.c.b16 %v840, %v840
  %842 = vrot.lane.b32.xlu0 %v841, 32
  %v843 = vpop.permute.xlu0 %842
  %845 = vst.msk [vmem:[%s55 + $0x10] sm:$0xf] %vm181, %v843
  %v846 = vld [vmem:[%s0 + $0x10] sm:$0xf]
  %v847 = vunpack.c.l.bf16 %v846
  %v848 = vld [vmem:[#allocation2] sm:$0xff]
  %v849 = vpack.c.bf16 %v848, %v848
  %v851 = vsel %vm92, %v849, 0
  %853 = vmatprep.subr.bf16.mxu0 0
  %854 = vmatpush1.bf16.msra.mxu0 0
  %855 = vmatprep.subr.bf16.mxu0 0
  %856 = vmatpush1.bf16.msra.mxu0 0
  %857 = vmatprep.subr.bf16.mxu0 0
  %858 = vmatpush1.bf16.msra.mxu0 0
  %859 = vmatprep.subr.bf16.mxu0 0
  %860 = vmatpush1.bf16.msra.mxu0 0
  %861 = vmatprep.subr.bf16.mxu0 0
  %862 = vmatpush1.bf16.msra.mxu0 0
  %863 = vmatprep.subr.bf16.mxu0 0
  %864 = vmatpush1.bf16.msra.mxu0 0
  %865 = vmatprep.subr.bf16.mxu0 0
  %866 = vmatpush1.bf16.msra.mxu0 %v89
  %867 = vmatprep.subr.bf16.mxu0 0
  %868 = vmatpush1.bf16.msra.mxu0 %v88
  %869 = vmatprep.subr.bf16.mxu0 0
  %870 = vmatpush2.bf16.msra.mxu0 0
  %871 = vmatprep.subr.bf16.mxu0 0
  %872 = vmatpush2.bf16.msra.mxu0 0
  %873 = vmatprep.subr.bf16.mxu0 0
  %874 = vmatpush2.bf16.msra.mxu0 0
  %875 = vmatprep.subr.bf16.mxu0 0
  %876 = vmatpush2.bf16.msra.mxu0 0
  %877 = vmatprep.subr.bf16.mxu0 0
  %878 = vmatpush2.bf16.msra.mxu0 0
  %879 = vmatprep.subr.bf16.mxu0 0
  %880 = vmatpush2.bf16.msra.mxu0 0
  %881 = vmatprep.subr.bf16.mxu0 0
  %882 = vmatpush2.bf16.msra.mxu0 0
  %883 = vmatprep.subr.bf16.mxu0 0
  %884 = vmatpush2.bf16.msra.mxu0 0
  %885 = vmatprep.mubr.bf16.mxu0 0
  %886 = vmatmul.mubr.bf16.gmra.mxu0 %v851
  %v887 = vpop.f32.mrf.mxu0
  %v888 = vadd.f32 0.0, %v887
  %v889 = vpop.f32.mrf.mxu0
  %v890 = vpop.f32.mrf.mxu0
  %v891 = vpop.f32.mrf.mxu0
  %892 = vdwg.mxu0
  %v893 = vadd.f32 %v847, %v888
  %v894 = vmul.f32 %v893, 0.5
  %v895 = vtanh.pop %v894
  %v896 = vmul.f32 %v895, 0.5
  %v897 = vadd.f32 %v896, 0.5
  %v898 = vtanh.pop %v893
  %v899 = vld [vmem:[#allocation3] sm:$0xff]
  %901 = vrot.lane.b32.xlu0 %v899, 32
  %v902 = vpop.permute.xlu0 %901
  %v904 = vmul.f32 %v897, %v902
  %906 = vrot.lane.b32.xlu0 %v898, 64
  %v907 = vpop.permute.xlu0 %906
  %v909 = vmul.f32 %v897, %v907
  %911 = vrot.lane.b32.xlu0 %v909, 32
  %v912 = vpop.permute.xlu0 %911
  %v914 = vadd.f32 %v904, %v912
  %v915 = vtanh.pop %v914
  %917 = vrot.lane.b32.xlu0 %v915, 64
  %v918 = vpop.permute.xlu0 %917
  %v920 = vmul.f32 %v897, %v918
  %922 = vrot.lane.b32.xlu0 %v914, 96
  %v923 = vpop.permute.xlu0 %922
  %925 = vst.msk [vmem:[#allocation3] sm:$0xff] %vm92, %v923
  %927 = vrot.lane.b32.xlu0 %v920, 32
  %v928 = vpop.permute.xlu0 %927
  %930 = vst.msk [vmem:[#allocation2] sm:$0xff] %vm92, %v928
  %v931 = vpack.c.bf16 %v920, %v920
  %v933 = vunpack.c.l.b16 %v931
  %v934 = vpack.c.b16 %v933, %v933
  %935 = vrot.lane.b32.xlu0 %v934, 32
  %v936 = vpop.permute.xlu0 %935
  %938 = vst.msk [vmem:[%s4 + $0x10] sm:$0xf] %vm181, %v936
  %v939 = vld [vmem:[%s47 + $0xc] sm:$0xf]
  %v940 = vunpack.c.l.bf16 %v939
  %v941 = vld [vmem:[#allocation4] sm:$0xff]
  %v942 = vpack.c.bf16 %v941, %v941
  %v944 = vsel %vm92, %v942, 0
  %946 = vmatprep.subr.bf16.mxu0 0
  %947 = vmatpush1.bf16.msra.mxu0 0
  %948 = vmatprep.subr.bf16.mxu0 0
  %949 = vmatpush1.bf16.msra.mxu0 0
  %950 = vmatprep.subr.bf16.mxu0 0
  %951 = vmatpush1.bf16.msra.mxu0 0
  %952 = vmatprep.subr.bf16.mxu0 0
  %953 = vmatpush1.bf16.msra.mxu0 0
  %954 = vmatprep.subr.bf16.mxu0 0
  %955 = vmatpush1.bf16.msra.mxu0 0
  %956 = vmatprep.subr.bf16.mxu0 0
  %957 = vmatpush1.bf16.msra.mxu0 0
  %958 = vmatprep.subr.bf16.mxu0 0
  %959 = vmatpush1.bf16.msra.mxu0 %v196
  %960 = vmatprep.subr.bf16.mxu0 0
  %961 = vmatpush1.bf16.msra.mxu0 %v195
  %962 = vmatprep.subr.bf16.mxu0 0
  %963 = vmatpush2.bf16.msra.mxu0 0
  %964 = vmatprep.subr.bf16.mxu0 0
  %965 = vmatpush2.bf16.msra.mxu0 0
  %966 = vmatprep.subr.bf16.mxu0 0
  %967 = vmatpush2.bf16.msra.mxu0 0
  %968 = vmatprep.subr.bf16.mxu0 0
  %969 = vmatpush2.bf16.msra.mxu0 0
  %970 = vmatprep.subr.bf16.mxu0 0
  %971 = vmatpush2.bf16.msra.mxu0 0
  %972 = vmatprep.subr.bf16.mxu0 0
  %973 = vmatpush2.bf16.msra.mxu0 0
  %974 = vmatprep.subr.bf16.mxu0 0
  %975 = vmatpush2.bf16.msra.mxu0 0
  %976 = vmatprep.subr.bf16.mxu0 0
  %977 = vmatpush2.bf16.msra.mxu0 0
  %978 = vmatprep.mubr.bf16.mxu0 0
  %979 = vmatmul.mubr.bf16.gmra.mxu0 %v944
  %v980 = vpop.f32.mrf.mxu0
  %v981 = vadd.f32 0.0, %v980
  %v982 = vpop.f32.mrf.mxu0
  %v983 = vpop.f32.mrf.mxu0
  %v984 = vpop.f32.mrf.mxu0
  %985 = vdwg.mxu0
  %v986 = vadd.f32 %v940, %v981
  %v987 = vmul.f32 %v986, 0.5
  %v988 = vtanh.pop %v987
  %v989 = vmul.f32 %v988, 0.5
  %v990 = vadd.f32 %v989, 0.5
  %v991 = vtanh.pop %v986
  %v992 = vld [vmem:[#allocation5] sm:$0xff]
  %994 = vrot.lane.b32.xlu0 %v992, 32
  %v995 = vpop.permute.xlu0 %994
  %v997 = vmul.f32 %v990, %v995
  %999 = vrot.lane.b32.xlu0 %v991, 64
  %v1000 = vpop.permute.xlu0 %999
  %v1002 = vmul.f32 %v990, %v1000
  %1004 = vrot.lane.b32.xlu0 %v1002, 32
  %v1005 = vpop.permute.xlu0 %1004
  %v1007 = vadd.f32 %v997, %v1005
  %v1008 = vtanh.pop %v1007
  %1010 = vrot.lane.b32.xlu0 %v1008, 64
  %v1011 = vpop.permute.xlu0 %1010
  %v1013 = vmul.f32 %v990, %v1011
  %1015 = vrot.lane.b32.xlu0 %v1007, 96
  %v1016 = vpop.permute.xlu0 %1015
  %1018 = vst.msk [vmem:[#allocation5] sm:$0xff] %vm92, %v1016
  %1020 = vrot.lane.b32.xlu0 %v1013, 32
  %v1021 = vpop.permute.xlu0 %1020
  %1023 = vst.msk [vmem:[#allocation4] sm:$0xff] %vm92, %v1021
  %v1024 = vpack.c.bf16 %v1013, %v1013
  %v1026 = vunpack.c.l.b16 %v1024
  %v1027 = vpack.c.b16 %v1026, %v1026
  %1028 = vrot.lane.b32.xlu0 %v1027, 32
  %v1029 = vpop.permute.xlu0 %1028
  %1031 = vst.msk [vmem:[%s55 + $0xc] sm:$0xf] %vm181, %v1029
  %v1032 = vld [vmem:[%s0 + $0x14] sm:$0xf]
  %v1033 = vunpack.c.l.bf16 %v1032
  %v1034 = vld [vmem:[#allocation2] sm:$0xff]
  %v1035 = vpack.c.bf16 %v1034, %v1034
  %v1037 = vsel %vm92, %v1035, 0
  %1039 = vmatprep.subr.bf16.mxu0 0
  %1040 = vmatpush1.bf16.msra.mxu0 0
  %1041 = vmatprep.subr.bf16.mxu0 0
  %1042 = vmatpush1.bf16.msra.mxu0 0
  %1043 = vmatprep.subr.bf16.mxu0 0
  %1044 = vmatpush1.bf16.msra.mxu0 0
  %1045 = vmatprep.subr.bf16.mxu0 0
  %1046 = vmatpush1.bf16.msra.mxu0 0
  %1047 = vmatprep.subr.bf16.mxu0 0
  %1048 = vmatpush1.bf16.msra.mxu0 0
  %1049 = vmatprep.subr.bf16.mxu0 0
  %1050 = vmatpush1.bf16.msra.mxu0 0
  %1051 = vmatprep.subr.bf16.mxu0 0
  %1052 = vmatpush1.bf16.msra.mxu0 %v89
  %1053 = vmatprep.subr.bf16.mxu0 0
  %1054 = vmatpush1.bf16.msra.mxu0 %v88
  %1055 = vmatprep.subr.bf16.mxu0 0
  %1056 = vmatpush2.bf16.msra.mxu0 0
  %1057 = vmatprep.subr.bf16.mxu0 0
  %1058 = vmatpush2.bf16.msra.mxu0 0
  %1059 = vmatprep.subr.bf16.mxu0 0
  %1060 = vmatpush2.bf16.msra.mxu0 0
  %1061 = vmatprep.subr.bf16.mxu0 0
  %1062 = vmatpush2.bf16.msra.mxu0 0
  %1063 = vmatprep.subr.bf16.mxu0 0
  %1064 = vmatpush2.bf16.msra.mxu0 0
  %1065 = vmatprep.subr.bf16.mxu0 0
  %1066 = vmatpush2.bf16.msra.mxu0 0
  %1067 = vmatprep.subr.bf16.mxu0 0
  %1068 = vmatpush2.bf16.msra.mxu0 0
  %1069 = vmatprep.subr.bf16.mxu0 0
  %1070 = vmatpush2.bf16.msra.mxu0 0
  %1071 = vmatprep.mubr.bf16.mxu0 0
  %1072 = vmatmul.mubr.bf16.gmra.mxu0 %v1037
  %v1073 = vpop.f32.mrf.mxu0
  %v1074 = vadd.f32 0.0, %v1073
  %v1075 = vpop.f32.mrf.mxu0
  %v1076 = vpop.f32.mrf.mxu0
  %v1077 = vpop.f32.mrf.mxu0
  %1078 = vdwg.mxu0
  %v1079 = vadd.f32 %v1033, %v1074
  %v1080 = vmul.f32 %v1079, 0.5
  %v1081 = vtanh.pop %v1080
  %v1082 = vmul.f32 %v1081, 0.5
  %v1083 = vadd.f32 %v1082, 0.5
  %v1084 = vtanh.pop %v1079
  %v1085 = vld [vmem:[#allocation3] sm:$0xff]
  %1087 = vrot.lane.b32.xlu0 %v1085, 32
  %v1088 = vpop.permute.xlu0 %1087
  %v1090 = vmul.f32 %v1083, %v1088
  %1092 = vrot.lane.b32.xlu0 %v1084, 64
  %v1093 = vpop.permute.xlu0 %1092
  %v1095 = vmul.f32 %v1083, %v1093
  %1097 = vrot.lane.b32.xlu0 %v1095, 32
  %v1098 = vpop.permute.xlu0 %1097
  %v1100 = vadd.f32 %v1090, %v1098
  %v1101 = vtanh.pop %v1100
  %1103 = vrot.lane.b32.xlu0 %v1101, 64
  %v1104 = vpop.permute.xlu0 %1103
  %v1106 = vmul.f32 %v1083, %v1104
  %1108 = vrot.lane.b32.xlu0 %v1100, 96
  %v1109 = vpop.permute.xlu0 %1108
  %1111 = vst.msk [vmem:[#allocation3] sm:$0xff] %vm92, %v1109
  %1113 = vrot.lane.b32.xlu0 %v1106, 32
  %v1114 = vpop.permute.xlu0 %1113
  %1116 = vst.msk [vmem:[#allocation2] sm:$0xff] %vm92, %v1114
  %v1117 = vpack.c.bf16 %v1106, %v1106
  %v1119 = vunpack.c.l.b16 %v1117
  %v1120 = vpack.c.b16 %v1119, %v1119
  %1121 = vrot.lane.b32.xlu0 %v1120, 32
  %v1122 = vpop.permute.xlu0 %1121
  %1124 = vst.msk [vmem:[%s4 + $0x14] sm:$0xf] %vm181, %v1122
  %v1125 = vld [vmem:[%s47 + $0x8] sm:$0xf]
  %v1126 = vunpack.c.l.bf16 %v1125
  %v1127 = vld [vmem:[#allocation4] sm:$0xff]
  %v1128 = vpack.c.bf16 %v1127, %v1127
  %v1130 = vsel %vm92, %v1128, 0
  %1132 = vmatprep.subr.bf16.mxu0 0
  %1133 = vmatpush1.bf16.msra.mxu0 0
  %1134 = vmatprep.subr.bf16.mxu0 0
  %1135 = vmatpush1.bf16.msra.mxu0 0
  %1136 = vmatprep.subr.bf16.mxu0 0
  %1137 = vmatpush1.bf16.msra.mxu0 0
  %1138 = vmatprep.subr.bf16.mxu0 0
  %1139 = vmatpush1.bf16.msra.mxu0 0
  %1140 = vmatprep.subr.bf16.mxu0 0
  %1141 = vmatpush1.bf16.msra.mxu0 0
  %1142 = vmatprep.subr.bf16.mxu0 0
  %1143 = vmatpush1.bf16.msra.mxu0 0
  %1144 = vmatprep.subr.bf16.mxu0 0
  %1145 = vmatpush1.bf16.msra.mxu0 %v196
  %1146 = vmatprep.subr.bf16.mxu0 0
  %1147 = vmatpush1.bf16.msra.mxu0 %v195
  %1148 = vmatprep.subr.bf16.mxu0 0
  %1149 = vmatpush2.bf16.msra.mxu0 0
  %1150 = vmatprep.subr.bf16.mxu0 0
  %1151 = vmatpush2.bf16.msra.mxu0 0
  %1152 = vmatprep.subr.bf16.mxu0 0
  %1153 = vmatpush2.bf16.msra.mxu0 0
  %1154 = vmatprep.subr.bf16.mxu0 0
  %1155 = vmatpush2.bf16.msra.mxu0 0
  %1156 = vmatprep.subr.bf16.mxu0 0
  %1157 = vmatpush2.bf16.msra.mxu0 0
  %1158 = vmatprep.subr.bf16.mxu0 0
  %1159 = vmatpush2.bf16.msra.mxu0 0
  %1160 = vmatprep.subr.bf16.mxu0 0
  %1161 = vmatpush2.bf16.msra.mxu0 0
  %1162 = vmatprep.subr.bf16.mxu0 0
  %1163 = vmatpush2.bf16.msra.mxu0 0
  %1164 = vmatprep.mubr.bf16.mxu0 0
  %1165 = vmatmul.mubr.bf16.gmra.mxu0 %v1130
  %v1166 = vpop.f32.mrf.mxu0
  %v1167 = vadd.f32 0.0, %v1166
  %v1168 = vpop.f32.mrf.mxu0
  %v1169 = vpop.f32.mrf.mxu0
  %v1170 = vpop.f32.mrf.mxu0
  %1171 = vdwg.mxu0
  %v1172 = vadd.f32 %v1126, %v1167
  %v1173 = vmul.f32 %v1172, 0.5
  %v1174 = vtanh.pop %v1173
  %v1175 = vmul.f32 %v1174, 0.5
  %v1176 = vadd.f32 %v1175, 0.5
  %v1177 = vtanh.pop %v1172
  %v1178 = vld [vmem:[#allocation5] sm:$0xff]
  %1180 = vrot.lane.b32.xlu0 %v1178, 32
  %v1181 = vpop.permute.xlu0 %1180
  %v1183 = vmul.f32 %v1176, %v1181
  %1185 = vrot.lane.b32.xlu0 %v1177, 64
  %v1186 = vpop.permute.xlu0 %1185
  %v1188 = vmul.f32 %v1176, %v1186
  %1190 = vrot.lane.b32.xlu0 %v1188, 32
  %v1191 = vpop.permute.xlu0 %1190
  %v1193 = vadd.f32 %v1183, %v1191
  %v1194 = vtanh.pop %v1193
  %1196 = vrot.lane.b32.xlu0 %v1194, 64
  %v1197 = vpop.permute.xlu0 %1196
  %v1199 = vmul.f32 %v1176, %v1197
  %1201 = vrot.lane.b32.xlu0 %v1193, 96
  %v1202 = vpop.permute.xlu0 %1201
  %1204 = vst.msk [vmem:[#allocation5] sm:$0xff] %vm92, %v1202
  %1206 = vrot.lane.b32.xlu0 %v1199, 32
  %v1207 = vpop.permute.xlu0 %1206
  %1209 = vst.msk [vmem:[#allocation4] sm:$0xff] %vm92, %v1207
  %v1210 = vpack.c.bf16 %v1199, %v1199
  %v1212 = vunpack.c.l.b16 %v1210
  %v1213 = vpack.c.b16 %v1212, %v1212
  %1214 = vrot.lane.b32.xlu0 %v1213, 32
  %v1215 = vpop.permute.xlu0 %1214
  %1217 = vst.msk [vmem:[%s55 + $0x8] sm:$0xf] %vm181, %v1215
  %v1218 = vld [vmem:[%s0 + $0x18] sm:$0xf]
  %v1219 = vunpack.c.l.bf16 %v1218
  %v1220 = vld [vmem:[#allocation2] sm:$0xff]
  %v1221 = vpack.c.bf16 %v1220, %v1220
  %v1223 = vsel %vm92, %v1221, 0
  %1225 = vmatprep.subr.bf16.mxu0 0
  %1226 = vmatpush1.bf16.msra.mxu0 0
  %1227 = vmatprep.subr.bf16.mxu0 0
  %1228 = vmatpush1.bf16.msra.mxu0 0
  %1229 = vmatprep.subr.bf16.mxu0 0
  %1230 = vmatpush1.bf16.msra.mxu0 0
  %1231 = vmatprep.subr.bf16.mxu0 0
  %1232 = vmatpush1.bf16.msra.mxu0 0
  %1233 = vmatprep.subr.bf16.mxu0 0
  %1234 = vmatpush1.bf16.msra.mxu0 0
  %1235 = vmatprep.subr.bf16.mxu0 0
  %1236 = vmatpush1.bf16.msra.mxu0 0
  %1237 = vmatprep.subr.bf16.mxu0 0
  %1238 = vmatpush1.bf16.msra.mxu0 %v89
  %1239 = vmatprep.subr.bf16.mxu0 0
  %1240 = vmatpush1.bf16.msra.mxu0 %v88
  %1241 = vmatprep.subr.bf16.mxu0 0
  %1242 = vmatpush2.bf16.msra.mxu0 0
  %1243 = vmatprep.subr.bf16.mxu0 0
  %1244 = vmatpush2.bf16.msra.mxu0 0
  %1245 = vmatprep.subr.bf16.mxu0 0
  %1246 = vmatpush2.bf16.msra.mxu0 0
  %1247 = vmatprep.subr.bf16.mxu0 0
  %1248 = vmatpush2.bf16.msra.mxu0 0
  %1249 = vmatprep.subr.bf16.mxu0 0
  %1250 = vmatpush2.bf16.msra.mxu0 0
  %1251 = vmatprep.subr.bf16.mxu0 0
  %1252 = vmatpush2.bf16.msra.mxu0 0
  %1253 = vmatprep.subr.bf16.mxu0 0
  %1254 = vmatpush2.bf16.msra.mxu0 0
  %1255 = vmatprep.subr.bf16.mxu0 0
  %1256 = vmatpush2.bf16.msra.mxu0 0
  %1257 = vmatprep.mubr.bf16.mxu0 0
  %1258 = vmatmul.mubr.bf16.gmra.mxu0 %v1223
  %v1259 = vpop.f32.mrf.mxu0
  %v1260 = vadd.f32 0.0, %v1259
  %v1261 = vpop.f32.mrf.mxu0
  %v1262 = vpop.f32.mrf.mxu0
  %v1263 = vpop.f32.mrf.mxu0
  %1264 = vdwg.mxu0
  %v1265 = vadd.f32 %v1219, %v1260
  %v1266 = vmul.f32 %v1265, 0.5
  %v1267 = vtanh.pop %v1266
  %v1268 = vmul.f32 %v1267, 0.5
  %v1269 = vadd.f32 %v1268, 0.5
  %v1270 = vtanh.pop %v1265
  %v1271 = vld [vmem:[#allocation3] sm:$0xff]
  %1273 = vrot.lane.b32.xlu0 %v1271, 32
  %v1274 = vpop.permute.xlu0 %1273
  %v1276 = vmul.f32 %v1269, %v1274
  %1278 = vrot.lane.b32.xlu0 %v1270, 64
  %v1279 = vpop.permute.xlu0 %1278
  %v1281 = vmul.f32 %v1269, %v1279
  %1283 = vrot.lane.b32.xlu0 %v1281, 32
  %v1284 = vpop.permute.xlu0 %1283
  %v1286 = vadd.f32 %v1276, %v1284
  %v1287 = vtanh.pop %v1286
  %1289 = vrot.lane.b32.xlu0 %v1287, 64
  %v1290 = vpop.permute.xlu0 %1289
  %v1292 = vmul.f32 %v1269, %v1290
  %1294 = vrot.lane.b32.xlu0 %v1286, 96
  %v1295 = vpop.permute.xlu0 %1294
  %1297 = vst.msk [vmem:[#allocation3] sm:$0xff] %vm92, %v1295
  %1299 = vrot.lane.b32.xlu0 %v1292, 32
  %v1300 = vpop.permute.xlu0 %1299
  %1302 = vst.msk [vmem:[#allocation2] sm:$0xff] %vm92, %v1300
  %v1303 = vpack.c.bf16 %v1292, %v1292
  %v1305 = vunpack.c.l.b16 %v1303
  %v1306 = vpack.c.b16 %v1305, %v1305
  %1307 = vrot.lane.b32.xlu0 %v1306, 32
  %v1308 = vpop.permute.xlu0 %1307
  %1310 = vst.msk [vmem:[%s4 + $0x18] sm:$0xf] %vm181, %v1308
  %v1311 = vld [vmem:[%s47 + $0x4] sm:$0xf]
  %v1312 = vunpack.c.l.bf16 %v1311
  %v1313 = vld [vmem:[#allocation4] sm:$0xff]
  %v1314 = vpack.c.bf16 %v1313, %v1313
  %v1316 = vsel %vm92, %v1314, 0
  %1318 = vmatprep.subr.bf16.mxu0 0
  %1319 = vmatpush1.bf16.msra.mxu0 0
  %1320 = vmatprep.subr.bf16.mxu0 0
  %1321 = vmatpush1.bf16.msra.mxu0 0
  %1322 = vmatprep.subr.bf16.mxu0 0
  %1323 = vmatpush1.bf16.msra.mxu0 0
  %1324 = vmatprep.subr.bf16.mxu0 0
  %1325 = vmatpush1.bf16.msra.mxu0 0
  %1326 = vmatprep.subr.bf16.mxu0 0
  %1327 = vmatpush1.bf16.msra.mxu0 0
  %1328 = vmatprep.subr.bf16.mxu0 0
  %1329 = vmatpush1.bf16.msra.mxu0 0
  %1330 = vmatprep.subr.bf16.mxu0 0
  %1331 = vmatpush1.bf16.msra.mxu0 %v196
  %1332 = vmatprep.subr.bf16.mxu0 0
  %1333 = vmatpush1.bf16.msra.mxu0 %v195
  %1334 = vmatprep.subr.bf16.mxu0 0
  %1335 = vmatpush2.bf16.msra.mxu0 0
  %1336 = vmatprep.subr.bf16.mxu0 0
  %1337 = vmatpush2.bf16.msra.mxu0 0
  %1338 = vmatprep.subr.bf16.mxu0 0
  %1339 = vmatpush2.bf16.msra.mxu0 0
  %1340 = vmatprep.subr.bf16.mxu0 0
  %1341 = vmatpush2.bf16.msra.mxu0 0
  %1342 = vmatprep.subr.bf16.mxu0 0
  %1343 = vmatpush2.bf16.msra.mxu0 0
  %1344 = vmatprep.subr.bf16.mxu0 0
  %1345 = vmatpush2.bf16.msra.mxu0 0
  %1346 = vmatprep.subr.bf16.mxu0 0
  %1347 = vmatpush2.bf16.msra.mxu0 0
  %1348 = vmatprep.subr.bf16.mxu0 0
  %1349 = vmatpush2.bf16.msra.mxu0 0
  %1350 = vmatprep.mubr.bf16.mxu0 0
  %1351 = vmatmul.mubr.bf16.gmra.mxu0 %v1316
  %v1352 = vpop.f32.mrf.mxu0
  %v1353 = vadd.f32 0.0, %v1352
  %v1354 = vpop.f32.mrf.mxu0
  %v1355 = vpop.f32.mrf.mxu0
  %v1356 = vpop.f32.mrf.mxu0
  %1357 = vdwg.mxu0
  %v1358 = vadd.f32 %v1312, %v1353
  %v1359 = vmul.f32 %v1358, 0.5
  %v1360 = vtanh.pop %v1359
  %v1361 = vmul.f32 %v1360, 0.5
  %v1362 = vadd.f32 %v1361, 0.5
  %v1363 = vtanh.pop %v1358
  %v1364 = vld [vmem:[#allocation5] sm:$0xff]
  %1366 = vrot.lane.b32.xlu0 %v1364, 32
  %v1367 = vpop.permute.xlu0 %1366
  %v1369 = vmul.f32 %v1362, %v1367
  %1371 = vrot.lane.b32.xlu0 %v1363, 64
  %v1372 = vpop.permute.xlu0 %1371
  %v1374 = vmul.f32 %v1362, %v1372
  %1376 = vrot.lane.b32.xlu0 %v1374, 32
  %v1377 = vpop.permute.xlu0 %1376
  %v1379 = vadd.f32 %v1369, %v1377
  %v1380 = vtanh.pop %v1379
  %1382 = vrot.lane.b32.xlu0 %v1380, 64
  %v1383 = vpop.permute.xlu0 %1382
  %v1385 = vmul.f32 %v1362, %v1383
  %1387 = vrot.lane.b32.xlu0 %v1379, 96
  %v1388 = vpop.permute.xlu0 %1387
  %1390 = vst.msk [vmem:[#allocation5] sm:$0xff] %vm92, %v1388
  %1392 = vrot.lane.b32.xlu0 %v1385, 32
  %v1393 = vpop.permute.xlu0 %1392
  %1395 = vst.msk [vmem:[#allocation4] sm:$0xff] %vm92, %v1393
  %v1396 = vpack.c.bf16 %v1385, %v1385
  %v1398 = vunpack.c.l.b16 %v1396
  %v1399 = vpack.c.b16 %v1398, %v1398
  %1400 = vrot.lane.b32.xlu0 %v1399, 32
  %v1401 = vpop.permute.xlu0 %1400
  %1403 = vst.msk [vmem:[%s55 + $0x4] sm:$0xf] %vm181, %v1401
  %v1404 = vld [vmem:[%s0 + $0x1c] sm:$0xf]
  %v1405 = vunpack.c.l.bf16 %v1404
  %v1406 = vld [vmem:[#allocation2] sm:$0xff]
  %v1407 = vpack.c.bf16 %v1406, %v1406
  %v1409 = vsel %vm92, %v1407, 0
  %1411 = vmatprep.subr.bf16.mxu0 0
  %1412 = vmatpush1.bf16.msra.mxu0 0
  %1413 = vmatprep.subr.bf16.mxu0 0
  %1414 = vmatpush1.bf16.msra.mxu0 0
  %1415 = vmatprep.subr.bf16.mxu0 0
  %1416 = vmatpush1.bf16.msra.mxu0 0
  %1417 = vmatprep.subr.bf16.mxu0 0
  %1418 = vmatpush1.bf16.msra.mxu0 0
  %1419 = vmatprep.subr.bf16.mxu0 0
  %1420 = vmatpush1.bf16.msra.mxu0 0
  %1421 = vmatprep.subr.bf16.mxu0 0
  %1422 = vmatpush1.bf16.msra.mxu0 0
  %1423 = vmatprep.subr.bf16.mxu0 0
  %1424 = vmatpush1.bf16.msra.mxu0 %v89
  %1425 = vmatprep.subr.bf16.mxu0 0
  %1426 = vmatpush1.bf16.msra.mxu0 %v88
  %1427 = vmatprep.subr.bf16.mxu0 0
  %1428 = vmatpush2.bf16.msra.mxu0 0
  %1429 = vmatprep.subr.bf16.mxu0 0
  %1430 = vmatpush2.bf16.msra.mxu0 0
  %1431 = vmatprep.subr.bf16.mxu0 0
  %1432 = vmatpush2.bf16.msra.mxu0 0
  %1433 = vmatprep.subr.bf16.mxu0 0
  %1434 = vmatpush2.bf16.msra.mxu0 0
  %1435 = vmatprep.subr.bf16.mxu0 0
  %1436 = vmatpush2.bf16.msra.mxu0 0
  %1437 = vmatprep.subr.bf16.mxu0 0
  %1438 = vmatpush2.bf16.msra.mxu0 0
  %1439 = vmatprep.subr.bf16.mxu0 0
  %1440 = vmatpush2.bf16.msra.mxu0 0
  %1441 = vmatprep.subr.bf16.mxu0 0
  %1442 = vmatpush2.bf16.msra.mxu0 0
  %1443 = vmatprep.mubr.bf16.mxu0 0
  %1444 = vmatmul.mubr.bf16.gmra.mxu0 %v1409
  %v1445 = vpop.f32.mrf.mxu0
  %v1446 = vadd.f32 0.0, %v1445
  %v1447 = vpop.f32.mrf.mxu0
  %v1448 = vpop.f32.mrf.mxu0
  %v1449 = vpop.f32.mrf.mxu0
  %1450 = vdwg.mxu0
  %v1451 = vadd.f32 %v1405, %v1446
  %v1452 = vmul.f32 %v1451, 0.5
  %v1453 = vtanh.pop %v1452
  %v1454 = vmul.f32 %v1453, 0.5
  %v1455 = vadd.f32 %v1454, 0.5
  %v1456 = vtanh.pop %v1451
  %v1457 = vld [vmem:[#allocation3] sm:$0xff]
  %1459 = vrot.lane.b32.xlu0 %v1457, 32
  %v1460 = vpop.permute.xlu0 %1459
  %v1462 = vmul.f32 %v1455, %v1460
  %1464 = vrot.lane.b32.xlu0 %v1456, 64
  %v1465 = vpop.permute.xlu0 %1464
  %v1467 = vmul.f32 %v1455, %v1465
  %1469 = vrot.lane.b32.xlu0 %v1467, 32
  %v1470 = vpop.permute.xlu0 %1469
  %v1472 = vadd.f32 %v1462, %v1470
  %v1473 = vtanh.pop %v1472
  %1475 = vrot.lane.b32.xlu0 %v1473, 64
  %v1476 = vpop.permute.xlu0 %1475
  %v1478 = vmul.f32 %v1455, %v1476
  %1480 = vrot.lane.b32.xlu0 %v1472, 96
  %v1481 = vpop.permute.xlu0 %1480
  %1483 = vst.msk [vmem:[#allocation3] sm:$0xff] %vm92, %v1481
  %1485 = vrot.lane.b32.xlu0 %v1478, 32
  %v1486 = vpop.permute.xlu0 %1485
  %1488 = vst.msk [vmem:[#allocation2] sm:$0xff] %vm92, %v1486
  %v1489 = vpack.c.bf16 %v1478, %v1478
  %v1491 = vunpack.c.l.b16 %v1489
  %v1492 = vpack.c.b16 %v1491, %v1491
  %1493 = vrot.lane.b32.xlu0 %v1492, 32
  %v1494 = vpop.permute.xlu0 %1493
  %1496 = vst.msk [vmem:[%s4 + $0x1c] sm:$0xf] %vm181, %v1494
  %v1497 = vld [vmem:[%s47] sm:$0xf]
  %v1498 = vunpack.c.l.bf16 %v1497
  %v1499 = vld [vmem:[#allocation4] sm:$0xff]
  %v1500 = vpack.c.bf16 %v1499, %v1499
  %v1502 = vsel %vm92, %v1500, 0
  %1504 = vmatprep.subr.bf16.mxu0 0
  %1505 = vmatpush1.bf16.msra.mxu0 0
  %1506 = vmatprep.subr.bf16.mxu0 0
  %1507 = vmatpush1.bf16.msra.mxu0 0
  %1508 = vmatprep.subr.bf16.mxu0 0
  %1509 = vmatpush1.bf16.msra.mxu0 0
  %1510 = vmatprep.subr.bf16.mxu0 0
  %1511 = vmatpush1.bf16.msra.mxu0 0
  %1512 = vmatprep.subr.bf16.mxu0 0
  %1513 = vmatpush1.bf16.msra.mxu0 0
  %1514 = vmatprep.subr.bf16.mxu0 0
  %1515 = vmatpush1.bf16.msra.mxu0 0
  %1516 = vmatprep.subr.bf16.mxu0 0
  %1517 = vmatpush1.bf16.msra.mxu0 %v196
  %1518 = vmatprep.subr.bf16.mxu0 0
  %1519 = vmatpush1.bf16.msra.mxu0 %v195
  %1520 = vmatprep.subr.bf16.mxu0 0
  %1521 = vmatpush2.bf16.msra.mxu0 0
  %1522 = vmatprep.subr.bf16.mxu0 0
  %1523 = vmatpush2.bf16.msra.mxu0 0
  %1524 = vmatprep.subr.bf16.mxu0 0
  %1525 = vmatpush2.bf16.msra.mxu0 0
  %1526 = vmatprep.subr.bf16.mxu0 0
  %1527 = vmatpush2.bf16.msra.mxu0 0
  %1528 = vmatprep.subr.bf16.mxu0 0
  %1529 = vmatpush2.bf16.msra.mxu0 0
  %1530 = vmatprep.subr.bf16.mxu0 0
  %1531 = vmatpush2.bf16.msra.mxu0 0
  %1532 = vmatprep.subr.bf16.mxu0 0
  %1533 = vmatpush2.bf16.msra.mxu0 0
  %1534 = vmatprep.subr.bf16.mxu0 0
  %1535 = vmatpush2.bf16.msra.mxu0 0
  %1536 = vmatprep.mubr.bf16.mxu0 0
  %1537 = vmatmul.mubr.bf16.gmra.mxu0 %v1502
  %v1538 = vpop.f32.mrf.mxu0
  %v1539 = vadd.f32 0.0, %v1538
  %v1540 = vpop.f32.mrf.mxu0
  %v1541 = vpop.f32.mrf.mxu0
  %v1542 = vpop.f32.mrf.mxu0
  %1543 = vdwg.mxu0
  %v1544 = vadd.f32 %v1498, %v1539
  %v1545 = vmul.f32 %v1544, 0.5
  %v1546 = vtanh.pop %v1545
  %v1547 = vmul.f32 %v1546, 0.5
  %v1548 = vadd.f32 %v1547, 0.5
  %v1549 = vtanh.pop %v1544
  %v1550 = vld [vmem:[#allocation5] sm:$0xff]
  %1552 = vrot.lane.b32.xlu0 %v1550, 32
  %v1553 = vpop.permute.xlu0 %1552
  %v1555 = vmul.f32 %v1548, %v1553
  %1557 = vrot.lane.b32.xlu0 %v1549, 64
  %v1558 = vpop.permute.xlu0 %1557
  %v1560 = vmul.f32 %v1548, %v1558
  %1562 = vrot.lane.b32.xlu0 %v1560, 32
  %v1563 = vpop.permute.xlu0 %1562
  %v1565 = vadd.f32 %v1555, %v1563
  %v1566 = vtanh.pop %v1565
  %1568 = vrot.lane.b32.xlu0 %v1566, 64
  %v1569 = vpop.permute.xlu0 %1568
  %v1571 = vmul.f32 %v1548, %v1569
  %1573 = vrot.lane.b32.xlu0 %v1565, 96
  %v1574 = vpop.permute.xlu0 %1573
  %1576 = vst.msk [vmem:[#allocation5] sm:$0xff] %vm92, %v1574
  %1578 = vrot.lane.b32.xlu0 %v1571, 32
  %v1579 = vpop.permute.xlu0 %1578
  %1581 = vst.msk [vmem:[#allocation4] sm:$0xff] %vm92, %v1579
  %v1582 = vpack.c.bf16 %v1571, %v1571
  %v1584 = vunpack.c.l.b16 %v1582
  %v1585 = vpack.c.b16 %v1584, %v1584
  %1586 = vrot.lane.b32.xlu0 %v1585, 32
  %v1587 = vpop.permute.xlu0 %1586
  %1589 = vst.msk [vmem:[%s55] sm:$0xf] %vm181, %v1587
  %s1590 = ssub.s32 0, 0
  %s1591 = smul.u32 8, %s1590
  %p1592 = scmp.lt.s32.totalorder %s1591, 7
  %s1593 = scalar_select %p1592, %s1591, 7
  %s1594 = smul.addr %s1593, 4
  %s1595 = scalar_lea.vmem %s5, %s1594
  // Predicated region
  $region22: #{decoder_forward.7} parent=0 // pred_check
    _
  $region23: #{decoder_forward.7} parent=0 // pred_check_branch
    %1597 = sbr.rel (0) target = $region25
  $region24: #{decoder_forward.7} parent=0 // pred_region
    _
  $region25: #{decoder_forward.7} parent=0 // pred_fallthru
    _
  // Predicated region
  $region26: #{decoder_forward.7} parent=0 // pred_check
    _
  $region27: #{decoder_forward.7} parent=0 // pred_check_branch
    %1599 = sbr.rel (0) target = $region29
  $region28: #{decoder_forward.7} parent=0 // pred_region
    %s1600 = ssub.s32 0, 0
    %s1601 = smul.u32 8, %s1600
  $region29: #{decoder_forward.7} parent=0 // pred_fallthru
    _
  // Predicated region
  $region30: #{decoder_forward.7} parent=0 // pred_check
    _
  $region31: #{decoder_forward.7} parent=0 // pred_check_branch
    %1603 = sbr.rel (0) target = $region33
  $region32: #{decoder_forward.7} parent=0 // pred_region
    _
  $region33: #{decoder_forward.7} parent=0 // pred_fallthru
    _
  // Predicated region
  $region34: #{decoder_forward.7} parent=0 // pred_check
    _
  $region35: #{decoder_forward.7} parent=0 // pred_check_branch
    %1605 = sbr.rel (0) target = $region37
  $region36: #{decoder_forward.7} parent=0 // pred_region
    %s1606 = ssub.s32 0, 0
    %s1607 = smul.u32 8, %s1606
    %p1608 = scmp.lt.s32.totalorder %s1607, 7
    %s1609 = scalar_select %p1608, %s1607, 7
    %s1610 = smul.addr %s1609, 4
    %s1611 = scalar_lea.vmem %s5, %s1610
  $region37: #{decoder_forward.7} parent=0 // pred_fallthru
    _

</llo_original>
